<compile_context>
chip_gen: v7x
topology: tpu7x:2x2x1
jax: 0.10.0
libtpu: 0.0.40
codegen_flags: <defaults>
</compile_context>

<pallas_src>
import jax
import jax.numpy as jnp
from jax import lax
from jax.experimental import pallas as pl
from jax.experimental.pallas import tpu as pltpu

NEG_SLOPE = 0.2
EPS = 1e-5


# ------------------------------ Pallas kernels ------------------------------ #

def _make_conv_kernel(H, W, nchw_in):
    """reflect-pad 3x3 conv + bias + LeakyReLU + per-batch (sum, sumsq) stats.

    Any BatchNorm affine from the previous stage has already been folded into
    the weights / bias on the host side, so the body is:
      load (+ optional NCHW->NHWC transpose) -> bf16 -> pad -> 3 matmuls with
      K = 3*Cin (dx concatenated along lanes) -> +bias -> LeakyReLU -> y, stats.
    """

    def kernel(a_ref, w_ref, b_ref, y_ref, st_ref):
        cin = w_ref.shape[1] // 3

        if nchw_in:
            # a_ref: (Cin, H*W) f32 — fuse the NCHW->NHWC transpose in-kernel
            # (XLU) so the wrapper never pays an XLA transpose HBM round trip.
            a = jnp.transpose(a_ref[...], (1, 0)).astype(jnp.bfloat16)
        else:
            a = a_ref[...].astype(jnp.bfloat16)               # (H*W, Cin)
        a = a.reshape(H, W, cin)

        # Reflect pad the rows (outer, untiled dim): (H+2, W, Cin) bf16.
        ah = jnp.concatenate([a[1:2], a, a[H - 2:H - 1]], axis=0)
        # dx-shifted views with reflect at the W borders, stacked along the
        # LANE axis -> ONE K-concat slab ((H+2)*W, 3*Cin) bf16.
        left = jnp.concatenate([ah[:, 1:2, :], ah[:, :W - 1, :]], axis=1)    # dx=0
        right = jnp.concatenate([ah[:, 1:, :], ah[:, W - 2:W - 1, :]], axis=1)  # dx=2
        cols = jnp.concatenate([left, ah, right], axis=-1)
        cols = cols.reshape((H + 2) * W, 3 * cin)

        # 3 matmuls with K = 3*Cin (MXU accumulates over K internally).  The dy
        # row windows start at multiples of W, sublane-aligned when W % 8 == 0.
        acc = jnp.dot(cols[0 * W:(0 + H) * W, :], w_ref[0],
                      preferred_element_type=jnp.float32)
        acc = acc + jnp.dot(cols[1 * W:(1 + H) * W, :], w_ref[1],
                            preferred_element_type=jnp.float32)
        acc = acc + jnp.dot(cols[2 * W:(2 + H) * W, :], w_ref[2],
                            preferred_element_type=jnp.float32)

        y = acc + b_ref[...]                                  # (H*W, Cout) f32
        y = jnp.maximum(y, NEG_SLOPE * y)                     # LeakyReLU(0.2)

        y_ref[...] = y
        st_ref[0:1, :] = jnp.sum(y, axis=0, keepdims=True)    # per-batch sum
        st_ref[1:2, :] = jnp.sum(y * y, axis=0, keepdims=True)  # per-batch sumsq

    return kernel


def _bn_residual_kernel(z_ref, x_ref, scale_ref, shift_ref, o_ref):
    """Final BN affine (precomputed scale/shift) + residual add.  Writes the
    result directly in NCHW (C, H*W) layout, fusing the output transpose."""
    z = z_ref[...] * scale_ref[...] + shift_ref[...]          # (H*W, C) f32
    o_ref[...] = jnp.transpose(z, (1, 0)) + x_ref[...]        # (C, H*W) f32


# -------------------------------- JAX glue --------------------------------- #

def _vmem_limit(need_bytes):
    """Scoped-VMEM limit from block sizes; generation-aware cap (64 MiB v7x)."""
    try:
        info = pltpu.get_tpu_info()
        cap = int(getattr(info, "vmem_capacity_bytes", 64 << 20))
    except Exception:
        cap = 64 << 20
    ceiling = (cap * 3) // 4
    need = int(need_bytes * 1.5) + (4 << 20)                  # relayout headroom
    return int(max(min(need, ceiling), min(16 << 20, ceiling)))


def _conv_pass(a, w3, b_row, *, H, W, nchw_in):
    """a: (N, Cin, H*W) f32 if nchw_in else (N, H*W, Cin) f32.
       w3: (3, 3*Cin, Cout) bf16; b_row: (1, Cout) f32.
       Returns y: (N, H*W, Cout) f32 and per-batch stats (N, 2, Cout) f32."""
    n = a.shape[0]
    cin = a.shape[1] if nchw_in else a.shape[2]
    cout = w3.shape[-1]
    hw = H * W

    if nchw_in:
        a_spec = pl.BlockSpec((None, cin, hw), lambda i: (i, 0, 0))
    else:
        a_spec = pl.BlockSpec((None, hw, cin), lambda i: (i, 0, 0))

    io_bytes = hw * cin * 4 + hw * cout * 4 + 2 * cout * 4 + w3.size * 2 + cout * 4
    temp_bytes = ((H + 2) * W * cin * 2 * 3       # ah / left / right (bf16)
                  + (H + 2) * W * 3 * cin * 2     # K-concat slab (bf16)
                  + hw * cin * (4 + 2)            # transpose / cast temps
                  + hw * cout * 4 * 2)            # acc + y (f32)

    return pl.pallas_call(
        _make_conv_kernel(H, W, nchw_in),
        out_shape=(jax.ShapeDtypeStruct((n, hw, cout), jnp.float32),
                   jax.ShapeDtypeStruct((n, 2, cout), jnp.float32)),
        grid=(n,),
        in_specs=[
            a_spec,
            pl.BlockSpec((3, 3 * cin, cout), lambda i: (0, 0, 0)),
            pl.BlockSpec((1, cout), lambda i: (0, 0)),
        ],
        out_specs=(
            pl.BlockSpec((None, hw, cout), lambda i: (i, 0, 0)),
            pl.BlockSpec((None, 2, cout), lambda i: (i, 0, 0)),
        ),
        compiler_params=pltpu.CompilerParams(
            dimension_semantics=("parallel",),
            vmem_limit_bytes=_vmem_limit(2 * io_bytes + temp_bytes)),
    )(a, w3, b_row)


def _bn_residual(z, x_flat, scale, shift):
    """z: (N, H*W, C) f32; x_flat: (N, C, H*W) f32 (NCHW flattened).
       Returns (N, C, H*W) f32 — NCHW with spatial dims flattened (lane-dense)."""
    n, hw, c = z.shape
    io_bytes = 3 * hw * c * 4 + 2 * c * 4
    temp_bytes = 2 * hw * c * 4
    return pl.pallas_call(
        _bn_residual_kernel,
        out_shape=jax.ShapeDtypeStruct((n, c, hw), jnp.float32),
        grid=(n,),
        in_specs=[
            pl.BlockSpec((None, hw, c), lambda i: (i, 0, 0)),
            pl.BlockSpec((None, c, hw), lambda i: (i, 0, 0)),
            pl.BlockSpec((1, c), lambda i: (0, 0)),
            pl.BlockSpec((1, c), lambda i: (0, 0)),
        ],
        out_specs=pl.BlockSpec((None, c, hw), lambda i: (i, 0, 0)),
        compiler_params=pltpu.CompilerParams(
            dimension_semantics=("parallel",),
            vmem_limit_bytes=_vmem_limit(2 * io_bytes + temp_bytes)),
    )(z, x_flat, scale, shift)


def _bn_affine(partial_stats, n_elems, gamma, beta):
    """Reduce per-batch (sum, sumsq) -> training-mode BN scale / shift.
    # TODO(synk): E[y^2]-E[y]^2 in fp32 can cancel for very large N*H*W; a
    # mean-shifted two-pass would be safer at production sizes.
    """
    tot = partial_stats.sum(axis=0)                           # (2, C)
    mean = tot[0] / n_elems
    var = jnp.maximum(tot[1] / n_elems - mean * mean, 0.0)
    scale = gamma * lax.rsqrt(var + EPS)
    shift = beta - mean * scale
    return scale, shift


def residual_forward(x, weight, bias, gamma, beta):
    """x: (N, C, H, W) f32; weight: (C, C, 3, 3) OIHW; bias/gamma/beta: (C,)."""
    n, c, h, w = x.shape
    hw = h * w
    x_flat = x.reshape(n, c, hw)                              # free (metadata only)

    # OIHW -> (kh, kw, Cin, Cout); flatten (kw, Cin) so each dy slice is the
    # (3*Cin, Cout) operand matching the in-kernel K-concat slab lane order.
    w_t = jnp.transpose(weight, (2, 3, 1, 0)).astype(jnp.float32)   # (3,3,Ci,Co)
    w3_1 = w_t.reshape(3, 3 * c, c).astype(jnp.bfloat16)
    b_1 = bias.reshape(1, c).astype(jnp.float32)
    n_elems = n * hw

    # pass 1: conv + bias + LeakyReLU (+ per-batch stats for BN1)
    z1, st1 = _conv_pass(x_flat, w3_1, b_1, H=h, W=w, nchw_in=True)
    s1, t1 = _bn_affine(st1, n_elems, gamma, beta)

    # Fold BN1's per-channel affine into the pass-2 conv weights / bias:
    #   conv(z*s1 + t1) = conv_{w*s1}(z) + conv_w(t1)
    # (t1 is constant per channel and reflect padding keeps a constant field
    #  constant, so conv_w(t1) is a pure per-Cout bias term).
    w3_2 = (w_t * s1[None, None, :, None]).reshape(3, 3 * c, c).astype(jnp.bfloat16)
    b_2 = (bias + jnp.einsum('hwic,i->c', w_t, t1)).reshape(1, c).astype(jnp.float32)

    # pass 2: (folded BN1) conv + bias + LeakyReLU (+ stats for BN2)
    z2, st2 = _conv_pass(z1, w3_2, b_2, H=h, W=w, nchw_in=False)
    s2, t2 = _bn_affine(st2, n_elems, gamma, beta)

    # pass 3: BN2 affine + residual add, written directly in NCHW layout.
    out_flat = _bn_residual(z2, x_flat, s2.reshape(1, c), t2.reshape(1, c))
    return out_flat.reshape(n, c, h, w)                       # free (metadata only)


# ------------------------- pure-JAX reference -------------------------------- #
# Reference matches the PyTorch module's training-mode forward with bf16 MXU
# conv operands (standard TPU precision); all bias/activation/norm math fp32.

def _ref_forward(x, weight, bias, gamma, beta):
    wb = weight.astype(jnp.bfloat16)

    def conv(a):
        ap = jnp.pad(a, ((0, 0), (0, 0), (1, 1), (1, 1)), mode="reflect")
        y = lax.conv_general_dilated(
            ap.astype(jnp.bfloat16), wb, (1, 1), "VALID",
            dimension_numbers=("NCHW", "OIHW", "NCHW"),
            preferred_element_type=jnp.float32)
        return y + bias[None, :, None, None]

    def lrelu(v):
        return jnp.where(v >= 0, v, NEG_SLOPE * v)

    def bn(v):
        m = v.mean(axis=(0, 2, 3), keepdims=True)
        var = ((v - m) ** 2).mean(axis=(0, 2, 3), keepdims=True)
        vhat = (v - m) * lax.rsqrt(var + EPS)
        return vhat * gamma[None, :, None, None] + beta[None, :, None, None]

    y = bn(lrelu(conv(x)))
    y = bn(lrelu(conv(y)))
    return y + x


# ---------------------------------- main ------------------------------------ #

if __name__ == "__main__":
    key = jax.random.PRNGKey(0)
    kx, kw, kb, kg, kbe = jax.random.split(key, 5)

    # Small shapes consistent with Residual(dim, use_bias=True):
    # dim=128 keeps the channel (lane) dim dense; H=W=16 keeps W % 8 == 0.
    N, C, H, W = 2, 128, 16, 16
    use_bias = True

    x = jax.random.normal(kx, (N, C, H, W), jnp.float32)
    weight = jax.random.normal(kw, (C, C, 3, 3), jnp.float32) * 0.05
    bias = (jax.random.normal(kb, (C,), jnp.float32) * 0.05
            if use_bias else jnp.zeros((C,), jnp.float32))
    gamma = 1.0 + 0.1 * jax.random.normal(kg, (C,), jnp.float32)
    beta = 0.1 * jax.random.normal(kbe, (C,), jnp.float32)

    fwd = jax.jit(residual_forward)
    out = jax.block_until_ready(fwd(x, weight, bias, gamma, beta))
    assert out.shape == (N, C, H, W), out.shape

    ref = jax.block_until_ready(_ref_forward(x, weight, bias, gamma, beta))
    max_err = float(jnp.max(jnp.abs(out - ref)))
    # Tolerance: BN1's scale is folded into the bf16 pass-2 conv weights (the
    # reviewed optimization), so bf16 rounding differs slightly from applying
    # the affine on fp32 activations before the cast; the fold is exact in
    # exact arithmetic.
    assert jnp.allclose(out, ref, atol=3e-2, rtol=3e-2), max_err

    print("KERNEL_OK")
</pallas_src>

<mosaic_0001>
module attributes {stable_mosaic.version = 11 : i64} {
  func.func @kernel(%arg0: i32, %arg1: memref<1x128x256xf32, #tpu.memory_space<vmem>>, %arg2: memref<3x384x128xbf16, #tpu.memory_space<vmem>>, %arg3: memref<1x128xf32, #tpu.memory_space<vmem>>, %arg4: memref<1x256x128xf32, #tpu.memory_space<vmem>>, %arg5: memref<1x2x128xf32, #tpu.memory_space<vmem>>) attributes {dimension_semantics = [#tpu.dimension_semantics<parallel>], iteration_bounds = array<i64: 2>, scalar_prefetch = 0 : i64, scratch_operands = 0 : i64, tpu.core_type = #tpu.core_type<tc>, window_params = [{transform_indices = @transform_0, window_bounds = array<i64: 1, 128, 256>}, {pipeline_mode = #tpu.pipeline_mode<synchronous>, transform_indices = @transform_1, window_bounds = array<i64: 3, 384, 128>}, {pipeline_mode = #tpu.pipeline_mode<synchronous>, transform_indices = @transform_2, window_bounds = array<i64: 1, 128>}, {transform_indices = @transform_3, window_bounds = array<i64: 1, 256, 128>}, {transform_indices = @transform_4, window_bounds = array<i64: 1, 2, 128>}]} {
    %c0 = arith.constant 0 : index
    %c0_0 = arith.constant 0 : index
    %c0_1 = arith.constant 0 : index
    %0 = vector.load %arg1[%c0, %c0_0, %c0_1] : memref<1x128x256xf32, #tpu.memory_space<vmem>>, vector<1x128x256xf32>
    %1 = vector.shape_cast %0 : vector<1x128x256xf32> to vector<128x256xf32>
    %2 = tpu.transpose %1, [1, 0] : vector<128x256xf32> -> vector<256x128xf32>
    %3 = arith.truncf %2 : vector<256x128xf32> to vector<256x128xbf16>
    %4 = vector.shape_cast %3 : vector<256x128xbf16> to vector<16x16x128xbf16>
    %5 = vector.extract_strided_slice %4 {offsets = [1, 0, 0], sizes = [1, 16, 128], strides = [1, 1, 1]} : vector<16x16x128xbf16> to vector<1x16x128xbf16>
    %6 = vector.extract_strided_slice %4 {offsets = [14, 0, 0], sizes = [1, 16, 128], strides = [1, 1, 1]} : vector<16x16x128xbf16> to vector<1x16x128xbf16>
    %7 = tpu.concatenate %5, %4, %6 in 0 : vector<1x16x128xbf16>, vector<16x16x128xbf16>, vector<1x16x128xbf16> -> vector<18x16x128xbf16>
    %8 = vector.extract_strided_slice %7 {offsets = [0, 1, 0], sizes = [18, 1, 128], strides = [1, 1, 1]} : vector<18x16x128xbf16> to vector<18x1x128xbf16>
    %9 = vector.extract_strided_slice %7 {offsets = [0, 0, 0], sizes = [18, 15, 128], strides = [1, 1, 1]} : vector<18x16x128xbf16> to vector<18x15x128xbf16>
    %10 = tpu.concatenate %8, %9 in 1 : vector<18x1x128xbf16>, vector<18x15x128xbf16> -> vector<18x16x128xbf16>
    %11 = vector.extract_strided_slice %7 {offsets = [0, 1, 0], sizes = [18, 15, 128], strides = [1, 1, 1]} : vector<18x16x128xbf16> to vector<18x15x128xbf16>
    %12 = vector.extract_strided_slice %7 {offsets = [0, 14, 0], sizes = [18, 1, 128], strides = [1, 1, 1]} : vector<18x16x128xbf16> to vector<18x1x128xbf16>
    %13 = tpu.concatenate %11, %12 in 1 : vector<18x15x128xbf16>, vector<18x1x128xbf16> -> vector<18x16x128xbf16>
    %14 = tpu.concatenate %10, %7, %13 in 2 : vector<18x16x128xbf16>, vector<18x16x128xbf16>, vector<18x16x128xbf16> -> vector<18x16x384xbf16>
    %15 = vector.shape_cast %14 : vector<18x16x384xbf16> to vector<288x384xbf16>
    %16 = vector.extract_strided_slice %15 {offsets = [0, 0], sizes = [256, 384], strides = [1, 1]} : vector<288x384xbf16> to vector<256x384xbf16>
    %c0_2 = arith.constant 0 : index
    %c0_3 = arith.constant 0 : index
    %c0_4 = arith.constant 0 : index
    %17 = vector.load %arg2[%c0_2, %c0_3, %c0_4] : memref<3x384x128xbf16, #tpu.memory_space<vmem>>, vector<1x384x128xbf16>
    %18 = vector.shape_cast %17 : vector<1x384x128xbf16> to vector<384x128xbf16>
    %cst = arith.constant dense<0.000000e+00> : vector<256x128xf32>
    %19 = tpu.matmul %16, %18, %cst {dimension_numbers = #tpu.dot_dimension_numbers<[1], [0], [0], [1], [0, 0, 1, 1], [], []>} : vector<256x384xbf16>, vector<384x128xbf16>, vector<256x128xf32> -> vector<256x128xf32>
    %20 = vector.extract_strided_slice %15 {offsets = [16, 0], sizes = [256, 384], strides = [1, 1]} : vector<288x384xbf16> to vector<256x384xbf16>
    %c1 = arith.constant 1 : index
    %c0_5 = arith.constant 0 : index
    %c0_6 = arith.constant 0 : index
    %21 = vector.load %arg2[%c1, %c0_5, %c0_6] : memref<3x384x128xbf16, #tpu.memory_space<vmem>>, vector<1x384x128xbf16>
    %22 = vector.shape_cast %21 : vector<1x384x128xbf16> to vector<384x128xbf16>
    %cst_7 = arith.constant dense<0.000000e+00> : vector<256x128xf32>
    %23 = tpu.matmul %20, %22, %cst_7 {dimension_numbers = #tpu.dot_dimension_numbers<[1], [0], [0], [1], [0, 0, 1, 1], [], []>} : vector<256x384xbf16>, vector<384x128xbf16>, vector<256x128xf32> -> vector<256x128xf32>
    %24 = arith.addf %19, %23 : vector<256x128xf32>
    %25 = vector.extract_strided_slice %15 {offsets = [32, 0], sizes = [256, 384], strides = [1, 1]} : vector<288x384xbf16> to vector<256x384xbf16>
    %c2 = arith.constant 2 : index
    %c0_8 = arith.constant 0 : index
    %c0_9 = arith.constant 0 : index
    %26 = vector.load %arg2[%c2, %c0_8, %c0_9] : memref<3x384x128xbf16, #tpu.memory_space<vmem>>, vector<1x384x128xbf16>
    %27 = vector.shape_cast %26 : vector<1x384x128xbf16> to vector<384x128xbf16>
    %cst_10 = arith.constant dense<0.000000e+00> : vector<256x128xf32>
    %28 = tpu.matmul %25, %27, %cst_10 {dimension_numbers = #tpu.dot_dimension_numbers<[1], [0], [0], [1], [0, 0, 1, 1], [], []>} : vector<256x384xbf16>, vector<384x128xbf16>, vector<256x128xf32> -> vector<256x128xf32>
    %29 = arith.addf %24, %28 : vector<256x128xf32>
    %c0_11 = arith.constant 0 : index
    %c0_12 = arith.constant 0 : index
    %30 = vector.load %arg3[%c0_11, %c0_12] : memref<1x128xf32, #tpu.memory_space<vmem>>, vector<1x128xf32>
    %31 = vector.broadcast %30 : vector<1x128xf32> to vector<256x128xf32>
    %32 = arith.addf %29, %31 : vector<256x128xf32>
    %cst_13 = arith.constant 2.000000e-01 : f32
    %33 = vector.broadcast %cst_13 : f32 to vector<256x128xf32>
    %34 = arith.mulf %33, %32 : vector<256x128xf32>
    %35 = arith.maximumf %32, %34 : vector<256x128xf32>
    %c0_14 = arith.constant 0 : index
    %c0_15 = arith.constant 0 : index
    %c0_16 = arith.constant 0 : index
    %36 = vector.load %arg4[%c0_14, %c0_15, %c0_16] : memref<1x256x128xf32, #tpu.memory_space<vmem>>, vector<1x256x128xf32>
    %37 = vector.shape_cast %36 : vector<1x256x128xf32> to vector<256x128xf32>
    %38 = vector.shape_cast %35 : vector<256x128xf32> to vector<1x256x128xf32>
    tpu.vector_store %arg4[%c0_14, %c0_15, %c0_16], %38 {strides = array<i32>} : memref<1x256x128xf32, #tpu.memory_space<vmem>>, vector<1x256x128xf32>,
    %cst_17 = arith.constant dense<0.000000e+00> : vector<128xf32>
    %39 = vector.multi_reduction <add>, %35, %cst_17 [0] : vector<256x128xf32> to vector<128xf32>
    %40 = vector.shape_cast %39 : vector<128xf32> to vector<1x128xf32>
    %c0_18 = arith.constant 0 : index
    %c0_19 = arith.constant 0 : index
    %c0_20 = arith.constant 0 : index
    %41 = vector.load %arg5[%c0_18, %c0_19, %c0_20] : memref<1x2x128xf32, #tpu.memory_space<vmem>>, vector<1x1x128xf32>
    %42 = vector.shape_cast %41 : vector<1x1x128xf32> to vector<1x128xf32>
    %43 = vector.shape_cast %40 : vector<1x128xf32> to vector<1x1x128xf32>
    tpu.vector_store %arg5[%c0_18, %c0_19, %c0_20], %43 {strides = array<i32>} : memref<1x2x128xf32, #tpu.memory_space<vmem>>, vector<1x1x128xf32>,
    %44 = arith.mulf %35, %35 : vector<256x128xf32>
    %cst_21 = arith.constant dense<0.000000e+00> : vector<128xf32>
    %45 = vector.multi_reduction <add>, %44, %cst_21 [0] : vector<256x128xf32> to vector<128xf32>
    %46 = vector.shape_cast %45 : vector<128xf32> to vector<1x128xf32>
    %c0_22 = arith.constant 0 : index
    %c1_23 = arith.constant 1 : index
    %c0_24 = arith.constant 0 : index
    %47 = vector.load %arg5[%c0_22, %c1_23, %c0_24] : memref<1x2x128xf32, #tpu.memory_space<vmem>>, vector<1x1x128xf32>
    %48 = vector.shape_cast %47 : vector<1x1x128xf32> to vector<1x128xf32>
    %49 = vector.shape_cast %46 : vector<1x128xf32> to vector<1x1x128xf32>
    tpu.vector_store %arg5[%c0_22, %c1_23, %c0_24], %49 {strides = array<i32>} : memref<1x2x128xf32, #tpu.memory_space<vmem>>, vector<1x1x128xf32>,
    return
  }
  func.func @transform_0(%arg0: i32) -> (i32, i32, i32) {
    %c0_i32 = arith.constant 0 : i32
    %c0_i32_0 = arith.constant 0 : i32
    %c0_i32_1 = arith.constant 0 : i32
    return %arg0, %c0_i32, %c0_i32_0 : i32, i32, i32
  }
  func.func @transform_1(%arg0: i32) -> (i32, i32, i32) {
    %c0_i32 = arith.constant 0 : i32
    %c0_i32_0 = arith.constant 0 : i32
    %c0_i32_1 = arith.constant 0 : i32
    %c0_i32_2 = arith.constant 0 : i32
    return %c0_i32, %c0_i32_0, %c0_i32_1 : i32, i32, i32
  }
  func.func @transform_2(%arg0: i32) -> (i32, i32) {
    %c0_i32 = arith.constant 0 : i32
    %c0_i32_0 = arith.constant 0 : i32
    %c0_i32_1 = arith.constant 0 : i32
    return %c0_i32, %c0_i32_0 : i32, i32
  }
  func.func @transform_3(%arg0: i32) -> (i32, i32, i32) {
    %c0_i32 = arith.constant 0 : i32
    %c0_i32_0 = arith.constant 0 : i32
    %c0_i32_1 = arith.constant 0 : i32
    return %arg0, %c0_i32, %c0_i32_0 : i32, i32, i32
  }
  func.func @transform_4(%arg0: i32) -> (i32, i32, i32) {
    %c0_i32 = arith.constant 0 : i32
    %c0_i32_0 = arith.constant 0 : i32
    %c0_i32_1 = arith.constant 0 : i32
    return %arg0, %c0_i32, %c0_i32_0 : i32, i32, i32
  }
}

module attributes {stable_mosaic.version = 11 : i64} {
  func.func @kernel(%arg0: i32, %arg1: memref<1x256x128xf32, #tpu.memory_space<vmem>>, %arg2: memref<3x384x128xbf16, #tpu.memory_space<vmem>>, %arg3: memref<1x128xf32, #tpu.memory_space<vmem>>, %arg4: memref<1x256x128xf32, #tpu.memory_space<vmem>>, %arg5: memref<1x2x128xf32, #tpu.memory_space<vmem>>) attributes {dimension_semantics = [#tpu.dimension_semantics<parallel>], iteration_bounds = array<i64: 2>, scalar_prefetch = 0 : i64, scratch_operands = 0 : i64, tpu.core_type = #tpu.core_type<tc>, window_params = [{transform_indices = @transform_0, window_bounds = array<i64: 1, 256, 128>}, {pipeline_mode = #tpu.pipeline_mode<synchronous>, transform_indices = @transform_1, window_bounds = array<i64: 3, 384, 128>}, {pipeline_mode = #tpu.pipeline_mode<synchronous>, transform_indices = @transform_2, window_bounds = array<i64: 1, 128>}, {transform_indices = @transform_3, window_bounds = array<i64: 1, 256, 128>}, {transform_indices = @transform_4, window_bounds = array<i64: 1, 2, 128>}]} {
    %c0 = arith.constant 0 : index
    %c0_0 = arith.constant 0 : index
    %c0_1 = arith.constant 0 : index
    %0 = vector.load %arg1[%c0, %c0_0, %c0_1] : memref<1x256x128xf32, #tpu.memory_space<vmem>>, vector<1x256x128xf32>
    %1 = vector.shape_cast %0 : vector<1x256x128xf32> to vector<256x128xf32>
    %2 = arith.truncf %1 : vector<256x128xf32> to vector<256x128xbf16>
    %3 = vector.shape_cast %2 : vector<256x128xbf16> to vector<16x16x128xbf16>
    %4 = vector.extract_strided_slice %3 {offsets = [1, 0, 0], sizes = [1, 16, 128], strides = [1, 1, 1]} : vector<16x16x128xbf16> to vector<1x16x128xbf16>
    %5 = vector.extract_strided_slice %3 {offsets = [14, 0, 0], sizes = [1, 16, 128], strides = [1, 1, 1]} : vector<16x16x128xbf16> to vector<1x16x128xbf16>
    %6 = tpu.concatenate %4, %3, %5 in 0 : vector<1x16x128xbf16>, vector<16x16x128xbf16>, vector<1x16x128xbf16> -> vector<18x16x128xbf16>
    %7 = vector.extract_strided_slice %6 {offsets = [0, 1, 0], sizes = [18, 1, 128], strides = [1, 1, 1]} : vector<18x16x128xbf16> to vector<18x1x128xbf16>
    %8 = vector.extract_strided_slice %6 {offsets = [0, 0, 0], sizes = [18, 15, 128], strides = [1, 1, 1]} : vector<18x16x128xbf16> to vector<18x15x128xbf16>
    %9 = tpu.concatenate %7, %8 in 1 : vector<18x1x128xbf16>, vector<18x15x128xbf16> -> vector<18x16x128xbf16>
    %10 = vector.extract_strided_slice %6 {offsets = [0, 1, 0], sizes = [18, 15, 128], strides = [1, 1, 1]} : vector<18x16x128xbf16> to vector<18x15x128xbf16>
    %11 = vector.extract_strided_slice %6 {offsets = [0, 14, 0], sizes = [18, 1, 128], strides = [1, 1, 1]} : vector<18x16x128xbf16> to vector<18x1x128xbf16>
    %12 = tpu.concatenate %10, %11 in 1 : vector<18x15x128xbf16>, vector<18x1x128xbf16> -> vector<18x16x128xbf16>
    %13 = tpu.concatenate %9, %6, %12 in 2 : vector<18x16x128xbf16>, vector<18x16x128xbf16>, vector<18x16x128xbf16> -> vector<18x16x384xbf16>
    %14 = vector.shape_cast %13 : vector<18x16x384xbf16> to vector<288x384xbf16>
    %15 = vector.extract_strided_slice %14 {offsets = [0, 0], sizes = [256, 384], strides = [1, 1]} : vector<288x384xbf16> to vector<256x384xbf16>
    %c0_2 = arith.constant 0 : index
    %c0_3 = arith.constant 0 : index
    %c0_4 = arith.constant 0 : index
    %16 = vector.load %arg2[%c0_2, %c0_3, %c0_4] : memref<3x384x128xbf16, #tpu.memory_space<vmem>>, vector<1x384x128xbf16>
    %17 = vector.shape_cast %16 : vector<1x384x128xbf16> to vector<384x128xbf16>
    %cst = arith.constant dense<0.000000e+00> : vector<256x128xf32>
    %18 = tpu.matmul %15, %17, %cst {dimension_numbers = #tpu.dot_dimension_numbers<[1], [0], [0], [1], [0, 0, 1, 1], [], []>} : vector<256x384xbf16>, vector<384x128xbf16>, vector<256x128xf32> -> vector<256x128xf32>
    %19 = vector.extract_strided_slice %14 {offsets = [16, 0], sizes = [256, 384], strides = [1, 1]} : vector<288x384xbf16> to vector<256x384xbf16>
    %c1 = arith.constant 1 : index
    %c0_5 = arith.constant 0 : index
    %c0_6 = arith.constant 0 : index
    %20 = vector.load %arg2[%c1, %c0_5, %c0_6] : memref<3x384x128xbf16, #tpu.memory_space<vmem>>, vector<1x384x128xbf16>
    %21 = vector.shape_cast %20 : vector<1x384x128xbf16> to vector<384x128xbf16>
    %cst_7 = arith.constant dense<0.000000e+00> : vector<256x128xf32>
    %22 = tpu.matmul %19, %21, %cst_7 {dimension_numbers = #tpu.dot_dimension_numbers<[1], [0], [0], [1], [0, 0, 1, 1], [], []>} : vector<256x384xbf16>, vector<384x128xbf16>, vector<256x128xf32> -> vector<256x128xf32>
    %23 = arith.addf %18, %22 : vector<256x128xf32>
    %24 = vector.extract_strided_slice %14 {offsets = [32, 0], sizes = [256, 384], strides = [1, 1]} : vector<288x384xbf16> to vector<256x384xbf16>
    %c2 = arith.constant 2 : index
    %c0_8 = arith.constant 0 : index
    %c0_9 = arith.constant 0 : index
    %25 = vector.load %arg2[%c2, %c0_8, %c0_9] : memref<3x384x128xbf16, #tpu.memory_space<vmem>>, vector<1x384x128xbf16>
    %26 = vector.shape_cast %25 : vector<1x384x128xbf16> to vector<384x128xbf16>
    %cst_10 = arith.constant dense<0.000000e+00> : vector<256x128xf32>
    %27 = tpu.matmul %24, %26, %cst_10 {dimension_numbers = #tpu.dot_dimension_numbers<[1], [0], [0], [1], [0, 0, 1, 1], [], []>} : vector<256x384xbf16>, vector<384x128xbf16>, vector<256x128xf32> -> vector<256x128xf32>
    %28 = arith.addf %23, %27 : vector<256x128xf32>
    %c0_11 = arith.constant 0 : index
    %c0_12 = arith.constant 0 : index
    %29 = vector.load %arg3[%c0_11, %c0_12] : memref<1x128xf32, #tpu.memory_space<vmem>>, vector<1x128xf32>
    %30 = vector.broadcast %29 : vector<1x128xf32> to vector<256x128xf32>
    %31 = arith.addf %28, %30 : vector<256x128xf32>
    %cst_13 = arith.constant 2.000000e-01 : f32
    %32 = vector.broadcast %cst_13 : f32 to vector<256x128xf32>
    %33 = arith.mulf %32, %31 : vector<256x128xf32>
    %34 = arith.maximumf %31, %33 : vector<256x128xf32>
    %c0_14 = arith.constant 0 : index
    %c0_15 = arith.constant 0 : index
    %c0_16 = arith.constant 0 : index
    %35 = vector.load %arg4[%c0_14, %c0_15, %c0_16] : memref<1x256x128xf32, #tpu.memory_space<vmem>>, vector<1x256x128xf32>
    %36 = vector.shape_cast %35 : vector<1x256x128xf32> to vector<256x128xf32>
    %37 = vector.shape_cast %34 : vector<256x128xf32> to vector<1x256x128xf32>
    tpu.vector_store %arg4[%c0_14, %c0_15, %c0_16], %37 {strides = array<i32>} : memref<1x256x128xf32, #tpu.memory_space<vmem>>, vector<1x256x128xf32>,
    %cst_17 = arith.constant dense<0.000000e+00> : vector<128xf32>
    %38 = vector.multi_reduction <add>, %34, %cst_17 [0] : vector<256x128xf32> to vector<128xf32>
    %39 = vector.shape_cast %38 : vector<128xf32> to vector<1x128xf32>
    %c0_18 = arith.constant 0 : index
    %c0_19 = arith.constant 0 : index
    %c0_20 = arith.constant 0 : index
    %40 = vector.load %arg5[%c0_18, %c0_19, %c0_20] : memref<1x2x128xf32, #tpu.memory_space<vmem>>, vector<1x1x128xf32>
    %41 = vector.shape_cast %40 : vector<1x1x128xf32> to vector<1x128xf32>
    %42 = vector.shape_cast %39 : vector<1x128xf32> to vector<1x1x128xf32>
    tpu.vector_store %arg5[%c0_18, %c0_19, %c0_20], %42 {strides = array<i32>} : memref<1x2x128xf32, #tpu.memory_space<vmem>>, vector<1x1x128xf32>,
    %43 = arith.mulf %34, %34 : vector<256x128xf32>
    %cst_21 = arith.constant dense<0.000000e+00> : vector<128xf32>
    %44 = vector.multi_reduction <add>, %43, %cst_21 [0] : vector<256x128xf32> to vector<128xf32>
    %45 = vector.shape_cast %44 : vector<128xf32> to vector<1x128xf32>
    %c0_22 = arith.constant 0 : index
    %c1_23 = arith.constant 1 : index
    %c0_24 = arith.constant 0 : index
    %46 = vector.load %arg5[%c0_22, %c1_23, %c0_24] : memref<1x2x128xf32, #tpu.memory_space<vmem>>, vector<1x1x128xf32>
    %47 = vector.shape_cast %46 : vector<1x1x128xf32> to vector<1x128xf32>
    %48 = vector.shape_cast %45 : vector<1x128xf32> to vector<1x1x128xf32>
    tpu.vector_store %arg5[%c0_22, %c1_23, %c0_24], %48 {strides = array<i32>} : memref<1x2x128xf32, #tpu.memory_space<vmem>>, vector<1x1x128xf32>,
    return
  }
  func.func @transform_0(%arg0: i32) -> (i32, i32, i32) {
    %c0_i32 = arith.constant 0 : i32
    %c0_i32_0 = arith.constant 0 : i32
    %c0_i32_1 = arith.constant 0 : i32
    return %arg0, %c0_i32, %c0_i32_0 : i32, i32, i32
  }
  func.func @transform_1(%arg0: i32) -> (i32, i32, i32) {
    %c0_i32 = arith.constant 0 : i32
    %c0_i32_0 = arith.constant 0 : i32
    %c0_i32_1 = arith.constant 0 : i32
    %c0_i32_2 = arith.constant 0 : i32
    return %c0_i32, %c0_i32_0, %c0_i32_1 : i32, i32, i32
  }
  func.func @transform_2(%arg0: i32) -> (i32, i32) {
    %c0_i32 = arith.constant 0 : i32
    %c0_i32_0 = arith.constant 0 : i32
    %c0_i32_1 = arith.constant 0 : i32
    return %c0_i32, %c0_i32_0 : i32, i32
  }
  func.func @transform_3(%arg0: i32) -> (i32, i32, i32) {
    %c0_i32 = arith.constant 0 : i32
    %c0_i32_0 = arith.constant 0 : i32
    %c0_i32_1 = arith.constant 0 : i32
    return %arg0, %c0_i32, %c0_i32_0 : i32, i32, i32
  }
  func.func @transform_4(%arg0: i32) -> (i32, i32, i32) {
    %c0_i32 = arith.constant 0 : i32
    %c0_i32_0 = arith.constant 0 : i32
    %c0_i32_1 = arith.constant 0 : i32
    return %arg0, %c0_i32, %c0_i32_0 : i32, i32, i32
  }
}

module attributes {stable_mosaic.version = 11 : i64} {
  func.func @_bn_residual_kernel(%arg0: i32, %arg1: memref<1x256x128xf32, #tpu.memory_space<vmem>>, %arg2: memref<1x128x256xf32, #tpu.memory_space<vmem>>, %arg3: memref<1x128xf32, #tpu.memory_space<vmem>>, %arg4: memref<1x128xf32, #tpu.memory_space<vmem>>, %arg5: memref<1x128x256xf32, #tpu.memory_space<vmem>>) attributes {dimension_semantics = [#tpu.dimension_semantics<parallel>], iteration_bounds = array<i64: 2>, scalar_prefetch = 0 : i64, scratch_operands = 0 : i64, tpu.core_type = #tpu.core_type<tc>, window_params = [{transform_indices = @transform_0, window_bounds = array<i64: 1, 256, 128>}, {transform_indices = @transform_1, window_bounds = array<i64: 1, 128, 256>}, {pipeline_mode = #tpu.pipeline_mode<synchronous>, transform_indices = @transform_2, window_bounds = array<i64: 1, 128>}, {pipeline_mode = #tpu.pipeline_mode<synchronous>, transform_indices = @transform_3, window_bounds = array<i64: 1, 128>}, {transform_indices = @transform_4, window_bounds = array<i64: 1, 128, 256>}]} {
    %c0 = arith.constant 0 : index
    %c0_0 = arith.constant 0 : index
    %c0_1 = arith.constant 0 : index
    %0 = vector.load %arg1[%c0, %c0_0, %c0_1] : memref<1x256x128xf32, #tpu.memory_space<vmem>>, vector<1x256x128xf32>
    %1 = vector.shape_cast %0 : vector<1x256x128xf32> to vector<256x128xf32>
    %c0_2 = arith.constant 0 : index
    %c0_3 = arith.constant 0 : index
    %2 = vector.load %arg3[%c0_2, %c0_3] : memref<1x128xf32, #tpu.memory_space<vmem>>, vector<1x128xf32>
    %3 = vector.broadcast %2 : vector<1x128xf32> to vector<256x128xf32>
    %4 = arith.mulf %1, %3 : vector<256x128xf32>
    %c0_4 = arith.constant 0 : index
    %c0_5 = arith.constant 0 : index
    %5 = vector.load %arg4[%c0_4, %c0_5] : memref<1x128xf32, #tpu.memory_space<vmem>>, vector<1x128xf32>
    %6 = vector.broadcast %5 : vector<1x128xf32> to vector<256x128xf32>
    %7 = arith.addf %4, %6 : vector<256x128xf32>
    %8 = tpu.transpose %7, [1, 0] : vector<256x128xf32> -> vector<128x256xf32>
    %c0_6 = arith.constant 0 : index
    %c0_7 = arith.constant 0 : index
    %c0_8 = arith.constant 0 : index
    %9 = vector.load %arg2[%c0_6, %c0_7, %c0_8] : memref<1x128x256xf32, #tpu.memory_space<vmem>>, vector<1x128x256xf32>
    %10 = vector.shape_cast %9 : vector<1x128x256xf32> to vector<128x256xf32>
    %11 = arith.addf %8, %10 : vector<128x256xf32>
    %c0_9 = arith.constant 0 : index
    %c0_10 = arith.constant 0 : index
    %c0_11 = arith.constant 0 : index
    %12 = vector.load %arg5[%c0_9, %c0_10, %c0_11] : memref<1x128x256xf32, #tpu.memory_space<vmem>>, vector<1x128x256xf32>
    %13 = vector.shape_cast %12 : vector<1x128x256xf32> to vector<128x256xf32>
    %14 = vector.shape_cast %11 : vector<128x256xf32> to vector<1x128x256xf32>
    tpu.vector_store %arg5[%c0_9, %c0_10, %c0_11], %14 {strides = array<i32>} : memref<1x128x256xf32, #tpu.memory_space<vmem>>, vector<1x128x256xf32>,
    return
  }
  func.func @transform_0(%arg0: i32) -> (i32, i32, i32) {
    %c0_i32 = arith.constant 0 : i32
    %c0_i32_0 = arith.constant 0 : i32
    %c0_i32_1 = arith.constant 0 : i32
    return %arg0, %c0_i32, %c0_i32_0 : i32, i32, i32
  }
  func.func @transform_1(%arg0: i32) -> (i32, i32, i32) {
    %c0_i32 = arith.constant 0 : i32
    %c0_i32_0 = arith.constant 0 : i32
    %c0_i32_1 = arith.constant 0 : i32
    return %arg0, %c0_i32, %c0_i32_0 : i32, i32, i32
  }
  func.func @transform_2(%arg0: i32) -> (i32, i32) {
    %c0_i32 = arith.constant 0 : i32
    %c0_i32_0 = arith.constant 0 : i32
    %c0_i32_1 = arith.constant 0 : i32
    return %c0_i32, %c0_i32_0 : i32, i32
  }
  func.func @transform_3(%arg0: i32) -> (i32, i32) {
    %c0_i32 = arith.constant 0 : i32
    %c0_i32_0 = arith.constant 0 : i32
    %c0_i32_1 = arith.constant 0 : i32
    return %c0_i32, %c0_i32_0 : i32, i32
  }
  func.func @transform_4(%arg0: i32) -> (i32, i32, i32) {
    %c0_i32 = arith.constant 0 : i32
    %c0_i32_0 = arith.constant 0 : i32
    %c0_i32_1 = arith.constant 0 : i32
    return %arg0, %c0_i32, %c0_i32_0 : i32, i32, i32
  }
}

</mosaic_0001>

<llo_original>
// kernel: residual_forward.5
$region0: #{residual_forward.5}
  #allocation0 [shape = 'u32[]', space=smem, size = 0x4, offset = 0x4, fixed_abs, tag = 'smem constant byte address 0x4 - core index']
  #allocation1 [shape = 'u32[144,128]{1,0:T(1,128)}', space=vmem, size = 0x12000, scoped, tag = 'internal scratch']
  %s0 = inlined_call_operand.vmem [shape: f32[2,256,128], index: 0, kind: input, shape index: {}]
  %s1 = inlined_call_operand.vmem [shape: f32[2,128,256], index: 1, kind: input, shape index: {}]
  %s2 = inlined_call_operand.vmem [shape: f32[1,128], index: 2, kind: input, shape index: {}]
  %s3 = inlined_call_operand.vmem [shape: f32[1,128], index: 3, kind: input, shape index: {}]
  %s4 = inlined_call_operand.vmem [shape: f32[2,128,256], index: 4, kind: output, shape index: {}]
  %s5 = sld [smem:[#allocation0]]
  $region49: #{residual_forward.5} parent=0
    _
  %s7 = ssub.s32 1, %s5
  %s8 = scalar_select 0, %s7, %s5
  loop: start=0, step=1, limit=4
  $region2: #{residual_forward.5} parent=0 // loop_pre_header
    _
  $region3: #{residual_forward.5} parent=0 // loop_header
    %s10 = sphi 0, %s14
    %p11 = scmp.ge.s32.totalorder %s10, 4
    %s20 = sphi 0, %s22
    %s23 = sphi 0, %s20
    %s24 = sphi 0, %s23
    %s40 = sphi 0, %s24
    %s46 = sphi 0, %s48
    %s49 = sphi 0, %s46
    %s50 = sphi 0, %s49
    %s66 = sphi 0, %s50
    %s70 = sphi 0, %s70
    %s72 = sphi 0, %s70
    %s73 = sphi 0, %s72
    %s87 = sphi 0, %s73
    %s91 = sphi 0, %s91
    %s93 = sphi 0, %s91
    %s94 = sphi 0, %s93
    %s108 = sphi 0, %s94
    %s114 = sphi 0, %s116
    %s117 = sphi 0, %s114
    %s118 = sphi 0, %s117
    %s134 = sphi 0, %s118
  $region4: #{residual_forward.5} parent=0 // loop_header_branch
    %13 = sbr.rel (%p11) target = $region8
  $region5: #{residual_forward.5} parent=0 // loop_body
    %s15 = ssub.s32 %s10, 1
    %s16 = ssub.s32 %s10, 2
    %s17 = sadd.s32 %s10, 1
    %s18 = ssub.s32 %s10, %s17
    %p19 = scmp.eq.s32.totalorder %s18, 0
    %s21 = sadd.s32 %s20, 1
    %s22 = scalar_select %p19, %s20, %s21
    %p25 = pneg %p19
    %p26 = scmp.eq.s32.totalorder %s10, 1
    %p27 = por %p25, %p26
    %p28 = scmp.ne.s32.totalorder %s20, %s23
    %p29 = scmp.eq.s32.totalorder %s10, 0
    %p30 = por %p28, %p29
    %p31 = scmp.ne.s32.totalorder %s20, %s23
    %p32 = scmp.eq.s32.totalorder %s15, 1
    %p33 = por %p31, %p32
    %p34 = scmp.ne.s32.totalorder %s23, %s24
    %p35 = scmp.eq.s32.totalorder %s15, 0
    %p36 = por %p34, %p35
    %p37 = scmp.ne.s32.totalorder %s23, %s24
    %p38 = scmp.eq.s32.totalorder %s16, 1
    %p39 = por %p37, %p38
    %p41 = scmp.ne.s32.totalorder %s24, %s40
    %p42 = scmp.eq.s32.totalorder %s16, 0
    %p43 = por %p41, %p42
    %s44 = ssub.s32 %s10, %s17
    %p45 = scmp.eq.s32.totalorder %s44, 0
    %s47 = sadd.s32 %s46, 1
    %s48 = scalar_select %p45, %s46, %s47
    %p51 = pneg %p45
    %p52 = scmp.eq.s32.totalorder %s10, 1
    %p53 = por %p51, %p52
    %p54 = scmp.ne.s32.totalorder %s46, %s49
    %p55 = scmp.eq.s32.totalorder %s10, 0
    %p56 = por %p54, %p55
    %p57 = scmp.ne.s32.totalorder %s46, %s49
    %p58 = scmp.eq.s32.totalorder %s15, 1
    %p59 = por %p57, %p58
    %p60 = scmp.ne.s32.totalorder %s49, %s50
    %p61 = scmp.eq.s32.totalorder %s15, 0
    %p62 = por %p60, %p61
    %p63 = scmp.ne.s32.totalorder %s49, %s50
    %p64 = scmp.eq.s32.totalorder %s16, 1
    %p65 = por %p63, %p64
    %p67 = scmp.ne.s32.totalorder %s50, %s66
    %p68 = scmp.eq.s32.totalorder %s16, 0
    %p69 = por %p67, %p68
    %s71 = sadd.s32 %s70, 1
    %p74 = scmp.eq.s32.totalorder %s10, 1
    %p75 = scmp.ne.s32.totalorder %s70, %s72
    %p76 = scmp.eq.s32.totalorder %s10, 0
    %p77 = por %p75, %p76
    %p78 = scmp.ne.s32.totalorder %s70, %s72
    %p79 = scmp.eq.s32.totalorder %s15, 1
    %p80 = por %p78, %p79
    %p81 = scmp.ne.s32.totalorder %s72, %s73
    %p82 = scmp.eq.s32.totalorder %s15, 0
    %p83 = por %p81, %p82
    %p84 = scmp.ne.s32.totalorder %s72, %s73
    %p85 = scmp.eq.s32.totalorder %s16, 1
    %p86 = por %p84, %p85
    %p88 = scmp.ne.s32.totalorder %s73, %s87
    %p89 = scmp.eq.s32.totalorder %s16, 0
    %p90 = por %p88, %p89
    %s92 = sadd.s32 %s91, 1
    %p95 = scmp.eq.s32.totalorder %s10, 1
    %p96 = scmp.ne.s32.totalorder %s91, %s93
    %p97 = scmp.eq.s32.totalorder %s10, 0
    %p98 = por %p96, %p97
    %p99 = scmp.ne.s32.totalorder %s91, %s93
    %p100 = scmp.eq.s32.totalorder %s15, 1
    %p101 = por %p99, %p100
    %p102 = scmp.ne.s32.totalorder %s93, %s94
    %p103 = scmp.eq.s32.totalorder %s15, 0
    %p104 = por %p102, %p103
    %p105 = scmp.ne.s32.totalorder %s93, %s94
    %p106 = scmp.eq.s32.totalorder %s16, 1
    %p107 = por %p105, %p106
    %p109 = scmp.ne.s32.totalorder %s94, %s108
    %p110 = scmp.eq.s32.totalorder %s16, 0
    %p111 = por %p109, %p110
    %s112 = ssub.s32 %s10, %s17
    %p113 = scmp.eq.s32.totalorder %s112, 0
    %s115 = sadd.s32 %s114, 1
    %s116 = scalar_select %p113, %s114, %s115
    %p119 = pneg %p113
    %p120 = scmp.eq.s32.totalorder %s10, 1
    %p121 = por %p119, %p120
    %p122 = scmp.ne.s32.totalorder %s114, %s117
    %p123 = scmp.eq.s32.totalorder %s10, 0
    %p124 = por %p122, %p123
    %p125 = scmp.ne.s32.totalorder %s114, %s117
    %p126 = scmp.eq.s32.totalorder %s15, 1
    %p127 = por %p125, %p126
    %p128 = scmp.ne.s32.totalorder %s117, %s118
    %p129 = scmp.eq.s32.totalorder %s15, 0
    %p130 = por %p128, %p129
    %p131 = scmp.ne.s32.totalorder %s117, %s118
    %p132 = scmp.eq.s32.totalorder %s16, 1
    %p133 = por %p131, %p132
    %p135 = scmp.ne.s32.totalorder %s118, %s134
    %p136 = scmp.eq.s32.totalorder %s16, 0
    %p137 = por %p135, %p136
    %p138 = scmp.le.s32.totalorder 1, %s10
    %p139 = scmp.lt.s32.totalorder %s10, 3
    %p140 = pnand %p138, %p139
    %p141 = pneg %p140
    // Predicated region
    $region9: #{residual_forward.5} parent=5 // pred_check
      _
    $region10: #{residual_forward.5} parent=5 // pred_check_branch
      %143 = sbr.rel (%p140) target = $region12
    $region11: #{residual_forward.5} parent=5 // pred_region
      %s144 = ssub.s32 %s10, 1
      // Predicated region
      $region13: #{residual_forward.5} parent=11 // pred_check
        %p145 = pneg %p83
      $region14: #{residual_forward.5} parent=11 // pred_check_branch
        %147 = sbr.rel (%p145) target = $region16
      $region15: #{residual_forward.5} parent=11 // pred_region
        _
      $region16: #{residual_forward.5} parent=11 // pred_fallthru
        _
      // Predicated region
      $region17: #{residual_forward.5} parent=11 // pred_check
        %p148 = pneg %p104
      $region18: #{residual_forward.5} parent=11 // pred_check_branch
        %150 = sbr.rel (%p148) target = $region20
      $region19: #{residual_forward.5} parent=11 // pred_region
        _
      $region20: #{residual_forward.5} parent=11 // pred_fallthru
        _
    $region12: #{residual_forward.5} parent=5 // pred_fallthru
      _
    %p151 = scmp.lt.s32.totalorder %s10, 2
    // Predicated region
    $region21: #{residual_forward.5} parent=5 // pred_check
      %p152 = pneg %p151
    $region22: #{residual_forward.5} parent=5 // pred_check_branch
      %154 = sbr.rel (%p152) target = $region24
    $region23: #{residual_forward.5} parent=5 // pred_region
      // Predicated region
      $region25: #{residual_forward.5} parent=23 // pred_check
        %p155 = pneg %p30
      $region26: #{residual_forward.5} parent=23 // pred_check_branch
        %157 = sbr.rel (%p155) target = $region28
      $region27: #{residual_forward.5} parent=23 // pred_region
        %p158 = scmp.lt.s32.totalorder %s10, 1
        %s159 = scalar_select %p158, %s10, 1
        %s160 = smul.addr %s159, 32
        %s161 = smul.addr %s160, 8
        %s162 = scalar_lea.vmem %s0, %s161
      $region28: #{residual_forward.5} parent=23 // pred_fallthru
        _
      // Predicated region
      $region29: #{residual_forward.5} parent=23 // pred_check
        %p163 = pneg %p56
      $region30: #{residual_forward.5} parent=23 // pred_check_branch
        %165 = sbr.rel (%p163) target = $region32
      $region31: #{residual_forward.5} parent=23 // pred_region
        %p166 = scmp.lt.s32.totalorder %s10, 1
        %s167 = scalar_select %p166, %s10, 1
        %s168 = smul.addr %s167, 32
        %s169 = smul.addr %s168, 8
        %s170 = scalar_lea.vmem %s1, %s169
      $region32: #{residual_forward.5} parent=23 // pred_fallthru
        _
    $region24: #{residual_forward.5} parent=5 // pred_fallthru
      _
    %p171 = scmp.le.s32.totalorder 1, %s10
    %p172 = scmp.lt.s32.totalorder %s10, 3
    %p173 = pnand %p171, %p172
    %p174 = pneg %p173
    // Predicated region
    $region33: #{residual_forward.5} parent=5 // pred_check
      _
    $region34: #{residual_forward.5} parent=5 // pred_check_branch
      %176 = sbr.rel (%p173) target = $region36
    $region35: #{residual_forward.5} parent=5 // pred_region
      %s177 = ssub.s32 %s10, 1
      %p178 = scmp.lt.s32.totalorder %s15, 1
      %s179 = scalar_select %p178, %s15, 1
      %s180 = smul.addr %s179, 32
      %s181 = smul.addr %s180, 8
      %s182 = scalar_lea.vmem %s0, %s181
      %p183 = pneg %p36
      %p184 = pneg %p33
      %p185 = scmp.lt.s32.totalorder %s15, 1
      %s186 = scalar_select %p185, %s15, 1
      %s187 = smul.addr %s186, 32
      %s188 = smul.addr %s187, 8
      %s189 = scalar_lea.vmem %s1, %s188
      %p190 = pneg %p62
      %p191 = pneg %p59
      %p192 = pneg %p83
      %p193 = pneg %p80
      %p194 = pneg %p104
      %p195 = pneg %p101
      %p196 = pneg %p130
      %p197 = pneg %p127
      %p198 = scmp.lt.s32.totalorder %s15, 1
      %s199 = scalar_select %p198, %s15, 1
      %s200 = smul.addr %s199, 32
      %s201 = smul.addr %s200, 8
      %s202 = scalar_lea.vmem %s4, %s201
      %p203 = scmp.lt.s32.totalorder %s15, 1
      %s204 = scalar_select %p203, %s15, 1
      %s205 = smul.addr %s204, 32
      %s206 = smul.addr %s205, 8
      %s207 = scalar_lea.vmem %s0, %s206
      %p208 = scmp.lt.s32.totalorder %s15, 1
      %s209 = scalar_select %p208, %s15, 1
      %s210 = smul.addr %s209, 32
      %s211 = smul.addr %s210, 8
      %s212 = scalar_lea.vmem %s1, %s211
      %p213 = scmp.lt.s32.totalorder %s15, 1
      %s214 = scalar_select %p213, %s15, 1
      %s215 = smul.addr %s214, 32
      %s216 = smul.addr %s215, 8
      %s217 = scalar_lea.vmem %s4, %s216
      %v218 = vld [vmem:[%s207] sm:$0xff]
      %v219 = vld [vmem:[%s207 + $0x8] sm:$0xff]
      %v220 = vld [vmem:[%s207 + $0x10] sm:$0xff]
      %v221 = vld [vmem:[%s207 + $0x18] sm:$0xff]
      %v222 = vld [vmem:[%s207 + $0x20] sm:$0xff]
      %v223 = vld [vmem:[%s207 + $0x28] sm:$0xff]
      %v224 = vld [vmem:[%s207 + $0x30] sm:$0xff]
      %v225 = vld [vmem:[%s207 + $0x38] sm:$0xff]
      %v226 = vld [vmem:[%s207 + $0x40] sm:$0xff]
      %v227 = vld [vmem:[%s207 + $0x48] sm:$0xff]
      %v228 = vld [vmem:[%s207 + $0x50] sm:$0xff]
      %v229 = vld [vmem:[%s207 + $0x58] sm:$0xff]
      %v230 = vld [vmem:[%s207 + $0x60] sm:$0xff]
      %v231 = vld [vmem:[%s207 + $0x68] sm:$0xff]
      %v232 = vld [vmem:[%s207 + $0x70] sm:$0xff]
      %v233 = vld [vmem:[%s207 + $0x78] sm:$0xff]
      %v234 = vld [vmem:[%s207 + $0x80] sm:$0xff]
      %v235 = vld [vmem:[%s207 + $0x88] sm:$0xff]
      %v236 = vld [vmem:[%s207 + $0x90] sm:$0xff]
      %v237 = vld [vmem:[%s207 + $0x98] sm:$0xff]
      %v238 = vld [vmem:[%s207 + $0xa0] sm:$0xff]
      %v239 = vld [vmem:[%s207 + $0xa8] sm:$0xff]
      %v240 = vld [vmem:[%s207 + $0xb0] sm:$0xff]
      %v241 = vld [vmem:[%s207 + $0xb8] sm:$0xff]
      %v242 = vld [vmem:[%s207 + $0xc0] sm:$0xff]
      %v243 = vld [vmem:[%s207 + $0xc8] sm:$0xff]
      %v244 = vld [vmem:[%s207 + $0xd0] sm:$0xff]
      %v245 = vld [vmem:[%s207 + $0xd8] sm:$0xff]
      %v246 = vld [vmem:[%s207 + $0xe0] sm:$0xff]
      %v247 = vld [vmem:[%s207 + $0xe8] sm:$0xff]
      %v248 = vld [vmem:[%s207 + $0xf0] sm:$0xff]
      %v249 = vld [vmem:[%s207 + $0xf8] sm:$0xff]
      %v250 = vld [vmem:[%s2] sm:$0x1]
      %v252 = vlaneseq
      %v253 = vshrl.u32 %v252, 7
      %v254 = vsub.s32 0, %v253
      %v255 = vrot.slane %v250, %v254
      %v257 = vmul.f32 %v218, %v255
      %v258 = vmul.f32 %v219, %v255
      %v259 = vmul.f32 %v220, %v255
      %v260 = vmul.f32 %v221, %v255
      %v261 = vmul.f32 %v222, %v255
      %v262 = vmul.f32 %v223, %v255
      %v263 = vmul.f32 %v224, %v255
      %v264 = vmul.f32 %v225, %v255
      %v265 = vmul.f32 %v226, %v255
      %v266 = vmul.f32 %v227, %v255
      %v267 = vmul.f32 %v228, %v255
      %v268 = vmul.f32 %v229, %v255
      %v269 = vmul.f32 %v230, %v255
      %v270 = vmul.f32 %v231, %v255
      %v271 = vmul.f32 %v232, %v255
      %v272 = vmul.f32 %v233, %v255
      %v273 = vmul.f32 %v234, %v255
      %v274 = vmul.f32 %v235, %v255
      %v275 = vmul.f32 %v236, %v255
      %v276 = vmul.f32 %v237, %v255
      %v277 = vmul.f32 %v238, %v255
      %v278 = vmul.f32 %v239, %v255
      %v279 = vmul.f32 %v240, %v255
      %v280 = vmul.f32 %v241, %v255
      %v281 = vmul.f32 %v242, %v255
      %v282 = vmul.f32 %v243, %v255
      %v283 = vmul.f32 %v244, %v255
      %v284 = vmul.f32 %v245, %v255
      %v285 = vmul.f32 %v246, %v255
      %v286 = vmul.f32 %v247, %v255
      %v287 = vmul.f32 %v248, %v255
      %v288 = vmul.f32 %v249, %v255
      %v289 = vld [vmem:[%s3] sm:$0x1]
      %v291 = vlaneseq
      %v292 = vshrl.u32 %v291, 7
      %v293 = vsub.s32 0, %v292
      %v294 = vrot.slane %v289, %v293
      %v296 = vadd.f32 %v257, %v294
      %v297 = vadd.f32 %v258, %v294
      %v298 = vadd.f32 %v259, %v294
      %v299 = vadd.f32 %v260, %v294
      %v300 = vadd.f32 %v261, %v294
      %v301 = vadd.f32 %v262, %v294
      %v302 = vadd.f32 %v263, %v294
      %v303 = vadd.f32 %v264, %v294
      %v304 = vadd.f32 %v265, %v294
      %v305 = vadd.f32 %v266, %v294
      %v306 = vadd.f32 %v267, %v294
      %v307 = vadd.f32 %v268, %v294
      %v308 = vadd.f32 %v269, %v294
      %v309 = vadd.f32 %v270, %v294
      %v310 = vadd.f32 %v271, %v294
      %v311 = vadd.f32 %v272, %v294
      %v312 = vadd.f32 %v273, %v294
      %v313 = vadd.f32 %v274, %v294
      %v314 = vadd.f32 %v275, %v294
      %v315 = vadd.f32 %v276, %v294
      %v316 = vadd.f32 %v277, %v294
      %v317 = vadd.f32 %v278, %v294
      %v318 = vadd.f32 %v279, %v294
      %v319 = vadd.f32 %v280, %v294
      %v320 = vadd.f32 %v281, %v294
      %v321 = vadd.f32 %v282, %v294
      %v322 = vadd.f32 %v283, %v294
      %v323 = vadd.f32 %v284, %v294
      %v324 = vadd.f32 %v285, %v294
      %v325 = vadd.f32 %v286, %v294
      %v326 = vadd.f32 %v287, %v294
      %v327 = vadd.f32 %v288, %v294
      %328 = vxpose.xlu0.b32.start [1/16] %v296, 128
      %329 = vxpose.xlu0.b32.cont [2/16] %v297, 128
      %330 = vxpose.xlu0.b32.cont [3/16] %v298, 128
      %331 = vxpose.xlu0.b32.cont [4/16] %v299, 128
      %332 = vxpose.xlu0.b32.cont [5/16] %v300, 128
      %333 = vxpose.xlu0.b32.cont [6/16] %v301, 128
      %334 = vxpose.xlu0.b32.cont [7/16] %v302, 128
      %335 = vxpose.xlu0.b32.cont [8/16] %v303, 128
      %336 = vxpose.xlu0.b32.cont [9/16] %v304, 128
      %337 = vxpose.xlu0.b32.cont [10/16] %v305, 128
      %338 = vxpose.xlu0.b32.cont [11/16] %v306, 128
      %339 = vxpose.xlu0.b32.cont [12/16] %v307, 128
      %340 = vxpose.xlu0.b32.cont [13/16] %v308, 128
      %341 = vxpose.xlu0.b32.cont [14/16] %v309, 128
      %342 = vxpose.xlu0.b32.cont [15/16] %v310, 128
      %343 = vxpose.xlu0.b32.end [16/16] %v311, 128
      %v344 = vpop.trf.xlu0
      %v345 = vpop.trf.xlu0
      %v346 = vpop.trf.xlu0
      %v347 = vpop.trf.xlu0
      %v348 = vpop.trf.xlu0
      %v349 = vpop.trf.xlu0
      %v350 = vpop.trf.xlu0
      %v351 = vpop.trf.xlu0
      %v352 = vpop.trf.xlu0
      %v353 = vpop.trf.xlu0
      %v354 = vpop.trf.xlu0
      %v355 = vpop.trf.xlu0
      %v356 = vpop.trf.xlu0
      %v357 = vpop.trf.xlu0
      %v358 = vpop.trf.xlu0
      %v359 = vpop.trf.xlu0
      %360 = vxpose.xlu0.b32.start [1/16] %v312, 128
      %361 = vxpose.xlu0.b32.cont [2/16] %v313, 128
      %362 = vxpose.xlu0.b32.cont [3/16] %v314, 128
      %363 = vxpose.xlu0.b32.cont [4/16] %v315, 128
      %364 = vxpose.xlu0.b32.cont [5/16] %v316, 128
      %365 = vxpose.xlu0.b32.cont [6/16] %v317, 128
      %366 = vxpose.xlu0.b32.cont [7/16] %v318, 128
      %367 = vxpose.xlu0.b32.cont [8/16] %v319, 128
      %368 = vxpose.xlu0.b32.cont [9/16] %v320, 128
      %369 = vxpose.xlu0.b32.cont [10/16] %v321, 128
      %370 = vxpose.xlu0.b32.cont [11/16] %v322, 128
      %371 = vxpose.xlu0.b32.cont [12/16] %v323, 128
      %372 = vxpose.xlu0.b32.cont [13/16] %v324, 128
      %373 = vxpose.xlu0.b32.cont [14/16] %v325, 128
      %374 = vxpose.xlu0.b32.cont [15/16] %v326, 128
      %375 = vxpose.xlu0.b32.end [16/16] %v327, 128
      %v376 = vpop.trf.xlu0
      %v377 = vpop.trf.xlu0
      %v378 = vpop.trf.xlu0
      %v379 = vpop.trf.xlu0
      %v380 = vpop.trf.xlu0
      %v381 = vpop.trf.xlu0
      %v382 = vpop.trf.xlu0
      %v383 = vpop.trf.xlu0
      %v384 = vpop.trf.xlu0
      %v385 = vpop.trf.xlu0
      %v386 = vpop.trf.xlu0
      %v387 = vpop.trf.xlu0
      %v388 = vpop.trf.xlu0
      %v389 = vpop.trf.xlu0
      %v390 = vpop.trf.xlu0
      %v391 = vpop.trf.xlu0
      %v392 = vld [vmem:[%s212] sm:$0xff]
      %v393 = vld [vmem:[%s212 + $0x8] sm:$0xff]
      %v394 = vld [vmem:[%s212 + $0x10] sm:$0xff]
      %v395 = vld [vmem:[%s212 + $0x18] sm:$0xff]
      %v396 = vld [vmem:[%s212 + $0x20] sm:$0xff]
      %v397 = vld [vmem:[%s212 + $0x28] sm:$0xff]
      %v398 = vld [vmem:[%s212 + $0x30] sm:$0xff]
      %v399 = vld [vmem:[%s212 + $0x38] sm:$0xff]
      %v400 = vld [vmem:[%s212 + $0x40] sm:$0xff]
      %v401 = vld [vmem:[%s212 + $0x48] sm:$0xff]
      %v402 = vld [vmem:[%s212 + $0x50] sm:$0xff]
      %v403 = vld [vmem:[%s212 + $0x58] sm:$0xff]
      %v404 = vld [vmem:[%s212 + $0x60] sm:$0xff]
      %v405 = vld [vmem:[%s212 + $0x68] sm:$0xff]
      %v406 = vld [vmem:[%s212 + $0x70] sm:$0xff]
      %v407 = vld [vmem:[%s212 + $0x78] sm:$0xff]
      %v408 = vld [vmem:[%s212 + $0x80] sm:$0xff]
      %v409 = vld [vmem:[%s212 + $0x88] sm:$0xff]
      %v410 = vld [vmem:[%s212 + $0x90] sm:$0xff]
      %v411 = vld [vmem:[%s212 + $0x98] sm:$0xff]
      %v412 = vld [vmem:[%s212 + $0xa0] sm:$0xff]
      %v413 = vld [vmem:[%s212 + $0xa8] sm:$0xff]
      %v414 = vld [vmem:[%s212 + $0xb0] sm:$0xff]
      %v415 = vld [vmem:[%s212 + $0xb8] sm:$0xff]
      %v416 = vld [vmem:[%s212 + $0xc0] sm:$0xff]
      %v417 = vld [vmem:[%s212 + $0xc8] sm:$0xff]
      %v418 = vld [vmem:[%s212 + $0xd0] sm:$0xff]
      %v419 = vld [vmem:[%s212 + $0xd8] sm:$0xff]
      %v420 = vld [vmem:[%s212 + $0xe0] sm:$0xff]
      %v421 = vld [vmem:[%s212 + $0xe8] sm:$0xff]
      %v422 = vld [vmem:[%s212 + $0xf0] sm:$0xff]
      %v423 = vld [vmem:[%s212 + $0xf8] sm:$0xff]
      %v424 = vadd.f32 %v344, %v392
      %v425 = vadd.f32 %v376, %v393
      %v426 = vadd.f32 %v345, %v394
      %v427 = vadd.f32 %v377, %v395
      %v428 = vadd.f32 %v346, %v396
      %v429 = vadd.f32 %v378, %v397
      %v430 = vadd.f32 %v347, %v398
      %v431 = vadd.f32 %v379, %v399
      %v432 = vadd.f32 %v348, %v400
      %v433 = vadd.f32 %v380, %v401
      %v434 = vadd.f32 %v349, %v402
      %v435 = vadd.f32 %v381, %v403
      %v436 = vadd.f32 %v350, %v404
      %v437 = vadd.f32 %v382, %v405
      %v438 = vadd.f32 %v351, %v406
      %v439 = vadd.f32 %v383, %v407
      %v440 = vadd.f32 %v352, %v408
      %v441 = vadd.f32 %v384, %v409
      %v442 = vadd.f32 %v353, %v410
      %v443 = vadd.f32 %v385, %v411
      %v444 = vadd.f32 %v354, %v412
      %v445 = vadd.f32 %v386, %v413
      %v446 = vadd.f32 %v355, %v414
      %v447 = vadd.f32 %v387, %v415
      %v448 = vadd.f32 %v356, %v416
      %v449 = vadd.f32 %v388, %v417
      %v450 = vadd.f32 %v357, %v418
      %v451 = vadd.f32 %v389, %v419
      %v452 = vadd.f32 %v358, %v420
      %v453 = vadd.f32 %v390, %v421
      %v454 = vadd.f32 %v359, %v422
      %v455 = vadd.f32 %v391, %v423
      %456 = vst [vmem:[%s217] sm:$0xff] %v424
      %457 = vst [vmem:[%s217 + $0x8] sm:$0xff] %v425
      %458 = vst [vmem:[%s217 + $0x10] sm:$0xff] %v426
      %459 = vst [vmem:[%s217 + $0x18] sm:$0xff] %v427
      %460 = vst [vmem:[%s217 + $0x20] sm:$0xff] %v428
      %461 = vst [vmem:[%s217 + $0x28] sm:$0xff] %v429
      %462 = vst [vmem:[%s217 + $0x30] sm:$0xff] %v430
      %463 = vst [vmem:[%s217 + $0x38] sm:$0xff] %v431
      %464 = vst [vmem:[%s217 + $0x40] sm:$0xff] %v432
      %465 = vst [vmem:[%s217 + $0x48] sm:$0xff] %v433
      %466 = vst [vmem:[%s217 + $0x50] sm:$0xff] %v434
      %467 = vst [vmem:[%s217 + $0x58] sm:$0xff] %v435
      %468 = vst [vmem:[%s217 + $0x60] sm:$0xff] %v436
      %469 = vst [vmem:[%s217 + $0x68] sm:$0xff] %v437
      %470 = vst [vmem:[%s217 + $0x70] sm:$0xff] %v438
      %471 = vst [vmem:[%s217 + $0x78] sm:$0xff] %v439
      %472 = vst [vmem:[%s217 + $0x80] sm:$0xff] %v440
      %473 = vst [vmem:[%s217 + $0x88] sm:$0xff] %v441
      %474 = vst [vmem:[%s217 + $0x90] sm:$0xff] %v442
      %475 = vst [vmem:[%s217 + $0x98] sm:$0xff] %v443
      %476 = vst [vmem:[%s217 + $0xa0] sm:$0xff] %v444
      %477 = vst [vmem:[%s217 + $0xa8] sm:$0xff] %v445
      %478 = vst [vmem:[%s217 + $0xb0] sm:$0xff] %v446
      %479 = vst [vmem:[%s217 + $0xb8] sm:$0xff] %v447
      %480 = vst [vmem:[%s217 + $0xc0] sm:$0xff] %v448
      %481 = vst [vmem:[%s217 + $0xc8] sm:$0xff] %v449
      %482 = vst [vmem:[%s217 + $0xd0] sm:$0xff] %v450
      %483 = vst [vmem:[%s217 + $0xd8] sm:$0xff] %v451
      %484 = vst [vmem:[%s217 + $0xe0] sm:$0xff] %v452
      %485 = vst [vmem:[%s217 + $0xe8] sm:$0xff] %v453
      %486 = vst [vmem:[%s217 + $0xf0] sm:$0xff] %v454
      %487 = vst [vmem:[%s217 + $0xf8] sm:$0xff] %v455
      %p488 = scmp.lt.s32.totalorder %s15, 1
      %s489 = scalar_select %p488, %s15, 1
      %s490 = smul.addr %s489, 32
      %s491 = smul.addr %s490, 8
      %s492 = scalar_lea.vmem %s4, %s491
      // Predicated region
      $region37: #{residual_forward.5} parent=35 // pred_check
        %p493 = pneg %p127
      $region38: #{residual_forward.5} parent=35 // pred_check_branch
        %495 = sbr.rel (%p493) target = $region40
      $region39: #{residual_forward.5} parent=35 // pred_region
        _
      $region40: #{residual_forward.5} parent=35 // pred_fallthru
        _
    $region36: #{residual_forward.5} parent=5 // pred_fallthru
      _
    %p496 = scmp.le.s32.totalorder 2, %s10
    // Predicated region
    $region41: #{residual_forward.5} parent=5 // pred_check
      %p497 = pneg %p496
    $region42: #{residual_forward.5} parent=5 // pred_check_branch
      %499 = sbr.rel (%p497) target = $region44
    $region43: #{residual_forward.5} parent=5 // pred_region
      %s500 = ssub.s32 %s10, 2
      // Predicated region
      $region45: #{residual_forward.5} parent=43 // pred_check
        %p501 = pneg %p133
      $region46: #{residual_forward.5} parent=43 // pred_check_branch
        %503 = sbr.rel (%p501) target = $region48
      $region47: #{residual_forward.5} parent=43 // pred_region
        %p504 = scmp.lt.s32.totalorder %s16, 1
        %s505 = scalar_select %p504, %s16, 1
        %s506 = smul.addr %s505, 32
        %s507 = smul.addr %s506, 8
        %s508 = scalar_lea.vmem %s4, %s507
      $region48: #{residual_forward.5} parent=43 // pred_fallthru
        _
    $region44: #{residual_forward.5} parent=5 // pred_fallthru
      _
  $region6: #{residual_forward.5} parent=0 // loop_footer
    %s14 = sadd.s32 1, %s10
  $region7: #{residual_forward.5} parent=0 // loop_footer_branch
    %9 = sbr.rel target = $region3
  $region8: #{residual_forward.5} parent=0 // loop_exit
    _

// kernel: residual_forward.3
$region0: #{residual_forward.3}
  #allocation0 [shape = 'u32[]', space=smem, size = 0x4, offset = 0x4, fixed_abs, tag = 'smem constant byte address 0x4 - core index']
  #allocation1 [shape = 'u32[144,128]{1,0:T(1,128)}', space=vmem, size = 0x12000, scoped, tag = 'internal scratch']
  %s0 = inlined_call_operand.vmem [shape: f32[2,128,256], index: 0, kind: input, shape index: {}]
  %s1 = inlined_call_operand.vmem [shape: bf16[3,384,128], index: 1, kind: input, shape index: {}]
  %s2 = inlined_call_operand.vmem [shape: f32[1,128], index: 2, kind: input, shape index: {}]
  %s3 = inlined_call_operand.vmem [shape: f32[2,256,128], index: 3, kind: output, shape index: {0}]
  %s4 = inlined_call_operand.vmem [shape: f32[2,2,128], index: 4, kind: output, shape index: {1}]
  %5 = xla_tuple %s3, %s4
  %s6 = sld [smem:[#allocation0]]
  $region53: #{residual_forward.3} parent=0
    _
  %s8 = ssub.s32 1, %s6
  %s9 = scalar_select 0, %s8, %s6
  loop: start=0, step=1, limit=4
  $region2: #{residual_forward.3} parent=0 // loop_pre_header
    _
  $region3: #{residual_forward.3} parent=0 // loop_header
    %s11 = sphi 0, %s15
    %p12 = scmp.ge.s32.totalorder %s11, 4
    %s21 = sphi 0, %s23
    %s24 = sphi 0, %s21
    %s25 = sphi 0, %s24
    %s41 = sphi 0, %s25
    %s45 = sphi 0, %s45
    %s47 = sphi 0, %s45
    %s48 = sphi 0, %s47
    %s62 = sphi 0, %s48
    %s66 = sphi 0, %s66
    %s68 = sphi 0, %s66
    %s69 = sphi 0, %s68
    %s83 = sphi 0, %s69
    %s89 = sphi 0, %s91
    %s92 = sphi 0, %s89
    %s93 = sphi 0, %s92
    %s109 = sphi 0, %s93
    %s115 = sphi 0, %s117
    %s118 = sphi 0, %s115
    %s119 = sphi 0, %s118
    %s135 = sphi 0, %s119
  $region4: #{residual_forward.3} parent=0 // loop_header_branch
    %14 = sbr.rel (%p12) target = $region8
  $region5: #{residual_forward.3} parent=0 // loop_body
    %s16 = ssub.s32 %s11, 1
    %s17 = ssub.s32 %s11, 2
    %s18 = sadd.s32 %s11, 1
    %s19 = ssub.s32 %s11, %s18
    %p20 = scmp.eq.s32.totalorder %s19, 0
    %s22 = sadd.s32 %s21, 1
    %s23 = scalar_select %p20, %s21, %s22
    %p26 = pneg %p20
    %p27 = scmp.eq.s32.totalorder %s11, 1
    %p28 = por %p26, %p27
    %p29 = scmp.ne.s32.totalorder %s21, %s24
    %p30 = scmp.eq.s32.totalorder %s11, 0
    %p31 = por %p29, %p30
    %p32 = scmp.ne.s32.totalorder %s21, %s24
    %p33 = scmp.eq.s32.totalorder %s16, 1
    %p34 = por %p32, %p33
    %p35 = scmp.ne.s32.totalorder %s24, %s25
    %p36 = scmp.eq.s32.totalorder %s16, 0
    %p37 = por %p35, %p36
    %p38 = scmp.ne.s32.totalorder %s24, %s25
    %p39 = scmp.eq.s32.totalorder %s17, 1
    %p40 = por %p38, %p39
    %p42 = scmp.ne.s32.totalorder %s25, %s41
    %p43 = scmp.eq.s32.totalorder %s17, 0
    %p44 = por %p42, %p43
    %s46 = sadd.s32 %s45, 1
    %p49 = scmp.eq.s32.totalorder %s11, 1
    %p50 = scmp.ne.s32.totalorder %s45, %s47
    %p51 = scmp.eq.s32.totalorder %s11, 0
    %p52 = por %p50, %p51
    %p53 = scmp.ne.s32.totalorder %s45, %s47
    %p54 = scmp.eq.s32.totalorder %s16, 1
    %p55 = por %p53, %p54
    %p56 = scmp.ne.s32.totalorder %s47, %s48
    %p57 = scmp.eq.s32.totalorder %s16, 0
    %p58 = por %p56, %p57
    %p59 = scmp.ne.s32.totalorder %s47, %s48
    %p60 = scmp.eq.s32.totalorder %s17, 1
    %p61 = por %p59, %p60
    %p63 = scmp.ne.s32.totalorder %s48, %s62
    %p64 = scmp.eq.s32.totalorder %s17, 0
    %p65 = por %p63, %p64
    %s67 = sadd.s32 %s66, 1
    %p70 = scmp.eq.s32.totalorder %s11, 1
    %p71 = scmp.ne.s32.totalorder %s66, %s68
    %p72 = scmp.eq.s32.totalorder %s11, 0
    %p73 = por %p71, %p72
    %p74 = scmp.ne.s32.totalorder %s66, %s68
    %p75 = scmp.eq.s32.totalorder %s16, 1
    %p76 = por %p74, %p75
    %p77 = scmp.ne.s32.totalorder %s68, %s69
    %p78 = scmp.eq.s32.totalorder %s16, 0
    %p79 = por %p77, %p78
    %p80 = scmp.ne.s32.totalorder %s68, %s69
    %p81 = scmp.eq.s32.totalorder %s17, 1
    %p82 = por %p80, %p81
    %p84 = scmp.ne.s32.totalorder %s69, %s83
    %p85 = scmp.eq.s32.totalorder %s17, 0
    %p86 = por %p84, %p85
    %s87 = ssub.s32 %s11, %s18
    %p88 = scmp.eq.s32.totalorder %s87, 0
    %s90 = sadd.s32 %s89, 1
    %s91 = scalar_select %p88, %s89, %s90
    %p94 = pneg %p88
    %p95 = scmp.eq.s32.totalorder %s11, 1
    %p96 = por %p94, %p95
    %p97 = scmp.ne.s32.totalorder %s89, %s92
    %p98 = scmp.eq.s32.totalorder %s11, 0
    %p99 = por %p97, %p98
    %p100 = scmp.ne.s32.totalorder %s89, %s92
    %p101 = scmp.eq.s32.totalorder %s16, 1
    %p102 = por %p100, %p101
    %p103 = scmp.ne.s32.totalorder %s92, %s93
    %p104 = scmp.eq.s32.totalorder %s16, 0
    %p105 = por %p103, %p104
    %p106 = scmp.ne.s32.totalorder %s92, %s93
    %p107 = scmp.eq.s32.totalorder %s17, 1
    %p108 = por %p106, %p107
    %p110 = scmp.ne.s32.totalorder %s93, %s109
    %p111 = scmp.eq.s32.totalorder %s17, 0
    %p112 = por %p110, %p111
    %s113 = ssub.s32 %s11, %s18
    %p114 = scmp.eq.s32.totalorder %s113, 0
    %s116 = sadd.s32 %s115, 1
    %s117 = scalar_select %p114, %s115, %s116
    %p120 = pneg %p114
    %p121 = scmp.eq.s32.totalorder %s11, 1
    %p122 = por %p120, %p121
    %p123 = scmp.ne.s32.totalorder %s115, %s118
    %p124 = scmp.eq.s32.totalorder %s11, 0
    %p125 = por %p123, %p124
    %p126 = scmp.ne.s32.totalorder %s115, %s118
    %p127 = scmp.eq.s32.totalorder %s16, 1
    %p128 = por %p126, %p127
    %p129 = scmp.ne.s32.totalorder %s118, %s119
    %p130 = scmp.eq.s32.totalorder %s16, 0
    %p131 = por %p129, %p130
    %p132 = scmp.ne.s32.totalorder %s118, %s119
    %p133 = scmp.eq.s32.totalorder %s17, 1
    %p134 = por %p132, %p133
    %p136 = scmp.ne.s32.totalorder %s119, %s135
    %p137 = scmp.eq.s32.totalorder %s17, 0
    %p138 = por %p136, %p137
    %p139 = scmp.le.s32.totalorder 1, %s11
    %p140 = scmp.lt.s32.totalorder %s11, 3
    %p141 = pnand %p139, %p140
    %p142 = pneg %p141
    // Predicated region
    $region9: #{residual_forward.3} parent=5 // pred_check
      _
    $region10: #{residual_forward.3} parent=5 // pred_check_branch
      %144 = sbr.rel (%p141) target = $region12
    $region11: #{residual_forward.3} parent=5 // pred_region
      %s145 = ssub.s32 %s11, 1
      // Predicated region
      $region13: #{residual_forward.3} parent=11 // pred_check
        %p146 = pneg %p58
      $region14: #{residual_forward.3} parent=11 // pred_check_branch
        %148 = sbr.rel (%p146) target = $region16
      $region15: #{residual_forward.3} parent=11 // pred_region
        _
      $region16: #{residual_forward.3} parent=11 // pred_fallthru
        _
      // Predicated region
      $region17: #{residual_forward.3} parent=11 // pred_check
        %p149 = pneg %p79
      $region18: #{residual_forward.3} parent=11 // pred_check_branch
        %151 = sbr.rel (%p149) target = $region20
      $region19: #{residual_forward.3} parent=11 // pred_region
        _
      $region20: #{residual_forward.3} parent=11 // pred_fallthru
        _
    $region12: #{residual_forward.3} parent=5 // pred_fallthru
      _
    %p152 = scmp.lt.s32.totalorder %s11, 2
    // Predicated region
    $region21: #{residual_forward.3} parent=5 // pred_check
      %p153 = pneg %p152
    $region22: #{residual_forward.3} parent=5 // pred_check_branch
      %155 = sbr.rel (%p153) target = $region24
    $region23: #{residual_forward.3} parent=5 // pred_region
      // Predicated region
      $region25: #{residual_forward.3} parent=23 // pred_check
        %p156 = pneg %p31
      $region26: #{residual_forward.3} parent=23 // pred_check_branch
        %158 = sbr.rel (%p156) target = $region28
      $region27: #{residual_forward.3} parent=23 // pred_region
        %p159 = scmp.lt.s32.totalorder %s11, 1
        %s160 = scalar_select %p159, %s11, 1
        %s161 = smul.addr %s160, 32
        %s162 = smul.addr %s161, 8
        %s163 = scalar_lea.vmem %s0, %s162
      $region28: #{residual_forward.3} parent=23 // pred_fallthru
        _
    $region24: #{residual_forward.3} parent=5 // pred_fallthru
      _
    %p164 = scmp.le.s32.totalorder 1, %s11
    %p165 = scmp.lt.s32.totalorder %s11, 3
    %p166 = pnand %p164, %p165
    %p167 = pneg %p166
    // Predicated region
    $region29: #{residual_forward.3} parent=5 // pred_check
      _
    $region30: #{residual_forward.3} parent=5 // pred_check_branch
      %169 = sbr.rel (%p166) target = $region32
    $region31: #{residual_forward.3} parent=5 // pred_region
      %s170 = ssub.s32 %s11, 1
      %p171 = scmp.lt.s32.totalorder %s16, 1
      %s172 = scalar_select %p171, %s16, 1
      %s173 = smul.addr %s172, 32
      %s174 = smul.addr %s173, 8
      %s175 = scalar_lea.vmem %s0, %s174
      %p176 = pneg %p37
      %p177 = pneg %p34
      %p178 = pneg %p58
      %p179 = pneg %p55
      %p180 = pneg %p79
      %p181 = pneg %p76
      %p182 = pneg %p105
      %p183 = pneg %p102
      %p184 = scmp.lt.s32.totalorder %s16, 1
      %s185 = scalar_select %p184, %s16, 1
      %s186 = smul.addr %s185, 32
      %s187 = smul.addr %s186, 8
      %s188 = scalar_lea.vmem %s3, %s187
      %p189 = pneg %p131
      %p190 = pneg %p128
      %p191 = scmp.lt.s32.totalorder %s16, 1
      %s192 = scalar_select %p191, %s16, 1
      %s193 = smul.addr %s192, 2
      %s194 = scalar_lea.vmem %s4, %s193
      %p195 = scmp.lt.s32.totalorder %s16, 1
      %s196 = scalar_select %p195, %s16, 1
      %s197 = smul.addr %s196, 32
      %s198 = smul.addr %s197, 8
      %s199 = scalar_lea.vmem %s0, %s198
      %p200 = scmp.lt.s32.totalorder %s16, 1
      %s201 = scalar_select %p200, %s16, 1
      %s202 = smul.addr %s201, 32
      %s203 = smul.addr %s202, 8
      %s204 = scalar_lea.vmem %s3, %s203
      %p205 = scmp.lt.s32.totalorder %s16, 1
      %s206 = scalar_select %p205, %s16, 1
      %s207 = smul.addr %s206, 2
      %s208 = scalar_lea.vmem %s4, %s207
      %v210 = vld [vmem:[%s199] sm:$0xff]
      %v211 = vld [vmem:[%s199 + $0x8] sm:$0xff]
      %v212 = vld [vmem:[%s199 + $0x10] sm:$0xff]
      %v213 = vld [vmem:[%s199 + $0x18] sm:$0xff]
      %v214 = vld [vmem:[%s199 + $0x20] sm:$0xff]
      %v215 = vld [vmem:[%s199 + $0x28] sm:$0xff]
      %v216 = vld [vmem:[%s199 + $0x30] sm:$0xff]
      %v217 = vld [vmem:[%s199 + $0x38] sm:$0xff]
      %v218 = vld [vmem:[%s199 + $0x40] sm:$0xff]
      %v219 = vld [vmem:[%s199 + $0x48] sm:$0xff]
      %v220 = vld [vmem:[%s199 + $0x50] sm:$0xff]
      %v221 = vld [vmem:[%s199 + $0x58] sm:$0xff]
      %v222 = vld [vmem:[%s199 + $0x60] sm:$0xff]
      %v223 = vld [vmem:[%s199 + $0x68] sm:$0xff]
      %v224 = vld [vmem:[%s199 + $0x70] sm:$0xff]
      %v225 = vld [vmem:[%s199 + $0x78] sm:$0xff]
      %v226 = vld [vmem:[%s199 + $0x80] sm:$0xff]
      %v227 = vld [vmem:[%s199 + $0x88] sm:$0xff]
      %v228 = vld [vmem:[%s199 + $0x90] sm:$0xff]
      %v229 = vld [vmem:[%s199 + $0x98] sm:$0xff]
      %v230 = vld [vmem:[%s199 + $0xa0] sm:$0xff]
      %v231 = vld [vmem:[%s199 + $0xa8] sm:$0xff]
      %v232 = vld [vmem:[%s199 + $0xb0] sm:$0xff]
      %v233 = vld [vmem:[%s199 + $0xb8] sm:$0xff]
      %v234 = vld [vmem:[%s199 + $0xc0] sm:$0xff]
      %v235 = vld [vmem:[%s199 + $0xc8] sm:$0xff]
      %v236 = vld [vmem:[%s199 + $0xd0] sm:$0xff]
      %v237 = vld [vmem:[%s199 + $0xd8] sm:$0xff]
      %v238 = vld [vmem:[%s199 + $0xe0] sm:$0xff]
      %v239 = vld [vmem:[%s199 + $0xe8] sm:$0xff]
      %v240 = vld [vmem:[%s199 + $0xf0] sm:$0xff]
      %v241 = vld [vmem:[%s199 + $0xf8] sm:$0xff]
      %242 = vxpose.xlu0.b32.start [1/16] %v210, 128
      %243 = vxpose.xlu0.b32.cont [2/16] %v212, 128
      %244 = vxpose.xlu0.b32.cont [3/16] %v214, 128
      %245 = vxpose.xlu0.b32.cont [4/16] %v216, 128
      %246 = vxpose.xlu0.b32.cont [5/16] %v218, 128
      %247 = vxpose.xlu0.b32.cont [6/16] %v220, 128
      %248 = vxpose.xlu0.b32.cont [7/16] %v222, 128
      %249 = vxpose.xlu0.b32.cont [8/16] %v224, 128
      %250 = vxpose.xlu0.b32.cont [9/16] %v226, 128
      %251 = vxpose.xlu0.b32.cont [10/16] %v228, 128
      %252 = vxpose.xlu0.b32.cont [11/16] %v230, 128
      %253 = vxpose.xlu0.b32.cont [12/16] %v232, 128
      %254 = vxpose.xlu0.b32.cont [13/16] %v234, 128
      %255 = vxpose.xlu0.b32.cont [14/16] %v236, 128
      %256 = vxpose.xlu0.b32.cont [15/16] %v238, 128
      %257 = vxpose.xlu0.b32.end [16/16] %v240, 128
      %v258 = vpop.trf.xlu0
      %v259 = vpop.trf.xlu0
      %v260 = vpop.trf.xlu0
      %v261 = vpop.trf.xlu0
      %v262 = vpop.trf.xlu0
      %v263 = vpop.trf.xlu0
      %v264 = vpop.trf.xlu0
      %v265 = vpop.trf.xlu0
      %v266 = vpop.trf.xlu0
      %v267 = vpop.trf.xlu0
      %v268 = vpop.trf.xlu0
      %v269 = vpop.trf.xlu0
      %v270 = vpop.trf.xlu0
      %v271 = vpop.trf.xlu0
      %v272 = vpop.trf.xlu0
      %v273 = vpop.trf.xlu0
      %274 = vxpose.xlu0.b32.start [1/16] %v211, 128
      %275 = vxpose.xlu0.b32.cont [2/16] %v213, 128
      %276 = vxpose.xlu0.b32.cont [3/16] %v215, 128
      %277 = vxpose.xlu0.b32.cont [4/16] %v217, 128
      %278 = vxpose.xlu0.b32.cont [5/16] %v219, 128
      %279 = vxpose.xlu0.b32.cont [6/16] %v221, 128
      %280 = vxpose.xlu0.b32.cont [7/16] %v223, 128
      %281 = vxpose.xlu0.b32.cont [8/16] %v225, 128
      %282 = vxpose.xlu0.b32.cont [9/16] %v227, 128
      %283 = vxpose.xlu0.b32.cont [10/16] %v229, 128
      %284 = vxpose.xlu0.b32.cont [11/16] %v231, 128
      %285 = vxpose.xlu0.b32.cont [12/16] %v233, 128
      %286 = vxpose.xlu0.b32.cont [13/16] %v235, 128
      %287 = vxpose.xlu0.b32.cont [14/16] %v237, 128
      %288 = vxpose.xlu0.b32.cont [15/16] %v239, 128
      %289 = vxpose.xlu0.b32.end [16/16] %v241, 128
      %v290 = vpop.trf.xlu0
      %v291 = vpop.trf.xlu0
      %v292 = vpop.trf.xlu0
      %v293 = vpop.trf.xlu0
      %v294 = vpop.trf.xlu0
      %v295 = vpop.trf.xlu0
      %v296 = vpop.trf.xlu0
      %v297 = vpop.trf.xlu0
      %v298 = vpop.trf.xlu0
      %v299 = vpop.trf.xlu0
      %v300 = vpop.trf.xlu0
      %v301 = vpop.trf.xlu0
      %v302 = vpop.trf.xlu0
      %v303 = vpop.trf.xlu0
      %v304 = vpop.trf.xlu0
      %v305 = vpop.trf.xlu0
      %v306 = vpack.c.bf16 %v259, %v258
      %v307 = vpack.c.bf16 %v261, %v260
      %v308 = vpack.c.bf16 %v263, %v262
      %v309 = vpack.c.bf16 %v265, %v264
      %v310 = vpack.c.bf16 %v267, %v266
      %v311 = vpack.c.bf16 %v269, %v268
      %v312 = vpack.c.bf16 %v271, %v270
      %v313 = vpack.c.bf16 %v273, %v272
      %v314 = vpack.c.bf16 %v291, %v290
      %v315 = vpack.c.bf16 %v293, %v292
      %v316 = vpack.c.bf16 %v295, %v294
      %v317 = vpack.c.bf16 %v297, %v296
      %v318 = vpack.c.bf16 %v299, %v298
      %v319 = vpack.c.bf16 %v301, %v300
      %v320 = vpack.c.bf16 %v303, %v302
      %v321 = vpack.c.bf16 %v305, %v304
      %v323 = vshrl.u32 %v307, 16
      %v326 = vshrl.u32 %v306, 16
      %v329 = vshrl.u32 %v308, 16
      %v332 = vshrl.u32 %v309, 16
      %v335 = vshrl.u32 %v310, 16
      %v338 = vshrl.u32 %v311, 16
      %v341 = vshrl.u32 %v312, 16
      %v344 = vshrl.u32 %v313, 16
      %v347 = vshrl.u32 %v314, 16
      %v350 = vshrl.u32 %v315, 16
      %v353 = vshrl.u32 %v316, 16
      %v356 = vshrl.u32 %v317, 16
      %v359 = vshrl.u32 %v318, 16
      %v362 = vshrl.u32 %v319, 16
      %v365 = vshrl.u32 %v320, 16
      %v368 = vshrl.u32 %v321, 16
      %v386 = vrot.slane %v323, 7
      %v387 = vshll.u32 %v307, 16
      %v389 = vor.u32 %v386, %v387
      %v390 = vrot.slane %v326, 7
      %v391 = vshll.u32 %v306, 16
      %v393 = vor.u32 %v390, %v391
      %v394 = vrot.slane %v329, 7
      %v395 = vshll.u32 %v308, 16
      %v397 = vor.u32 %v394, %v395
      %v398 = vrot.slane %v332, 7
      %v399 = vshll.u32 %v309, 16
      %v401 = vor.u32 %v398, %v399
      %v402 = vrot.slane %v335, 7
      %v403 = vshll.u32 %v310, 16
      %v405 = vor.u32 %v402, %v403
      %v406 = vrot.slane %v338, 7
      %v407 = vshll.u32 %v311, 16
      %v409 = vor.u32 %v406, %v407
      %v410 = vrot.slane %v341, 7
      %v411 = vshll.u32 %v312, 16
      %v413 = vor.u32 %v410, %v411
      %v414 = vrot.slane %v344, 7
      %v415 = vshll.u32 %v313, 16
      %v417 = vor.u32 %v414, %v415
      %v418 = vrot.slane %v347, 7
      %v419 = vshll.u32 %v314, 16
      %v421 = vor.u32 %v418, %v419
      %v422 = vrot.slane %v350, 7
      %v423 = vshll.u32 %v315, 16
      %v425 = vor.u32 %v422, %v423
      %v426 = vrot.slane %v353, 7
      %v427 = vshll.u32 %v316, 16
      %v429 = vor.u32 %v426, %v427
      %v430 = vrot.slane %v356, 7
      %v431 = vshll.u32 %v317, 16
      %v433 = vor.u32 %v430, %v431
      %v434 = vrot.slane %v359, 7
      %v435 = vshll.u32 %v318, 16
      %v437 = vor.u32 %v434, %v435
      %v438 = vrot.slane %v362, 7
      %v439 = vshll.u32 %v319, 16
      %v441 = vor.u32 %v438, %v439
      %v442 = vrot.slane %v365, 7
      %v443 = vshll.u32 %v320, 16
      %v445 = vor.u32 %v442, %v443
      %v446 = vrot.slane %v368, 7
      %v447 = vshll.u32 %v321, 16
      %v449 = vor.u32 %v446, %v447
      %vm466 = vcmask 1040384
      %vm467 = vsmask.f32 256
      %vm468 = vmand %vm466, %vm467
      %v469 = vsel %vm468, %v323, %v389
      %v470 = vsel %vm468, %v326, %v393
      %v471 = vsel %vm468, %v329, %v397
      %v472 = vsel %vm468, %v332, %v401
      %v473 = vsel %vm468, %v335, %v405
      %v474 = vsel %vm468, %v338, %v409
      %v475 = vsel %vm468, %v341, %v413
      %v476 = vsel %vm468, %v344, %v417
      %v477 = vsel %vm468, %v347, %v421
      %v478 = vsel %vm468, %v350, %v425
      %v479 = vsel %vm468, %v353, %v429
      %v480 = vsel %vm468, %v356, %v433
      %v481 = vsel %vm468, %v359, %v437
      %v482 = vsel %vm468, %v362, %v441
      %v483 = vsel %vm468, %v365, %v445
      %v484 = vsel %vm468, %v368, %v449
      %v485 = vrot.slane %v387, 1
      %v486 = vor.u32 %v323, %v485
      %v487 = vrot.slane %v391, 1
      %v488 = vor.u32 %v326, %v487
      %v489 = vrot.slane %v395, 1
      %v490 = vor.u32 %v329, %v489
      %v491 = vrot.slane %v399, 1
      %v492 = vor.u32 %v332, %v491
      %v493 = vrot.slane %v403, 1
      %v494 = vor.u32 %v335, %v493
      %v495 = vrot.slane %v407, 1
      %v496 = vor.u32 %v338, %v495
      %v497 = vrot.slane %v411, 1
      %v498 = vor.u32 %v341, %v497
      %v499 = vrot.slane %v415, 1
      %v500 = vor.u32 %v344, %v499
      %v501 = vrot.slane %v419, 1
      %v502 = vor.u32 %v347, %v501
      %v503 = vrot.slane %v423, 1
      %v504 = vor.u32 %v350, %v503
      %v505 = vrot.slane %v427, 1
      %v506 = vor.u32 %v353, %v505
      %v507 = vrot.slane %v431, 1
      %v508 = vor.u32 %v356, %v507
      %v509 = vrot.slane %v435, 1
      %v510 = vor.u32 %v359, %v509
      %v511 = vrot.slane %v439, 1
      %v512 = vor.u32 %v362, %v511
      %v513 = vrot.slane %v443, 1
      %v514 = vor.u32 %v365, %v513
      %v515 = vrot.slane %v447, 1
      %v516 = vor.u32 %v368, %v515
      %vm549 = vcmask 1047552
      %vm550 = vsmask.f32 7424
      %vm551 = vmand %vm549, %vm550
      %v552 = vsel %vm551, %v486, %v387
      %v553 = vsel %vm551, %v488, %v391
      %v554 = vsel %vm551, %v490, %v395
      %v555 = vsel %vm551, %v492, %v399
      %v556 = vsel %vm551, %v494, %v403
      %v557 = vsel %vm551, %v496, %v407
      %v558 = vsel %vm551, %v498, %v411
      %v559 = vsel %vm551, %v500, %v415
      %v560 = vsel %vm551, %v502, %v419
      %v561 = vsel %vm551, %v504, %v423
      %v562 = vsel %vm551, %v506, %v427
      %v563 = vsel %vm551, %v508, %v431
      %v564 = vsel %vm551, %v510, %v435
      %v565 = vsel %vm551, %v512, %v439
      %v566 = vsel %vm551, %v514, %v443
      %v567 = vsel %vm551, %v516, %v447
      %v568 = vld [vmem:[%s1] sm:$0xf]
      %v569 = vld [vmem:[%s1 + $0x4] sm:$0xf]
      %v570 = vld [vmem:[%s1 + $0x8] sm:$0xf]
      %v571 = vld [vmem:[%s1 + $0xc] sm:$0xf]
      %v572 = vld [vmem:[%s1 + $0x10] sm:$0xf]
      %v573 = vld [vmem:[%s1 + $0x14] sm:$0xf]
      %v574 = vld [vmem:[%s1 + $0x18] sm:$0xf]
      %v575 = vld [vmem:[%s1 + $0x1c] sm:$0xf]
      %v576 = vld [vmem:[%s1 + $0x20] sm:$0xf]
      %v577 = vld [vmem:[%s1 + $0x24] sm:$0xf]
      %v578 = vld [vmem:[%s1 + $0x28] sm:$0xf]
      %v579 = vld [vmem:[%s1 + $0x2c] sm:$0xf]
      %v580 = vld [vmem:[%s1 + $0x30] sm:$0xf]
      %v581 = vld [vmem:[%s1 + $0x34] sm:$0xf]
      %v582 = vld [vmem:[%s1 + $0x38] sm:$0xf]
      %v583 = vld [vmem:[%s1 + $0x3c] sm:$0xf]
      %v584 = vld [vmem:[%s1 + $0x40] sm:$0xf]
      %v585 = vld [vmem:[%s1 + $0x44] sm:$0xf]
      %v586 = vld [vmem:[%s1 + $0x48] sm:$0xf]
      %v587 = vld [vmem:[%s1 + $0x4c] sm:$0xf]
      %v588 = vld [vmem:[%s1 + $0x50] sm:$0xf]
      %v589 = vld [vmem:[%s1 + $0x54] sm:$0xf]
      %v590 = vld [vmem:[%s1 + $0x58] sm:$0xf]
      %v591 = vld [vmem:[%s1 + $0x5c] sm:$0xf]
      %v592 = vld [vmem:[%s1 + $0x60] sm:$0xf]
      %v593 = vld [vmem:[%s1 + $0x64] sm:$0xf]
      %v594 = vld [vmem:[%s1 + $0x68] sm:$0xf]
      %v595 = vld [vmem:[%s1 + $0x6c] sm:$0xf]
      %v596 = vld [vmem:[%s1 + $0x70] sm:$0xf]
      %v597 = vld [vmem:[%s1 + $0x74] sm:$0xf]
      %v598 = vld [vmem:[%s1 + $0x78] sm:$0xf]
      %v599 = vld [vmem:[%s1 + $0x7c] sm:$0xf]
      %v600 = vld [vmem:[%s1 + $0x80] sm:$0xf]
      %v601 = vld [vmem:[%s1 + $0x84] sm:$0xf]
      %v602 = vld [vmem:[%s1 + $0x88] sm:$0xf]
      %v603 = vld [vmem:[%s1 + $0x8c] sm:$0xf]
      %v604 = vld [vmem:[%s1 + $0x90] sm:$0xf]
      %v605 = vld [vmem:[%s1 + $0x94] sm:$0xf]
      %v606 = vld [vmem:[%s1 + $0x98] sm:$0xf]
      %v607 = vld [vmem:[%s1 + $0x9c] sm:$0xf]
      %v608 = vld [vmem:[%s1 + $0xa0] sm:$0xf]
      %v609 = vld [vmem:[%s1 + $0xa4] sm:$0xf]
      %v610 = vld [vmem:[%s1 + $0xa8] sm:$0xf]
      %v611 = vld [vmem:[%s1 + $0xac] sm:$0xf]
      %v612 = vld [vmem:[%s1 + $0xb0] sm:$0xf]
      %v613 = vld [vmem:[%s1 + $0xb4] sm:$0xf]
      %v614 = vld [vmem:[%s1 + $0xb8] sm:$0xf]
      %v615 = vld [vmem:[%s1 + $0xbc] sm:$0xf]
      %s616 = scalar_lea.vmem %s1, 192
      %v617 = vld [vmem:[%s616] sm:$0xf]
      %v618 = vld [vmem:[%s616 + $0x4] sm:$0xf]
      %v619 = vld [vmem:[%s616 + $0x8] sm:$0xf]
      %v620 = vld [vmem:[%s616 + $0xc] sm:$0xf]
      %v621 = vld [vmem:[%s616 + $0x10] sm:$0xf]
      %v622 = vld [vmem:[%s616 + $0x14] sm:$0xf]
      %v623 = vld [vmem:[%s616 + $0x18] sm:$0xf]
      %v624 = vld [vmem:[%s616 + $0x1c] sm:$0xf]
      %v625 = vld [vmem:[%s616 + $0x20] sm:$0xf]
      %v626 = vld [vmem:[%s616 + $0x24] sm:$0xf]
      %v627 = vld [vmem:[%s616 + $0x28] sm:$0xf]
      %v628 = vld [vmem:[%s616 + $0x2c] sm:$0xf]
      %v629 = vld [vmem:[%s616 + $0x30] sm:$0xf]
      %v630 = vld [vmem:[%s616 + $0x34] sm:$0xf]
      %v631 = vld [vmem:[%s616 + $0x38] sm:$0xf]
      %v632 = vld [vmem:[%s616 + $0x3c] sm:$0xf]
      %v633 = vld [vmem:[%s616 + $0x40] sm:$0xf]
      %v634 = vld [vmem:[%s616 + $0x44] sm:$0xf]
      %v635 = vld [vmem:[%s616 + $0x48] sm:$0xf]
      %v636 = vld [vmem:[%s616 + $0x4c] sm:$0xf]
      %v637 = vld [vmem:[%s616 + $0x50] sm:$0xf]
      %v638 = vld [vmem:[%s616 + $0x54] sm:$0xf]
      %v639 = vld [vmem:[%s616 + $0x58] sm:$0xf]
      %v640 = vld [vmem:[%s616 + $0x5c] sm:$0xf]
      %v641 = vld [vmem:[%s616 + $0x60] sm:$0xf]
      %v642 = vld [vmem:[%s616 + $0x64] sm:$0xf]
      %v643 = vld [vmem:[%s616 + $0x68] sm:$0xf]
      %v644 = vld [vmem:[%s616 + $0x6c] sm:$0xf]
      %v645 = vld [vmem:[%s616 + $0x70] sm:$0xf]
      %v646 = vld [vmem:[%s616 + $0x74] sm:$0xf]
      %v647 = vld [vmem:[%s616 + $0x78] sm:$0xf]
      %v648 = vld [vmem:[%s616 + $0x7c] sm:$0xf]
      %v649 = vld [vmem:[%s616 + $0x80] sm:$0xf]
      %v650 = vld [vmem:[%s616 + $0x84] sm:$0xf]
      %v651 = vld [vmem:[%s616 + $0x88] sm:$0xf]
      %v652 = vld [vmem:[%s616 + $0x8c] sm:$0xf]
      %v653 = vld [vmem:[%s616 + $0x90] sm:$0xf]
      %v654 = vld [vmem:[%s616 + $0x94] sm:$0xf]
      %v655 = vld [vmem:[%s616 + $0x98] sm:$0xf]
      %v656 = vld [vmem:[%s616 + $0x9c] sm:$0xf]
      %v657 = vld [vmem:[%s616 + $0xa0] sm:$0xf]
      %v658 = vld [vmem:[%s616 + $0xa4] sm:$0xf]
      %v659 = vld [vmem:[%s616 + $0xa8] sm:$0xf]
      %v660 = vld [vmem:[%s616 + $0xac] sm:$0xf]
      %v661 = vld [vmem:[%s616 + $0xb0] sm:$0xf]
      %v662 = vld [vmem:[%s616 + $0xb4] sm:$0xf]
      %v663 = vld [vmem:[%s616 + $0xb8] sm:$0xf]
      %v664 = vld [vmem:[%s616 + $0xbc] sm:$0xf]
      %v713 = vunpack.c.l.b16 %v617
      %v714 = vunpack.c.l.b16 %v618
      %v715 = vunpack.c.l.b16 %v619
      %v716 = vunpack.c.l.b16 %v620
      %v717 = vunpack.c.l.b16 %v621
      %v718 = vunpack.c.l.b16 %v622
      %v719 = vunpack.c.l.b16 %v623
      %v720 = vunpack.c.l.b16 %v624
      %v721 = vunpack.c.l.b16 %v625
      %v722 = vunpack.c.l.b16 %v626
      %v723 = vunpack.c.l.b16 %v627
      %v724 = vunpack.c.l.b16 %v628
      %v725 = vunpack.c.l.b16 %v629
      %v726 = vunpack.c.l.b16 %v630
      %v727 = vunpack.c.l.b16 %v631
      %v728 = vunpack.c.l.b16 %v632
      %v729 = vunpack.c.l.b16 %v633
      %v730 = vunpack.c.l.b16 %v634
      %v731 = vunpack.c.l.b16 %v635
      %v732 = vunpack.c.l.b16 %v636
      %v733 = vunpack.c.l.b16 %v637
      %v734 = vunpack.c.l.b16 %v638
      %v735 = vunpack.c.l.b16 %v639
      %v736 = vunpack.c.l.b16 %v640
      %v737 = vunpack.c.l.b16 %v641
      %v738 = vunpack.c.l.b16 %v642
      %v739 = vunpack.c.l.b16 %v643
      %v740 = vunpack.c.l.b16 %v644
      %v741 = vunpack.c.l.b16 %v645
      %v742 = vunpack.c.l.b16 %v646
      %v743 = vunpack.c.l.b16 %v647
      %v744 = vunpack.c.l.b16 %v648
      %v745 = vunpack.c.l.b16 %v649
      %v746 = vunpack.c.l.b16 %v650
      %v747 = vunpack.c.l.b16 %v651
      %v748 = vunpack.c.l.b16 %v652
      %v749 = vunpack.c.l.b16 %v653
      %v750 = vunpack.c.l.b16 %v654
      %v751 = vunpack.c.l.b16 %v655
      %v752 = vunpack.c.l.b16 %v656
      %v753 = vunpack.c.l.b16 %v657
      %v754 = vunpack.c.l.b16 %v658
      %v755 = vunpack.c.l.b16 %v659
      %v756 = vunpack.c.l.b16 %v660
      %v757 = vunpack.c.l.b16 %v661
      %v758 = vunpack.c.l.b16 %v662
      %v759 = vunpack.c.l.b16 %v663
      %v760 = vunpack.c.l.b16 %v664
      %v761 = vpack.c.b16 %v714, %v713
      %v762 = vpack.c.b16 %v716, %v715
      %v763 = vpack.c.b16 %v718, %v717
      %v764 = vpack.c.b16 %v720, %v719
      %v765 = vpack.c.b16 %v722, %v721
      %v766 = vpack.c.b16 %v724, %v723
      %v767 = vpack.c.b16 %v726, %v725
      %v768 = vpack.c.b16 %v728, %v727
      %v769 = vpack.c.b16 %v730, %v729
      %v770 = vpack.c.b16 %v732, %v731
      %v771 = vpack.c.b16 %v734, %v733
      %v772 = vpack.c.b16 %v736, %v735
      %v773 = vpack.c.b16 %v738, %v737
      %v774 = vpack.c.b16 %v740, %v739
      %v775 = vpack.c.b16 %v742, %v741
      %v776 = vpack.c.b16 %v744, %v743
      %v777 = vpack.c.b16 %v746, %v745
      %v778 = vpack.c.b16 %v748, %v747
      %v779 = vpack.c.b16 %v750, %v749
      %v780 = vpack.c.b16 %v752, %v751
      %v781 = vpack.c.b16 %v754, %v753
      %v782 = vpack.c.b16 %v756, %v755
      %v783 = vpack.c.b16 %v758, %v757
      %v784 = vpack.c.b16 %v760, %v759
      %809 = vmatprep.subr.bf16.mxu0 0
      %810 = vmatpush1.bf16.msra.mxu0 %v761
      %811 = vmatprep.subr.bf16.mxu0 0
      %812 = vmatpush1.bf16.msra.mxu0 %v762
      %813 = vmatprep.subr.bf16.mxu0 0
      %814 = vmatpush1.bf16.msra.mxu0 %v763
      %815 = vmatprep.subr.bf16.mxu0 0
      %816 = vmatpush1.bf16.msra.mxu0 %v764
      %817 = vmatprep.subr.bf16.mxu0 0
      %818 = vmatpush1.bf16.msra.mxu0 %v765
      %819 = vmatprep.subr.bf16.mxu0 0
      %820 = vmatpush1.bf16.msra.mxu0 %v766
      %821 = vmatprep.subr.bf16.mxu0 0
      %822 = vmatpush1.bf16.msra.mxu0 %v767
      %823 = vmatprep.subr.bf16.mxu0 0
      %824 = vmatpush1.bf16.msra.mxu0 %v768
      %825 = vmatprep.subr.bf16.mxu0 0
      %826 = vmatpush1.bf16.msra.mxu0 %v769
      %827 = vmatprep.subr.bf16.mxu0 0
      %828 = vmatpush1.bf16.msra.mxu0 %v770
      %829 = vmatprep.subr.bf16.mxu0 0
      %830 = vmatpush1.bf16.msra.mxu0 %v771
      %831 = vmatprep.subr.bf16.mxu0 0
      %832 = vmatpush1.bf16.msra.mxu0 %v772
      %833 = vmatprep.subr.bf16.mxu0 0
      %834 = vmatpush1.bf16.msra.mxu0 %v773
      %835 = vmatprep.subr.bf16.mxu0 0
      %836 = vmatpush1.bf16.msra.mxu0 %v774
      %837 = vmatprep.subr.bf16.mxu0 0
      %838 = vmatpush1.bf16.msra.mxu0 %v775
      %839 = vmatprep.subr.bf16.mxu0 0
      %840 = vmatpush1.bf16.msra.mxu0 %v776
      %841 = vmatprep.mubr.bf16.mxu0 %v306
      %842 = vmatmul.mubr.bf16.gmra.mrb[0].mxu0 %v470
      %v843 = vpop.f32.mrb[0].mxu0
      %v844 = vadd.f32 0.0, %v843
      %v845 = vpop.f32.mrb[0].mxu0
      %v846 = vpop.f32.mrb[0].mxu0
      %v847 = vadd.f32 0.0, %v846
      %v848 = vpop.f32.mrb[0].mxu0
      %849 = vmatprep.mubr.bf16.mxu0 %v307
      %850 = vmatmul.mubr.bf16.gmra.mrb[0].mxu0 %v469
      %v851 = vpop.f32.mrb[0].mxu0
      %v852 = vadd.f32 0.0, %v851
      %v853 = vpop.f32.mrb[0].mxu0
      %v854 = vpop.f32.mrb[0].mxu0
      %v855 = vadd.f32 0.0, %v854
      %v856 = vpop.f32.mrb[0].mxu0
      %857 = vmatprep.mubr.bf16.mxu0 %v308
      %858 = vmatmul.mubr.bf16.gmra.mrb[0].mxu0 %v471
      %v859 = vpop.f32.mrb[0].mxu0
      %v860 = vadd.f32 0.0, %v859
      %v861 = vpop.f32.mrb[0].mxu0
      %v862 = vpop.f32.mrb[0].mxu0
      %v863 = vadd.f32 0.0, %v862
      %v864 = vpop.f32.mrb[0].mxu0
      %865 = vmatprep.mubr.bf16.mxu0 %v309
      %866 = vmatmul.mubr.bf16.gmra.mrb[0].mxu0 %v472
      %v867 = vpop.f32.mrb[0].mxu0
      %v868 = vadd.f32 0.0, %v867
      %v869 = vpop.f32.mrb[0].mxu0
      %v870 = vpop.f32.mrb[0].mxu0
      %v871 = vadd.f32 0.0, %v870
      %v872 = vpop.f32.mrb[0].mxu0
      %873 = vmatprep.mubr.bf16.mxu0 %v310
      %874 = vmatmul.mubr.bf16.gmra.mrb[0].mxu0 %v473
      %v875 = vpop.f32.mrb[0].mxu0
      %v876 = vadd.f32 0.0, %v875
      %v877 = vpop.f32.mrb[0].mxu0
      %v878 = vpop.f32.mrb[0].mxu0
      %v879 = vadd.f32 0.0, %v878
      %v880 = vpop.f32.mrb[0].mxu0
      %881 = vmatprep.mubr.bf16.mxu0 %v311
      %882 = vmatmul.mubr.bf16.gmra.mrb[0].mxu0 %v474
      %v883 = vpop.f32.mrb[0].mxu0
      %v884 = vadd.f32 0.0, %v883
      %v885 = vpop.f32.mrb[0].mxu0
      %v886 = vpop.f32.mrb[0].mxu0
      %v887 = vadd.f32 0.0, %v886
      %v888 = vpop.f32.mrb[0].mxu0
      %889 = vmatprep.mubr.bf16.mxu0 %v312
      %890 = vmatmul.mubr.bf16.gmra.mrb[0].mxu0 %v475
      %v891 = vpop.f32.mrb[0].mxu0
      %v892 = vadd.f32 0.0, %v891
      %v893 = vpop.f32.mrb[0].mxu0
      %v894 = vpop.f32.mrb[0].mxu0
      %v895 = vadd.f32 0.0, %v894
      %v896 = vpop.f32.mrb[0].mxu0
      %897 = vmatprep.mubr.bf16.mxu0 %v313
      %898 = vmatmul.mubr.bf16.gmra.mrb[0].mxu0 %v476
      %v899 = vpop.f32.mrb[0].mxu0
      %v900 = vadd.f32 0.0, %v899
      %v901 = vpop.f32.mrb[0].mxu0
      %v902 = vpop.f32.mrb[0].mxu0
      %v903 = vadd.f32 0.0, %v902
      %v904 = vpop.f32.mrb[0].mxu0
      %905 = vmatprep.mubr.bf16.mxu0 %v314
      %906 = vmatmul.mubr.bf16.gmra.mrb[0].mxu0 %v477
      %v907 = vpop.f32.mrb[0].mxu0
      %v908 = vadd.f32 0.0, %v907
      %v909 = vpop.f32.mrb[0].mxu0
      %v910 = vpop.f32.mrb[0].mxu0
      %v911 = vadd.f32 0.0, %v910
      %v912 = vpop.f32.mrb[0].mxu0
      %913 = vmatprep.mubr.bf16.mxu0 %v315
      %914 = vmatmul.mubr.bf16.gmra.mrb[0].mxu0 %v478
      %v915 = vpop.f32.mrb[0].mxu0
      %v916 = vadd.f32 0.0, %v915
      %v917 = vpop.f32.mrb[0].mxu0
      %v918 = vpop.f32.mrb[0].mxu0
      %v919 = vadd.f32 0.0, %v918
      %v920 = vpop.f32.mrb[0].mxu0
      %921 = vmatprep.mubr.bf16.mxu0 %v316
      %922 = vmatmul.mubr.bf16.gmra.mrb[0].mxu0 %v479
      %v923 = vpop.f32.mrb[0].mxu0
      %v924 = vadd.f32 0.0, %v923
      %v925 = vpop.f32.mrb[0].mxu0
      %v926 = vpop.f32.mrb[0].mxu0
      %v927 = vadd.f32 0.0, %v926
      %v928 = vpop.f32.mrb[0].mxu0
      %929 = vmatprep.mubr.bf16.mxu0 %v317
      %930 = vmatmul.mubr.bf16.gmra.mrb[0].mxu0 %v480
      %v931 = vpop.f32.mrb[0].mxu0
      %v932 = vadd.f32 0.0, %v931
      %v933 = vpop.f32.mrb[0].mxu0
      %v934 = vpop.f32.mrb[0].mxu0
      %v935 = vadd.f32 0.0, %v934
      %v936 = vpop.f32.mrb[0].mxu0
      %937 = vmatprep.mubr.bf16.mxu0 %v318
      %938 = vmatmul.mubr.bf16.gmra.mrb[0].mxu0 %v481
      %v939 = vpop.f32.mrb[0].mxu0
      %v940 = vadd.f32 0.0, %v939
      %v941 = vpop.f32.mrb[0].mxu0
      %v942 = vpop.f32.mrb[0].mxu0
      %v943 = vadd.f32 0.0, %v942
      %v944 = vpop.f32.mrb[0].mxu0
      %945 = vmatprep.mubr.bf16.mxu0 %v319
      %946 = vmatmul.mubr.bf16.gmra.mrb[0].mxu0 %v482
      %v947 = vpop.f32.mrb[0].mxu0
      %v948 = vadd.f32 0.0, %v947
      %v949 = vpop.f32.mrb[0].mxu0
      %v950 = vpop.f32.mrb[0].mxu0
      %v951 = vadd.f32 0.0, %v950
      %v952 = vpop.f32.mrb[0].mxu0
      %953 = vmatprep.mubr.bf16.mxu0 %v320
      %954 = vmatmul.mubr.bf16.gmra.mrb[0].mxu0 %v483
      %v955 = vpop.f32.mrb[0].mxu0
      %v956 = vadd.f32 0.0, %v955
      %v957 = vpop.f32.mrb[0].mxu0
      %v958 = vpop.f32.mrb[0].mxu0
      %v959 = vadd.f32 0.0, %v958
      %v960 = vpop.f32.mrb[0].mxu0
      %961 = vmatprep.mubr.bf16.mxu0 %v321
      %962 = vmatmul.mubr.bf16.gmra.mrb[0].mxu0 %v484
      %v963 = vpop.f32.mrb[0].mxu0
      %v964 = vadd.f32 0.0, %v963
      %v965 = vpop.f32.mrb[0].mxu0
      %v966 = vpop.f32.mrb[0].mxu0
      %v967 = vadd.f32 0.0, %v966
      %v968 = vpop.f32.mrb[0].mxu0
      %969 = vdwg.mxu0
      %970 = vmatprep.subr.bf16.mxu0 0
      %971 = vmatpush1.bf16.msra.mxu0 %v777
      %972 = vmatprep.subr.bf16.mxu0 0
      %973 = vmatpush1.bf16.msra.mxu0 %v778
      %974 = vmatprep.subr.bf16.mxu0 0
      %975 = vmatpush1.bf16.msra.mxu0 %v779
      %976 = vmatprep.subr.bf16.mxu0 0
      %977 = vmatpush1.bf16.msra.mxu0 %v780
      %978 = vmatprep.subr.bf16.mxu0 0
      %979 = vmatpush1.bf16.msra.mxu0 %v781
      %980 = vmatprep.subr.bf16.mxu0 0
      %981 = vmatpush1.bf16.msra.mxu0 %v782
      %982 = vmatprep.subr.bf16.mxu0 0
      %983 = vmatpush1.bf16.msra.mxu0 %v783
      %984 = vmatprep.subr.bf16.mxu0 0
      %985 = vmatpush1.bf16.msra.mxu0 %v784
      %986 = vmatprep.subr.bf16.mxu0 0
      %987 = vmatpush1.bf16.msra.mxu0 0
      %988 = vmatprep.subr.bf16.mxu0 0
      %989 = vmatpush1.bf16.msra.mxu0 0
      %990 = vmatprep.subr.bf16.mxu0 0
      %991 = vmatpush1.bf16.msra.mxu0 0
      %992 = vmatprep.subr.bf16.mxu0 0
      %993 = vmatpush1.bf16.msra.mxu0 0
      %994 = vmatprep.subr.bf16.mxu0 0
      %995 = vmatpush1.bf16.msra.mxu0 0
      %996 = vmatprep.subr.bf16.mxu0 0
      %997 = vmatpush1.bf16.msra.mxu0 0
      %998 = vmatprep.subr.bf16.mxu0 0
      %999 = vmatpush1.bf16.msra.mxu0 0
      %1000 = vmatprep.subr.bf16.mxu0 0
      %1001 = vmatpush1.bf16.msra.mxu0 0
      %1002 = vmatprep.mubr.bf16.mxu0 0
      %1003 = vmatmul.mubr.bf16.gmra.mrb[0].mxu0 %v553
      %v1004 = vpop.f32.mrb[0].mxu0
      %v1005 = vadd.f32 %v844, %v1004
      %v1006 = vpop.f32.mrb[0].mxu0
      %v1007 = vpop.f32.mrb[0].mxu0
      %v1008 = vadd.f32 %v847, %v1007
      %v1009 = vpop.f32.mrb[0].mxu0
      %1010 = vmatprep.mubr.bf16.mxu0 0
      %1011 = vmatmul.mubr.bf16.gmra.mrb[0].mxu0 %v552
      %v1012 = vpop.f32.mrb[0].mxu0
      %v1013 = vadd.f32 %v852, %v1012
      %v1014 = vpop.f32.mrb[0].mxu0
      %v1015 = vpop.f32.mrb[0].mxu0
      %v1016 = vadd.f32 %v855, %v1015
      %v1017 = vpop.f32.mrb[0].mxu0
      %1018 = vmatprep.mubr.bf16.mxu0 0
      %1019 = vmatmul.mubr.bf16.gmra.mrb[0].mxu0 %v554
      %v1020 = vpop.f32.mrb[0].mxu0
      %v1021 = vadd.f32 %v860, %v1020
      %v1022 = vpop.f32.mrb[0].mxu0
      %v1023 = vpop.f32.mrb[0].mxu0
      %v1024 = vadd.f32 %v863, %v1023
      %v1025 = vpop.f32.mrb[0].mxu0
      %1026 = vmatprep.mubr.bf16.mxu0 0
      %1027 = vmatmul.mubr.bf16.gmra.mrb[0].mxu0 %v555
      %v1028 = vpop.f32.mrb[0].mxu0
      %v1029 = vadd.f32 %v868, %v1028
      %v1030 = vpop.f32.mrb[0].mxu0
      %v1031 = vpop.f32.mrb[0].mxu0
      %v1032 = vadd.f32 %v871, %v1031
      %v1033 = vpop.f32.mrb[0].mxu0
      %1034 = vmatprep.mubr.bf16.mxu0 0
      %1035 = vmatmul.mubr.bf16.gmra.mrb[0].mxu0 %v556
      %v1036 = vpop.f32.mrb[0].mxu0
      %v1037 = vadd.f32 %v876, %v1036
      %v1038 = vpop.f32.mrb[0].mxu0
      %v1039 = vpop.f32.mrb[0].mxu0
      %v1040 = vadd.f32 %v879, %v1039
      %v1041 = vpop.f32.mrb[0].mxu0
      %1042 = vmatprep.mubr.bf16.mxu0 0
      %1043 = vmatmul.mubr.bf16.gmra.mrb[0].mxu0 %v557
      %v1044 = vpop.f32.mrb[0].mxu0
      %v1045 = vadd.f32 %v884, %v1044
      %v1046 = vpop.f32.mrb[0].mxu0
      %v1047 = vpop.f32.mrb[0].mxu0
      %v1048 = vadd.f32 %v887, %v1047
      %v1049 = vpop.f32.mrb[0].mxu0
      %1050 = vmatprep.mubr.bf16.mxu0 0
      %1051 = vmatmul.mubr.bf16.gmra.mrb[0].mxu0 %v558
      %v1052 = vpop.f32.mrb[0].mxu0
      %v1053 = vadd.f32 %v892, %v1052
      %v1054 = vpop.f32.mrb[0].mxu0
      %v1055 = vpop.f32.mrb[0].mxu0
      %v1056 = vadd.f32 %v895, %v1055
      %v1057 = vpop.f32.mrb[0].mxu0
      %1058 = vmatprep.mubr.bf16.mxu0 0
      %1059 = vmatmul.mubr.bf16.gmra.mrb[0].mxu0 %v559
      %v1060 = vpop.f32.mrb[0].mxu0
      %v1061 = vadd.f32 %v900, %v1060
      %v1062 = vpop.f32.mrb[0].mxu0
      %v1063 = vpop.f32.mrb[0].mxu0
      %v1064 = vadd.f32 %v903, %v1063
      %v1065 = vpop.f32.mrb[0].mxu0
      %1066 = vmatprep.mubr.bf16.mxu0 0
      %1067 = vmatmul.mubr.bf16.gmra.mrb[0].mxu0 %v560
      %v1068 = vpop.f32.mrb[0].mxu0
      %v1069 = vadd.f32 %v908, %v1068
      %v1070 = vpop.f32.mrb[0].mxu0
      %v1071 = vpop.f32.mrb[0].mxu0
      %v1072 = vadd.f32 %v911, %v1071
      %v1073 = vpop.f32.mrb[0].mxu0
      %1074 = vmatprep.mubr.bf16.mxu0 0
      %1075 = vmatmul.mubr.bf16.gmra.mrb[0].mxu0 %v561
      %v1076 = vpop.f32.mrb[0].mxu0
      %v1077 = vadd.f32 %v916, %v1076
      %v1078 = vpop.f32.mrb[0].mxu0
      %v1079 = vpop.f32.mrb[0].mxu0
      %v1080 = vadd.f32 %v919, %v1079
      %v1081 = vpop.f32.mrb[0].mxu0
      %1082 = vmatprep.mubr.bf16.mxu0 0
      %1083 = vmatmul.mubr.bf16.gmra.mrb[0].mxu0 %v562
      %v1084 = vpop.f32.mrb[0].mxu0
      %v1085 = vadd.f32 %v924, %v1084
      %v1086 = vpop.f32.mrb[0].mxu0
      %v1087 = vpop.f32.mrb[0].mxu0
      %v1088 = vadd.f32 %v927, %v1087
      %v1089 = vpop.f32.mrb[0].mxu0
      %1090 = vmatprep.mubr.bf16.mxu0 0
      %1091 = vmatmul.mubr.bf16.gmra.mrb[0].mxu0 %v563
      %v1092 = vpop.f32.mrb[0].mxu0
      %v1093 = vadd.f32 %v932, %v1092
      %v1094 = vpop.f32.mrb[0].mxu0
      %v1095 = vpop.f32.mrb[0].mxu0
      %v1096 = vadd.f32 %v935, %v1095
      %v1097 = vpop.f32.mrb[0].mxu0
      %1098 = vmatprep.mubr.bf16.mxu0 0
      %1099 = vmatmul.mubr.bf16.gmra.mrb[0].mxu0 %v564
      %v1100 = vpop.f32.mrb[0].mxu0
      %v1101 = vadd.f32 %v940, %v1100
      %v1102 = vpop.f32.mrb[0].mxu0
      %v1103 = vpop.f32.mrb[0].mxu0
      %v1104 = vadd.f32 %v943, %v1103
      %v1105 = vpop.f32.mrb[0].mxu0
      %1106 = vmatprep.mubr.bf16.mxu0 0
      %1107 = vmatmul.mubr.bf16.gmra.mrb[0].mxu0 %v565
      %v1108 = vpop.f32.mrb[0].mxu0
      %v1109 = vadd.f32 %v948, %v1108
      %v1110 = vpop.f32.mrb[0].mxu0
      %v1111 = vpop.f32.mrb[0].mxu0
      %v1112 = vadd.f32 %v951, %v1111
      %v1113 = vpop.f32.mrb[0].mxu0
      %1114 = vmatprep.mubr.bf16.mxu0 0
      %1115 = vmatmul.mubr.bf16.gmra.mrb[0].mxu0 %v566
      %v1116 = vpop.f32.mrb[0].mxu0
      %v1117 = vadd.f32 %v956, %v1116
      %v1118 = vpop.f32.mrb[0].mxu0
      %v1119 = vpop.f32.mrb[0].mxu0
      %v1120 = vadd.f32 %v959, %v1119
      %v1121 = vpop.f32.mrb[0].mxu0
      %1122 = vmatprep.mubr.bf16.mxu0 0
      %1123 = vmatmul.mubr.bf16.gmra.mrb[0].mxu0 %v567
      %v1124 = vpop.f32.mrb[0].mxu0
      %v1125 = vadd.f32 %v964, %v1124
      %v1126 = vpop.f32.mrb[0].mxu0
      %v1127 = vpop.f32.mrb[0].mxu0
      %v1128 = vadd.f32 %v967, %v1127
      %v1129 = vpop.f32.mrb[0].mxu0
      %1130 = vdwg.mxu0
      %v1179 = vunpack.c.l.b16 %v568
      %v1180 = vunpack.c.l.b16 %v569
      %v1181 = vunpack.c.l.b16 %v570
      %v1182 = vunpack.c.l.b16 %v571
      %v1183 = vunpack.c.l.b16 %v572
      %v1184 = vunpack.c.l.b16 %v573
      %v1185 = vunpack.c.l.b16 %v574
      %v1186 = vunpack.c.l.b16 %v575
      %v1187 = vunpack.c.l.b16 %v576
      %v1188 = vunpack.c.l.b16 %v577
      %v1189 = vunpack.c.l.b16 %v578
      %v1190 = vunpack.c.l.b16 %v579
      %v1191 = vunpack.c.l.b16 %v580
      %v1192 = vunpack.c.l.b16 %v581
      %v1193 = vunpack.c.l.b16 %v582
      %v1194 = vunpack.c.l.b16 %v583
      %v1195 = vunpack.c.l.b16 %v584
      %v1196 = vunpack.c.l.b16 %v585
      %v1197 = vunpack.c.l.b16 %v586
      %v1198 = vunpack.c.l.b16 %v587
      %v1199 = vunpack.c.l.b16 %v588
      %v1200 = vunpack.c.l.b16 %v589
      %v1201 = vunpack.c.l.b16 %v590
      %v1202 = vunpack.c.l.b16 %v591
      %v1203 = vunpack.c.l.b16 %v592
      %v1204 = vunpack.c.l.b16 %v593
      %v1205 = vunpack.c.l.b16 %v594
      %v1206 = vunpack.c.l.b16 %v595
      %v1207 = vunpack.c.l.b16 %v596
      %v1208 = vunpack.c.l.b16 %v597
      %v1209 = vunpack.c.l.b16 %v598
      %v1210 = vunpack.c.l.b16 %v599
      %v1211 = vunpack.c.l.b16 %v600
      %v1212 = vunpack.c.l.b16 %v601
      %v1213 = vunpack.c.l.b16 %v602
      %v1214 = vunpack.c.l.b16 %v603
      %v1215 = vunpack.c.l.b16 %v604
      %v1216 = vunpack.c.l.b16 %v605
      %v1217 = vunpack.c.l.b16 %v606
      %v1218 = vunpack.c.l.b16 %v607
      %v1219 = vunpack.c.l.b16 %v608
      %v1220 = vunpack.c.l.b16 %v609
      %v1221 = vunpack.c.l.b16 %v610
      %v1222 = vunpack.c.l.b16 %v611
      %v1223 = vunpack.c.l.b16 %v612
      %v1224 = vunpack.c.l.b16 %v613
      %v1225 = vunpack.c.l.b16 %v614
      %v1226 = vunpack.c.l.b16 %v615
      %v1227 = vpack.c.b16 %v1180, %v1179
      %v1228 = vpack.c.b16 %v1182, %v1181
      %v1229 = vpack.c.b16 %v1184, %v1183
      %v1230 = vpack.c.b16 %v1186, %v1185
      %v1231 = vpack.c.b16 %v1188, %v1187
      %v1232 = vpack.c.b16 %v1190, %v1189
      %v1233 = vpack.c.b16 %v1192, %v1191
      %v1234 = vpack.c.b16 %v1194, %v1193
      %v1235 = vpack.c.b16 %v1196, %v1195
      %v1236 = vpack.c.b16 %v1198, %v1197
      %v1237 = vpack.c.b16 %v1200, %v1199
      %v1238 = vpack.c.b16 %v1202, %v1201
      %v1239 = vpack.c.b16 %v1204, %v1203
      %v1240 = vpack.c.b16 %v1206, %v1205
      %v1241 = vpack.c.b16 %v1208, %v1207
      %v1242 = vpack.c.b16 %v1210, %v1209
      %v1243 = vpack.c.b16 %v1212, %v1211
      %v1244 = vpack.c.b16 %v1214, %v1213
      %v1245 = vpack.c.b16 %v1216, %v1215
      %v1246 = vpack.c.b16 %v1218, %v1217
      %v1247 = vpack.c.b16 %v1220, %v1219
      %v1248 = vpack.c.b16 %v1222, %v1221
      %v1249 = vpack.c.b16 %v1224, %v1223
      %v1250 = vpack.c.b16 %v1226, %v1225
      %1275 = vmatprep.subr.bf16.mxu0 0
      %1276 = vmatpush1.bf16.msra.mxu0 %v1227
      %1277 = vmatprep.subr.bf16.mxu0 0
      %1278 = vmatpush1.bf16.msra.mxu0 %v1228
      %1279 = vmatprep.subr.bf16.mxu0 0
      %1280 = vmatpush1.bf16.msra.mxu0 %v1229
      %1281 = vmatprep.subr.bf16.mxu0 0
      %1282 = vmatpush1.bf16.msra.mxu0 %v1230
      %1283 = vmatprep.subr.bf16.mxu0 0
      %1284 = vmatpush1.bf16.msra.mxu0 %v1231
      %1285 = vmatprep.subr.bf16.mxu0 0
      %1286 = vmatpush1.bf16.msra.mxu0 %v1232
      %1287 = vmatprep.subr.bf16.mxu0 0
      %1288 = vmatpush1.bf16.msra.mxu0 %v1233
      %1289 = vmatprep.subr.bf16.mxu0 0
      %1290 = vmatpush1.bf16.msra.mxu0 %v1234
      %1291 = vmatprep.subr.bf16.mxu0 0
      %1292 = vmatpush1.bf16.msra.mxu0 %v1235
      %1293 = vmatprep.subr.bf16.mxu0 0
      %1294 = vmatpush1.bf16.msra.mxu0 %v1236
      %1295 = vmatprep.subr.bf16.mxu0 0
      %1296 = vmatpush1.bf16.msra.mxu0 %v1237
      %1297 = vmatprep.subr.bf16.mxu0 0
      %1298 = vmatpush1.bf16.msra.mxu0 %v1238
      %1299 = vmatprep.subr.bf16.mxu0 0
      %1300 = vmatpush1.bf16.msra.mxu0 %v1239
      %1301 = vmatprep.subr.bf16.mxu0 0
      %1302 = vmatpush1.bf16.msra.mxu0 %v1240
      %1303 = vmatprep.subr.bf16.mxu0 0
      %1304 = vmatpush1.bf16.msra.mxu0 %v1241
      %1305 = vmatprep.subr.bf16.mxu0 0
      %1306 = vmatpush1.bf16.msra.mxu0 %v1242
      %1307 = vmatprep.mubr.bf16.mxu0 %v307
      %1308 = vmatmul.mubr.bf16.gmra.mrb[0].mxu0 %v469
      %v1309 = vpop.f32.mrb[0].mxu0
      %v1310 = vadd.f32 %v1005, %v1309
      %v1311 = vpop.f32.mrb[0].mxu0
      %v1312 = vpop.f32.mrb[0].mxu0
      %v1313 = vadd.f32 %v1008, %v1312
      %v1314 = vpop.f32.mrb[0].mxu0
      %1315 = vmatprep.mubr.bf16.mxu0 %v306
      %1316 = vmatmul.mubr.bf16.gmra.mrb[0].mxu0 %v470
      %v1317 = vpop.f32.mrb[0].mxu0
      %v1318 = vadd.f32 %v1013, %v1317
      %v1319 = vpop.f32.mrb[0].mxu0
      %v1320 = vpop.f32.mrb[0].mxu0
      %v1321 = vadd.f32 %v1016, %v1320
      %v1322 = vpop.f32.mrb[0].mxu0
      %1323 = vmatprep.mubr.bf16.mxu0 %v307
      %1324 = vmatmul.mubr.bf16.gmra.mrb[0].mxu0 %v469
      %v1325 = vpop.f32.mrb[0].mxu0
      %v1326 = vadd.f32 %v1021, %v1325
      %v1327 = vpop.f32.mrb[0].mxu0
      %v1328 = vpop.f32.mrb[0].mxu0
      %v1329 = vadd.f32 %v1024, %v1328
      %v1330 = vpop.f32.mrb[0].mxu0
      %1331 = vmatprep.mubr.bf16.mxu0 %v308
      %1332 = vmatmul.mubr.bf16.gmra.mrb[0].mxu0 %v471
      %v1333 = vpop.f32.mrb[0].mxu0
      %v1334 = vadd.f32 %v1029, %v1333
      %v1335 = vpop.f32.mrb[0].mxu0
      %v1336 = vpop.f32.mrb[0].mxu0
      %v1337 = vadd.f32 %v1032, %v1336
      %v1338 = vpop.f32.mrb[0].mxu0
      %1339 = vmatprep.mubr.bf16.mxu0 %v309
      %1340 = vmatmul.mubr.bf16.gmra.mrb[0].mxu0 %v472
      %v1341 = vpop.f32.mrb[0].mxu0
      %v1342 = vadd.f32 %v1037, %v1341
      %v1343 = vpop.f32.mrb[0].mxu0
      %v1344 = vpop.f32.mrb[0].mxu0
      %v1345 = vadd.f32 %v1040, %v1344
      %v1346 = vpop.f32.mrb[0].mxu0
      %1347 = vmatprep.mubr.bf16.mxu0 %v310
      %1348 = vmatmul.mubr.bf16.gmra.mrb[0].mxu0 %v473
      %v1349 = vpop.f32.mrb[0].mxu0
      %v1350 = vadd.f32 %v1045, %v1349
      %v1351 = vpop.f32.mrb[0].mxu0
      %v1352 = vpop.f32.mrb[0].mxu0
      %v1353 = vadd.f32 %v1048, %v1352
      %v1354 = vpop.f32.mrb[0].mxu0
      %1355 = vmatprep.mubr.bf16.mxu0 %v311
      %1356 = vmatmul.mubr.bf16.gmra.mrb[0].mxu0 %v474
      %v1357 = vpop.f32.mrb[0].mxu0
      %v1358 = vadd.f32 %v1053, %v1357
      %v1359 = vpop.f32.mrb[0].mxu0
      %v1360 = vpop.f32.mrb[0].mxu0
      %v1361 = vadd.f32 %v1056, %v1360
      %v1362 = vpop.f32.mrb[0].mxu0
      %1363 = vmatprep.mubr.bf16.mxu0 %v312
      %1364 = vmatmul.mubr.bf16.gmra.mrb[0].mxu0 %v475
      %v1365 = vpop.f32.mrb[0].mxu0
      %v1366 = vadd.f32 %v1061, %v1365
      %v1367 = vpop.f32.mrb[0].mxu0
      %v1368 = vpop.f32.mrb[0].mxu0
      %v1369 = vadd.f32 %v1064, %v1368
      %v1370 = vpop.f32.mrb[0].mxu0
      %1371 = vmatprep.mubr.bf16.mxu0 %v313
      %1372 = vmatmul.mubr.bf16.gmra.mrb[0].mxu0 %v476
      %v1373 = vpop.f32.mrb[0].mxu0
      %v1374 = vadd.f32 %v1069, %v1373
      %v1375 = vpop.f32.mrb[0].mxu0
      %v1376 = vpop.f32.mrb[0].mxu0
      %v1377 = vadd.f32 %v1072, %v1376
      %v1378 = vpop.f32.mrb[0].mxu0
      %1379 = vmatprep.mubr.bf16.mxu0 %v314
      %1380 = vmatmul.mubr.bf16.gmra.mrb[0].mxu0 %v477
      %v1381 = vpop.f32.mrb[0].mxu0
      %v1382 = vadd.f32 %v1077, %v1381
      %v1383 = vpop.f32.mrb[0].mxu0
      %v1384 = vpop.f32.mrb[0].mxu0
      %v1385 = vadd.f32 %v1080, %v1384
      %v1386 = vpop.f32.mrb[0].mxu0
      %1387 = vmatprep.mubr.bf16.mxu0 %v315
      %1388 = vmatmul.mubr.bf16.gmra.mrb[0].mxu0 %v478
      %v1389 = vpop.f32.mrb[0].mxu0
      %v1390 = vadd.f32 %v1085, %v1389
      %v1391 = vpop.f32.mrb[0].mxu0
      %v1392 = vpop.f32.mrb[0].mxu0
      %v1393 = vadd.f32 %v1088, %v1392
      %v1394 = vpop.f32.mrb[0].mxu0
      %1395 = vmatprep.mubr.bf16.mxu0 %v316
      %1396 = vmatmul.mubr.bf16.gmra.mrb[0].mxu0 %v479
      %v1397 = vpop.f32.mrb[0].mxu0
      %v1398 = vadd.f32 %v1093, %v1397
      %v1399 = vpop.f32.mrb[0].mxu0
      %v1400 = vpop.f32.mrb[0].mxu0
      %v1401 = vadd.f32 %v1096, %v1400
      %v1402 = vpop.f32.mrb[0].mxu0
      %1403 = vmatprep.mubr.bf16.mxu0 %v317
      %1404 = vmatmul.mubr.bf16.gmra.mrb[0].mxu0 %v480
      %v1405 = vpop.f32.mrb[0].mxu0
      %v1406 = vadd.f32 %v1101, %v1405
      %v1407 = vpop.f32.mrb[0].mxu0
      %v1408 = vpop.f32.mrb[0].mxu0
      %v1409 = vadd.f32 %v1104, %v1408
      %v1410 = vpop.f32.mrb[0].mxu0
      %1411 = vmatprep.mubr.bf16.mxu0 %v318
      %1412 = vmatmul.mubr.bf16.gmra.mrb[0].mxu0 %v481
      %v1413 = vpop.f32.mrb[0].mxu0
      %v1414 = vadd.f32 %v1109, %v1413
      %v1415 = vpop.f32.mrb[0].mxu0
      %v1416 = vpop.f32.mrb[0].mxu0
      %v1417 = vadd.f32 %v1112, %v1416
      %v1418 = vpop.f32.mrb[0].mxu0
      %1419 = vmatprep.mubr.bf16.mxu0 %v319
      %1420 = vmatmul.mubr.bf16.gmra.mrb[0].mxu0 %v482
      %v1421 = vpop.f32.mrb[0].mxu0
      %v1422 = vadd.f32 %v1117, %v1421
      %v1423 = vpop.f32.mrb[0].mxu0
      %v1424 = vpop.f32.mrb[0].mxu0
      %v1425 = vadd.f32 %v1120, %v1424
      %v1426 = vpop.f32.mrb[0].mxu0
      %1427 = vmatprep.mubr.bf16.mxu0 %v320
      %1428 = vmatmul.mubr.bf16.gmra.mrb[0].mxu0 %v483
      %v1429 = vpop.f32.mrb[0].mxu0
      %v1430 = vadd.f32 %v1125, %v1429
      %v1431 = vpop.f32.mrb[0].mxu0
      %v1432 = vpop.f32.mrb[0].mxu0
      %v1433 = vadd.f32 %v1128, %v1432
      %v1434 = vpop.f32.mrb[0].mxu0
      %1435 = vdwg.mxu0
      %1436 = vmatprep.subr.bf16.mxu0 0
      %1437 = vmatpush1.bf16.msra.mxu0 %v1243
      %1438 = vmatprep.subr.bf16.mxu0 0
      %1439 = vmatpush1.bf16.msra.mxu0 %v1244
      %1440 = vmatprep.subr.bf16.mxu0 0
      %1441 = vmatpush1.bf16.msra.mxu0 %v1245
      %1442 = vmatprep.subr.bf16.mxu0 0
      %1443 = vmatpush1.bf16.msra.mxu0 %v1246
      %1444 = vmatprep.subr.bf16.mxu0 0
      %1445 = vmatpush1.bf16.msra.mxu0 %v1247
      %1446 = vmatprep.subr.bf16.mxu0 0
      %1447 = vmatpush1.bf16.msra.mxu0 %v1248
      %1448 = vmatprep.subr.bf16.mxu0 0
      %1449 = vmatpush1.bf16.msra.mxu0 %v1249
      %1450 = vmatprep.subr.bf16.mxu0 0
      %1451 = vmatpush1.bf16.msra.mxu0 %v1250
      %1452 = vmatprep.subr.bf16.mxu0 0
      %1453 = vmatpush1.bf16.msra.mxu0 0
      %1454 = vmatprep.subr.bf16.mxu0 0
      %1455 = vmatpush1.bf16.msra.mxu0 0
      %1456 = vmatprep.subr.bf16.mxu0 0
      %1457 = vmatpush1.bf16.msra.mxu0 0
      %1458 = vmatprep.subr.bf16.mxu0 0
      %1459 = vmatpush1.bf16.msra.mxu0 0
      %1460 = vmatprep.subr.bf16.mxu0 0
      %1461 = vmatpush1.bf16.msra.mxu0 0
      %1462 = vmatprep.subr.bf16.mxu0 0
      %1463 = vmatpush1.bf16.msra.mxu0 0
      %1464 = vmatprep.subr.bf16.mxu0 0
      %1465 = vmatpush1.bf16.msra.mxu0 0
      %1466 = vmatprep.subr.bf16.mxu0 0
      %1467 = vmatpush1.bf16.msra.mxu0 0
      %1468 = vmatprep.mubr.bf16.mxu0 0
      %1469 = vmatmul.mubr.bf16.gmra.mrb[0].mxu0 %v552
      %v1470 = vpop.f32.mrb[0].mxu0
      %v1471 = vadd.f32 %v1310, %v1470
      %v1472 = vpop.f32.mrb[0].mxu0
      %v1473 = vpop.f32.mrb[0].mxu0
      %v1474 = vadd.f32 %v1313, %v1473
      %v1475 = vpop.f32.mrb[0].mxu0
      %1476 = vmatprep.mubr.bf16.mxu0 0
      %1477 = vmatmul.mubr.bf16.gmra.mrb[0].mxu0 %v553
      %v1478 = vpop.f32.mrb[0].mxu0
      %v1479 = vadd.f32 %v1318, %v1478
      %v1480 = vpop.f32.mrb[0].mxu0
      %v1481 = vpop.f32.mrb[0].mxu0
      %v1482 = vadd.f32 %v1321, %v1481
      %v1483 = vpop.f32.mrb[0].mxu0
      %1484 = vmatprep.mubr.bf16.mxu0 0
      %1485 = vmatmul.mubr.bf16.gmra.mrb[0].mxu0 %v552
      %v1486 = vpop.f32.mrb[0].mxu0
      %v1487 = vadd.f32 %v1326, %v1486
      %v1488 = vpop.f32.mrb[0].mxu0
      %v1489 = vpop.f32.mrb[0].mxu0
      %v1490 = vadd.f32 %v1329, %v1489
      %v1491 = vpop.f32.mrb[0].mxu0
      %1492 = vmatprep.mubr.bf16.mxu0 0
      %1493 = vmatmul.mubr.bf16.gmra.mrb[0].mxu0 %v554
      %v1494 = vpop.f32.mrb[0].mxu0
      %v1495 = vadd.f32 %v1334, %v1494
      %v1496 = vpop.f32.mrb[0].mxu0
      %v1497 = vpop.f32.mrb[0].mxu0
      %v1498 = vadd.f32 %v1337, %v1497
      %v1499 = vpop.f32.mrb[0].mxu0
      %1500 = vmatprep.mubr.bf16.mxu0 0
      %1501 = vmatmul.mubr.bf16.gmra.mrb[0].mxu0 %v555
      %v1502 = vpop.f32.mrb[0].mxu0
      %v1503 = vadd.f32 %v1342, %v1502
      %v1504 = vpop.f32.mrb[0].mxu0
      %v1505 = vpop.f32.mrb[0].mxu0
      %v1506 = vadd.f32 %v1345, %v1505
      %v1507 = vpop.f32.mrb[0].mxu0
      %1508 = vmatprep.mubr.bf16.mxu0 0
      %1509 = vmatmul.mubr.bf16.gmra.mrb[0].mxu0 %v556
      %v1510 = vpop.f32.mrb[0].mxu0
      %v1511 = vadd.f32 %v1350, %v1510
      %v1512 = vpop.f32.mrb[0].mxu0
      %v1513 = vpop.f32.mrb[0].mxu0
      %v1514 = vadd.f32 %v1353, %v1513
      %v1515 = vpop.f32.mrb[0].mxu0
      %1516 = vmatprep.mubr.bf16.mxu0 0
      %1517 = vmatmul.mubr.bf16.gmra.mrb[0].mxu0 %v557
      %v1518 = vpop.f32.mrb[0].mxu0
      %v1519 = vadd.f32 %v1358, %v1518
      %v1520 = vpop.f32.mrb[0].mxu0
      %v1521 = vpop.f32.mrb[0].mxu0
      %v1522 = vadd.f32 %v1361, %v1521
      %v1523 = vpop.f32.mrb[0].mxu0
      %1524 = vmatprep.mubr.bf16.mxu0 0
      %1525 = vmatmul.mubr.bf16.gmra.mrb[0].mxu0 %v558
      %v1526 = vpop.f32.mrb[0].mxu0
      %v1527 = vadd.f32 %v1366, %v1526
      %v1528 = vpop.f32.mrb[0].mxu0
      %v1529 = vpop.f32.mrb[0].mxu0
      %v1530 = vadd.f32 %v1369, %v1529
      %v1531 = vpop.f32.mrb[0].mxu0
      %1532 = vmatprep.mubr.bf16.mxu0 0
      %1533 = vmatmul.mubr.bf16.gmra.mrb[0].mxu0 %v559
      %v1534 = vpop.f32.mrb[0].mxu0
      %v1535 = vadd.f32 %v1374, %v1534
      %v1536 = vpop.f32.mrb[0].mxu0
      %v1537 = vpop.f32.mrb[0].mxu0
      %v1538 = vadd.f32 %v1377, %v1537
      %v1539 = vpop.f32.mrb[0].mxu0
      %1540 = vmatprep.mubr.bf16.mxu0 0
      %1541 = vmatmul.mubr.bf16.gmra.mrb[0].mxu0 %v560
      %v1542 = vpop.f32.mrb[0].mxu0
      %v1543 = vadd.f32 %v1382, %v1542
      %v1544 = vpop.f32.mrb[0].mxu0
      %v1545 = vpop.f32.mrb[0].mxu0
      %v1546 = vadd.f32 %v1385, %v1545
      %v1547 = vpop.f32.mrb[0].mxu0
      %1548 = vmatprep.mubr.bf16.mxu0 0
      %1549 = vmatmul.mubr.bf16.gmra.mrb[0].mxu0 %v561
      %v1550 = vpop.f32.mrb[0].mxu0
      %v1551 = vadd.f32 %v1390, %v1550
      %v1552 = vpop.f32.mrb[0].mxu0
      %v1553 = vpop.f32.mrb[0].mxu0
      %v1554 = vadd.f32 %v1393, %v1553
      %v1555 = vpop.f32.mrb[0].mxu0
      %1556 = vmatprep.mubr.bf16.mxu0 0
      %1557 = vmatmul.mubr.bf16.gmra.mrb[0].mxu0 %v562
      %v1558 = vpop.f32.mrb[0].mxu0
      %v1559 = vadd.f32 %v1398, %v1558
      %v1560 = vpop.f32.mrb[0].mxu0
      %v1561 = vpop.f32.mrb[0].mxu0
      %v1562 = vadd.f32 %v1401, %v1561
      %v1563 = vpop.f32.mrb[0].mxu0
      %1564 = vmatprep.mubr.bf16.mxu0 0
      %1565 = vmatmul.mubr.bf16.gmra.mrb[0].mxu0 %v563
      %v1566 = vpop.f32.mrb[0].mxu0
      %v1567 = vadd.f32 %v1406, %v1566
      %v1568 = vpop.f32.mrb[0].mxu0
      %v1569 = vpop.f32.mrb[0].mxu0
      %v1570 = vadd.f32 %v1409, %v1569
      %v1571 = vpop.f32.mrb[0].mxu0
      %1572 = vmatprep.mubr.bf16.mxu0 0
      %1573 = vmatmul.mubr.bf16.gmra.mrb[0].mxu0 %v564
      %v1574 = vpop.f32.mrb[0].mxu0
      %v1575 = vadd.f32 %v1414, %v1574
      %v1576 = vpop.f32.mrb[0].mxu0
      %v1577 = vpop.f32.mrb[0].mxu0
      %v1578 = vadd.f32 %v1417, %v1577
      %v1579 = vpop.f32.mrb[0].mxu0
      %1580 = vmatprep.mubr.bf16.mxu0 0
      %1581 = vmatmul.mubr.bf16.gmra.mrb[0].mxu0 %v565
      %v1582 = vpop.f32.mrb[0].mxu0
      %v1583 = vadd.f32 %v1422, %v1582
      %v1584 = vpop.f32.mrb[0].mxu0
      %v1585 = vpop.f32.mrb[0].mxu0
      %v1586 = vadd.f32 %v1425, %v1585
      %v1587 = vpop.f32.mrb[0].mxu0
      %1588 = vmatprep.mubr.bf16.mxu0 0
      %1589 = vmatmul.mubr.bf16.gmra.mrb[0].mxu0 %v566
      %v1590 = vpop.f32.mrb[0].mxu0
      %v1591 = vadd.f32 %v1430, %v1590
      %v1592 = vpop.f32.mrb[0].mxu0
      %v1593 = vpop.f32.mrb[0].mxu0
      %v1594 = vadd.f32 %v1433, %v1593
      %v1595 = vpop.f32.mrb[0].mxu0
      %1596 = vdwg.mxu0
      %s1597 = scalar_lea.vmem %s1, 384
      %v1598 = vld [vmem:[%s1597] sm:$0xf]
      %v1599 = vld [vmem:[%s1597 + $0x4] sm:$0xf]
      %v1600 = vld [vmem:[%s1597 + $0x8] sm:$0xf]
      %v1601 = vld [vmem:[%s1597 + $0xc] sm:$0xf]
      %v1602 = vld [vmem:[%s1597 + $0x10] sm:$0xf]
      %v1603 = vld [vmem:[%s1597 + $0x14] sm:$0xf]
      %v1604 = vld [vmem:[%s1597 + $0x18] sm:$0xf]
      %v1605 = vld [vmem:[%s1597 + $0x1c] sm:$0xf]
      %v1606 = vld [vmem:[%s1597 + $0x20] sm:$0xf]
      %v1607 = vld [vmem:[%s1597 + $0x24] sm:$0xf]
      %v1608 = vld [vmem:[%s1597 + $0x28] sm:$0xf]
      %v1609 = vld [vmem:[%s1597 + $0x2c] sm:$0xf]
      %v1610 = vld [vmem:[%s1597 + $0x30] sm:$0xf]
      %v1611 = vld [vmem:[%s1597 + $0x34] sm:$0xf]
      %v1612 = vld [vmem:[%s1597 + $0x38] sm:$0xf]
      %v1613 = vld [vmem:[%s1597 + $0x3c] sm:$0xf]
      %v1614 = vld [vmem:[%s1597 + $0x40] sm:$0xf]
      %v1615 = vld [vmem:[%s1597 + $0x44] sm:$0xf]
      %v1616 = vld [vmem:[%s1597 + $0x48] sm:$0xf]
      %v1617 = vld [vmem:[%s1597 + $0x4c] sm:$0xf]
      %v1618 = vld [vmem:[%s1597 + $0x50] sm:$0xf]
      %v1619 = vld [vmem:[%s1597 + $0x54] sm:$0xf]
      %v1620 = vld [vmem:[%s1597 + $0x58] sm:$0xf]
      %v1621 = vld [vmem:[%s1597 + $0x5c] sm:$0xf]
      %v1622 = vld [vmem:[%s1597 + $0x60] sm:$0xf]
      %v1623 = vld [vmem:[%s1597 + $0x64] sm:$0xf]
      %v1624 = vld [vmem:[%s1597 + $0x68] sm:$0xf]
      %v1625 = vld [vmem:[%s1597 + $0x6c] sm:$0xf]
      %v1626 = vld [vmem:[%s1597 + $0x70] sm:$0xf]
      %v1627 = vld [vmem:[%s1597 + $0x74] sm:$0xf]
      %v1628 = vld [vmem:[%s1597 + $0x78] sm:$0xf]
      %v1629 = vld [vmem:[%s1597 + $0x7c] sm:$0xf]
      %v1630 = vld [vmem:[%s1597 + $0x80] sm:$0xf]
      %v1631 = vld [vmem:[%s1597 + $0x84] sm:$0xf]
      %v1632 = vld [vmem:[%s1597 + $0x88] sm:$0xf]
      %v1633 = vld [vmem:[%s1597 + $0x8c] sm:$0xf]
      %v1634 = vld [vmem:[%s1597 + $0x90] sm:$0xf]
      %v1635 = vld [vmem:[%s1597 + $0x94] sm:$0xf]
      %v1636 = vld [vmem:[%s1597 + $0x98] sm:$0xf]
      %v1637 = vld [vmem:[%s1597 + $0x9c] sm:$0xf]
      %v1638 = vld [vmem:[%s1597 + $0xa0] sm:$0xf]
      %v1639 = vld [vmem:[%s1597 + $0xa4] sm:$0xf]
      %v1640 = vld [vmem:[%s1597 + $0xa8] sm:$0xf]
      %v1641 = vld [vmem:[%s1597 + $0xac] sm:$0xf]
      %v1642 = vld [vmem:[%s1597 + $0xb0] sm:$0xf]
      %v1643 = vld [vmem:[%s1597 + $0xb4] sm:$0xf]
      %v1644 = vld [vmem:[%s1597 + $0xb8] sm:$0xf]
      %v1645 = vld [vmem:[%s1597 + $0xbc] sm:$0xf]
      %v1694 = vunpack.c.l.b16 %v1598
      %v1695 = vunpack.c.l.b16 %v1599
      %v1696 = vunpack.c.l.b16 %v1600
      %v1697 = vunpack.c.l.b16 %v1601
      %v1698 = vunpack.c.l.b16 %v1602
      %v1699 = vunpack.c.l.b16 %v1603
      %v1700 = vunpack.c.l.b16 %v1604
      %v1701 = vunpack.c.l.b16 %v1605
      %v1702 = vunpack.c.l.b16 %v1606
      %v1703 = vunpack.c.l.b16 %v1607
      %v1704 = vunpack.c.l.b16 %v1608
      %v1705 = vunpack.c.l.b16 %v1609
      %v1706 = vunpack.c.l.b16 %v1610
      %v1707 = vunpack.c.l.b16 %v1611
      %v1708 = vunpack.c.l.b16 %v1612
      %v1709 = vunpack.c.l.b16 %v1613
      %v1710 = vunpack.c.l.b16 %v1614
      %v1711 = vunpack.c.l.b16 %v1615
      %v1712 = vunpack.c.l.b16 %v1616
      %v1713 = vunpack.c.l.b16 %v1617
      %v1714 = vunpack.c.l.b16 %v1618
      %v1715 = vunpack.c.l.b16 %v1619
      %v1716 = vunpack.c.l.b16 %v1620
      %v1717 = vunpack.c.l.b16 %v1621
      %v1718 = vunpack.c.l.b16 %v1622
      %v1719 = vunpack.c.l.b16 %v1623
      %v1720 = vunpack.c.l.b16 %v1624
      %v1721 = vunpack.c.l.b16 %v1625
      %v1722 = vunpack.c.l.b16 %v1626
      %v1723 = vunpack.c.l.b16 %v1627
      %v1724 = vunpack.c.l.b16 %v1628
      %v1725 = vunpack.c.l.b16 %v1629
      %v1726 = vunpack.c.l.b16 %v1630
      %v1727 = vunpack.c.l.b16 %v1631
      %v1728 = vunpack.c.l.b16 %v1632
      %v1729 = vunpack.c.l.b16 %v1633
      %v1730 = vunpack.c.l.b16 %v1634
      %v1731 = vunpack.c.l.b16 %v1635
      %v1732 = vunpack.c.l.b16 %v1636
      %v1733 = vunpack.c.l.b16 %v1637
      %v1734 = vunpack.c.l.b16 %v1638
      %v1735 = vunpack.c.l.b16 %v1639
      %v1736 = vunpack.c.l.b16 %v1640
      %v1737 = vunpack.c.l.b16 %v1641
      %v1738 = vunpack.c.l.b16 %v1642
      %v1739 = vunpack.c.l.b16 %v1643
      %v1740 = vunpack.c.l.b16 %v1644
      %v1741 = vunpack.c.l.b16 %v1645
      %v1742 = vpack.c.b16 %v1695, %v1694
      %v1743 = vpack.c.b16 %v1697, %v1696
      %v1744 = vpack.c.b16 %v1699, %v1698
      %v1745 = vpack.c.b16 %v1701, %v1700
      %v1746 = vpack.c.b16 %v1703, %v1702
      %v1747 = vpack.c.b16 %v1705, %v1704
      %v1748 = vpack.c.b16 %v1707, %v1706
      %v1749 = vpack.c.b16 %v1709, %v1708
      %v1750 = vpack.c.b16 %v1711, %v1710
      %v1751 = vpack.c.b16 %v1713, %v1712
      %v1752 = vpack.c.b16 %v1715, %v1714
      %v1753 = vpack.c.b16 %v1717, %v1716
      %v1754 = vpack.c.b16 %v1719, %v1718
      %v1755 = vpack.c.b16 %v1721, %v1720
      %v1756 = vpack.c.b16 %v1723, %v1722
      %v1757 = vpack.c.b16 %v1725, %v1724
      %v1758 = vpack.c.b16 %v1727, %v1726
      %v1759 = vpack.c.b16 %v1729, %v1728
      %v1760 = vpack.c.b16 %v1731, %v1730
      %v1761 = vpack.c.b16 %v1733, %v1732
      %v1762 = vpack.c.b16 %v1735, %v1734
      %v1763 = vpack.c.b16 %v1737, %v1736
      %v1764 = vpack.c.b16 %v1739, %v1738
      %v1765 = vpack.c.b16 %v1741, %v1740
      %1790 = vmatprep.subr.bf16.mxu0 0
      %1791 = vmatpush1.bf16.msra.mxu0 %v1742
      %1792 = vmatprep.subr.bf16.mxu0 0
      %1793 = vmatpush1.bf16.msra.mxu0 %v1743
      %1794 = vmatprep.subr.bf16.mxu0 0
      %1795 = vmatpush1.bf16.msra.mxu0 %v1744
      %1796 = vmatprep.subr.bf16.mxu0 0
      %1797 = vmatpush1.bf16.msra.mxu0 %v1745
      %1798 = vmatprep.subr.bf16.mxu0 0
      %1799 = vmatpush1.bf16.msra.mxu0 %v1746
      %1800 = vmatprep.subr.bf16.mxu0 0
      %1801 = vmatpush1.bf16.msra.mxu0 %v1747
      %1802 = vmatprep.subr.bf16.mxu0 0
      %1803 = vmatpush1.bf16.msra.mxu0 %v1748
      %1804 = vmatprep.subr.bf16.mxu0 0
      %1805 = vmatpush1.bf16.msra.mxu0 %v1749
      %1806 = vmatprep.subr.bf16.mxu0 0
      %1807 = vmatpush1.bf16.msra.mxu0 %v1750
      %1808 = vmatprep.subr.bf16.mxu0 0
      %1809 = vmatpush1.bf16.msra.mxu0 %v1751
      %1810 = vmatprep.subr.bf16.mxu0 0
      %1811 = vmatpush1.bf16.msra.mxu0 %v1752
      %1812 = vmatprep.subr.bf16.mxu0 0
      %1813 = vmatpush1.bf16.msra.mxu0 %v1753
      %1814 = vmatprep.subr.bf16.mxu0 0
      %1815 = vmatpush1.bf16.msra.mxu0 %v1754
      %1816 = vmatprep.subr.bf16.mxu0 0
      %1817 = vmatpush1.bf16.msra.mxu0 %v1755
      %1818 = vmatprep.subr.bf16.mxu0 0
      %1819 = vmatpush1.bf16.msra.mxu0 %v1756
      %1820 = vmatprep.subr.bf16.mxu0 0
      %1821 = vmatpush1.bf16.msra.mxu0 %v1757
      %1822 = vmatprep.mubr.bf16.mxu0 %v307
      %1823 = vmatmul.mubr.bf16.gmra.mrb[0].mxu0 %v469
      %v1824 = vpop.f32.mrb[0].mxu0
      %v1825 = vadd.f32 0.0, %v1824
      %v1826 = vpop.f32.mrb[0].mxu0
      %v1827 = vpop.f32.mrb[0].mxu0
      %v1828 = vadd.f32 0.0, %v1827
      %v1829 = vpop.f32.mrb[0].mxu0
      %1830 = vmatprep.mubr.bf16.mxu0 %v308
      %1831 = vmatmul.mubr.bf16.gmra.mrb[0].mxu0 %v471
      %v1832 = vpop.f32.mrb[0].mxu0
      %v1833 = vadd.f32 0.0, %v1832
      %v1834 = vpop.f32.mrb[0].mxu0
      %v1835 = vpop.f32.mrb[0].mxu0
      %v1836 = vadd.f32 0.0, %v1835
      %v1837 = vpop.f32.mrb[0].mxu0
      %1838 = vmatprep.mubr.bf16.mxu0 %v309
      %1839 = vmatmul.mubr.bf16.gmra.mrb[0].mxu0 %v472
      %v1840 = vpop.f32.mrb[0].mxu0
      %v1841 = vadd.f32 0.0, %v1840
      %v1842 = vpop.f32.mrb[0].mxu0
      %v1843 = vpop.f32.mrb[0].mxu0
      %v1844 = vadd.f32 0.0, %v1843
      %v1845 = vpop.f32.mrb[0].mxu0
      %1846 = vmatprep.mubr.bf16.mxu0 %v310
      %1847 = vmatmul.mubr.bf16.gmra.mrb[0].mxu0 %v473
      %v1848 = vpop.f32.mrb[0].mxu0
      %v1849 = vadd.f32 0.0, %v1848
      %v1850 = vpop.f32.mrb[0].mxu0
      %v1851 = vpop.f32.mrb[0].mxu0
      %v1852 = vadd.f32 0.0, %v1851
      %v1853 = vpop.f32.mrb[0].mxu0
      %1854 = vmatprep.mubr.bf16.mxu0 %v311
      %1855 = vmatmul.mubr.bf16.gmra.mrb[0].mxu0 %v474
      %v1856 = vpop.f32.mrb[0].mxu0
      %v1857 = vadd.f32 0.0, %v1856
      %v1858 = vpop.f32.mrb[0].mxu0
      %v1859 = vpop.f32.mrb[0].mxu0
      %v1860 = vadd.f32 0.0, %v1859
      %v1861 = vpop.f32.mrb[0].mxu0
      %1862 = vmatprep.mubr.bf16.mxu0 %v312
      %1863 = vmatmul.mubr.bf16.gmra.mrb[0].mxu0 %v475
      %v1864 = vpop.f32.mrb[0].mxu0
      %v1865 = vadd.f32 0.0, %v1864
      %v1866 = vpop.f32.mrb[0].mxu0
      %v1867 = vpop.f32.mrb[0].mxu0
      %v1868 = vadd.f32 0.0, %v1867
      %v1869 = vpop.f32.mrb[0].mxu0
      %1870 = vmatprep.mubr.bf16.mxu0 %v313
      %1871 = vmatmul.mubr.bf16.gmra.mrb[0].mxu0 %v476
      %v1872 = vpop.f32.mrb[0].mxu0
      %v1873 = vadd.f32 0.0, %v1872
      %v1874 = vpop.f32.mrb[0].mxu0
      %v1875 = vpop.f32.mrb[0].mxu0
      %v1876 = vadd.f32 0.0, %v1875
      %v1877 = vpop.f32.mrb[0].mxu0
      %1878 = vmatprep.mubr.bf16.mxu0 %v314
      %1879 = vmatmul.mubr.bf16.gmra.mrb[0].mxu0 %v477
      %v1880 = vpop.f32.mrb[0].mxu0
      %v1881 = vadd.f32 0.0, %v1880
      %v1882 = vpop.f32.mrb[0].mxu0
      %v1883 = vpop.f32.mrb[0].mxu0
      %v1884 = vadd.f32 0.0, %v1883
      %v1885 = vpop.f32.mrb[0].mxu0
      %1886 = vmatprep.mubr.bf16.mxu0 %v315
      %1887 = vmatmul.mubr.bf16.gmra.mrb[0].mxu0 %v478
      %v1888 = vpop.f32.mrb[0].mxu0
      %v1889 = vadd.f32 0.0, %v1888
      %v1890 = vpop.f32.mrb[0].mxu0
      %v1891 = vpop.f32.mrb[0].mxu0
      %v1892 = vadd.f32 0.0, %v1891
      %v1893 = vpop.f32.mrb[0].mxu0
      %1894 = vmatprep.mubr.bf16.mxu0 %v316
      %1895 = vmatmul.mubr.bf16.gmra.mrb[0].mxu0 %v479
      %v1896 = vpop.f32.mrb[0].mxu0
      %v1897 = vadd.f32 0.0, %v1896
      %v1898 = vpop.f32.mrb[0].mxu0
      %v1899 = vpop.f32.mrb[0].mxu0
      %v1900 = vadd.f32 0.0, %v1899
      %v1901 = vpop.f32.mrb[0].mxu0
      %1902 = vmatprep.mubr.bf16.mxu0 %v317
      %1903 = vmatmul.mubr.bf16.gmra.mrb[0].mxu0 %v480
      %v1904 = vpop.f32.mrb[0].mxu0
      %v1905 = vadd.f32 0.0, %v1904
      %v1906 = vpop.f32.mrb[0].mxu0
      %v1907 = vpop.f32.mrb[0].mxu0
      %v1908 = vadd.f32 0.0, %v1907
      %v1909 = vpop.f32.mrb[0].mxu0
      %1910 = vmatprep.mubr.bf16.mxu0 %v318
      %1911 = vmatmul.mubr.bf16.gmra.mrb[0].mxu0 %v481
      %v1912 = vpop.f32.mrb[0].mxu0
      %v1913 = vadd.f32 0.0, %v1912
      %v1914 = vpop.f32.mrb[0].mxu0
      %v1915 = vpop.f32.mrb[0].mxu0
      %v1916 = vadd.f32 0.0, %v1915
      %v1917 = vpop.f32.mrb[0].mxu0
      %1918 = vmatprep.mubr.bf16.mxu0 %v319
      %1919 = vmatmul.mubr.bf16.gmra.mrb[0].mxu0 %v482
      %v1920 = vpop.f32.mrb[0].mxu0
      %v1921 = vadd.f32 0.0, %v1920
      %v1922 = vpop.f32.mrb[0].mxu0
      %v1923 = vpop.f32.mrb[0].mxu0
      %v1924 = vadd.f32 0.0, %v1923
      %v1925 = vpop.f32.mrb[0].mxu0
      %1926 = vmatprep.mubr.bf16.mxu0 %v320
      %1927 = vmatmul.mubr.bf16.gmra.mrb[0].mxu0 %v483
      %v1928 = vpop.f32.mrb[0].mxu0
      %v1929 = vadd.f32 0.0, %v1928
      %v1930 = vpop.f32.mrb[0].mxu0
      %v1931 = vpop.f32.mrb[0].mxu0
      %v1932 = vadd.f32 0.0, %v1931
      %v1933 = vpop.f32.mrb[0].mxu0
      %1934 = vmatprep.mubr.bf16.mxu0 %v321
      %1935 = vmatmul.mubr.bf16.gmra.mrb[0].mxu0 %v484
      %v1936 = vpop.f32.mrb[0].mxu0
      %v1937 = vadd.f32 0.0, %v1936
      %v1938 = vpop.f32.mrb[0].mxu0
      %v1939 = vpop.f32.mrb[0].mxu0
      %v1940 = vadd.f32 0.0, %v1939
      %v1941 = vpop.f32.mrb[0].mxu0
      %1942 = vmatprep.mubr.bf16.mxu0 %v320
      %1943 = vmatmul.mubr.bf16.gmra.mrb[0].mxu0 %v483
      %v1944 = vpop.f32.mrb[0].mxu0
      %v1945 = vadd.f32 0.0, %v1944
      %v1946 = vpop.f32.mrb[0].mxu0
      %v1947 = vpop.f32.mrb[0].mxu0
      %v1948 = vadd.f32 0.0, %v1947
      %v1949 = vpop.f32.mrb[0].mxu0
      %1950 = vdwg.mxu0
      %1951 = vmatprep.subr.bf16.mxu0 0
      %1952 = vmatpush1.bf16.msra.mxu0 %v1758
      %1953 = vmatprep.subr.bf16.mxu0 0
      %1954 = vmatpush1.bf16.msra.mxu0 %v1759
      %1955 = vmatprep.subr.bf16.mxu0 0
      %1956 = vmatpush1.bf16.msra.mxu0 %v1760
      %1957 = vmatprep.subr.bf16.mxu0 0
      %1958 = vmatpush1.bf16.msra.mxu0 %v1761
      %1959 = vmatprep.subr.bf16.mxu0 0
      %1960 = vmatpush1.bf16.msra.mxu0 %v1762
      %1961 = vmatprep.subr.bf16.mxu0 0
      %1962 = vmatpush1.bf16.msra.mxu0 %v1763
      %1963 = vmatprep.subr.bf16.mxu0 0
      %1964 = vmatpush1.bf16.msra.mxu0 %v1764
      %1965 = vmatprep.subr.bf16.mxu0 0
      %1966 = vmatpush1.bf16.msra.mxu0 %v1765
      %1967 = vmatprep.subr.bf16.mxu0 0
      %1968 = vmatpush1.bf16.msra.mxu0 0
      %1969 = vmatprep.subr.bf16.mxu0 0
      %1970 = vmatpush1.bf16.msra.mxu0 0
      %1971 = vmatprep.subr.bf16.mxu0 0
      %1972 = vmatpush1.bf16.msra.mxu0 0
      %1973 = vmatprep.subr.bf16.mxu0 0
      %1974 = vmatpush1.bf16.msra.mxu0 0
      %1975 = vmatprep.subr.bf16.mxu0 0
      %1976 = vmatpush1.bf16.msra.mxu0 0
      %1977 = vmatprep.subr.bf16.mxu0 0
      %1978 = vmatpush1.bf16.msra.mxu0 0
      %1979 = vmatprep.subr.bf16.mxu0 0
      %1980 = vmatpush1.bf16.msra.mxu0 0
      %1981 = vmatprep.subr.bf16.mxu0 0
      %1982 = vmatpush1.bf16.msra.mxu0 0
      %1983 = vmatprep.mubr.bf16.mxu0 0
      %1984 = vmatmul.mubr.bf16.gmra.mrb[0].mxu0 %v552
      %v1985 = vpop.f32.mrb[0].mxu0
      %v1986 = vadd.f32 %v1825, %v1985
      %v1987 = vpop.f32.mrb[0].mxu0
      %v1988 = vpop.f32.mrb[0].mxu0
      %v1989 = vadd.f32 %v1828, %v1988
      %v1990 = vpop.f32.mrb[0].mxu0
      %1991 = vmatprep.mubr.bf16.mxu0 0
      %1992 = vmatmul.mubr.bf16.gmra.mrb[0].mxu0 %v554
      %v1993 = vpop.f32.mrb[0].mxu0
      %v1994 = vadd.f32 %v1833, %v1993
      %v1995 = vpop.f32.mrb[0].mxu0
      %v1996 = vpop.f32.mrb[0].mxu0
      %v1997 = vadd.f32 %v1836, %v1996
      %v1998 = vpop.f32.mrb[0].mxu0
      %1999 = vmatprep.mubr.bf16.mxu0 0
      %2000 = vmatmul.mubr.bf16.gmra.mrb[0].mxu0 %v555
      %v2001 = vpop.f32.mrb[0].mxu0
      %v2002 = vadd.f32 %v1841, %v2001
      %v2003 = vpop.f32.mrb[0].mxu0
      %v2004 = vpop.f32.mrb[0].mxu0
      %v2005 = vadd.f32 %v1844, %v2004
      %v2006 = vpop.f32.mrb[0].mxu0
      %2007 = vmatprep.mubr.bf16.mxu0 0
      %2008 = vmatmul.mubr.bf16.gmra.mrb[0].mxu0 %v556
      %v2009 = vpop.f32.mrb[0].mxu0
      %v2010 = vadd.f32 %v1849, %v2009
      %v2011 = vpop.f32.mrb[0].mxu0
      %v2012 = vpop.f32.mrb[0].mxu0
      %v2013 = vadd.f32 %v1852, %v2012
      %v2014 = vpop.f32.mrb[0].mxu0
      %2015 = vmatprep.mubr.bf16.mxu0 0
      %2016 = vmatmul.mubr.bf16.gmra.mrb[0].mxu0 %v557
      %v2017 = vpop.f32.mrb[0].mxu0
      %v2018 = vadd.f32 %v1857, %v2017
      %v2019 = vpop.f32.mrb[0].mxu0
      %v2020 = vpop.f32.mrb[0].mxu0
      %v2021 = vadd.f32 %v1860, %v2020
      %v2022 = vpop.f32.mrb[0].mxu0
      %2023 = vmatprep.mubr.bf16.mxu0 0
      %2024 = vmatmul.mubr.bf16.gmra.mrb[0].mxu0 %v558
      %v2025 = vpop.f32.mrb[0].mxu0
      %v2026 = vadd.f32 %v1865, %v2025
      %v2027 = vpop.f32.mrb[0].mxu0
      %v2028 = vpop.f32.mrb[0].mxu0
      %v2029 = vadd.f32 %v1868, %v2028
      %v2030 = vpop.f32.mrb[0].mxu0
      %2031 = vmatprep.mubr.bf16.mxu0 0
      %2032 = vmatmul.mubr.bf16.gmra.mrb[0].mxu0 %v559
      %v2033 = vpop.f32.mrb[0].mxu0
      %v2034 = vadd.f32 %v1873, %v2033
      %v2035 = vpop.f32.mrb[0].mxu0
      %v2036 = vpop.f32.mrb[0].mxu0
      %v2037 = vadd.f32 %v1876, %v2036
      %v2038 = vpop.f32.mrb[0].mxu0
      %2039 = vmatprep.mubr.bf16.mxu0 0
      %2040 = vmatmul.mubr.bf16.gmra.mrb[0].mxu0 %v560
      %v2041 = vpop.f32.mrb[0].mxu0
      %v2042 = vadd.f32 %v1881, %v2041
      %v2043 = vpop.f32.mrb[0].mxu0
      %v2044 = vpop.f32.mrb[0].mxu0
      %v2045 = vadd.f32 %v1884, %v2044
      %v2046 = vpop.f32.mrb[0].mxu0
      %2047 = vmatprep.mubr.bf16.mxu0 0
      %2048 = vmatmul.mubr.bf16.gmra.mrb[0].mxu0 %v561
      %v2049 = vpop.f32.mrb[0].mxu0
      %v2050 = vadd.f32 %v1889, %v2049
      %v2051 = vpop.f32.mrb[0].mxu0
      %v2052 = vpop.f32.mrb[0].mxu0
      %v2053 = vadd.f32 %v1892, %v2052
      %v2054 = vpop.f32.mrb[0].mxu0
      %2055 = vmatprep.mubr.bf16.mxu0 0
      %2056 = vmatmul.mubr.bf16.gmra.mrb[0].mxu0 %v562
      %v2057 = vpop.f32.mrb[0].mxu0
      %v2058 = vadd.f32 %v1897, %v2057
      %v2059 = vpop.f32.mrb[0].mxu0
      %v2060 = vpop.f32.mrb[0].mxu0
      %v2061 = vadd.f32 %v1900, %v2060
      %v2062 = vpop.f32.mrb[0].mxu0
      %2063 = vmatprep.mubr.bf16.mxu0 0
      %2064 = vmatmul.mubr.bf16.gmra.mrb[0].mxu0 %v563
      %v2065 = vpop.f32.mrb[0].mxu0
      %v2066 = vadd.f32 %v1905, %v2065
      %v2067 = vpop.f32.mrb[0].mxu0
      %v2068 = vpop.f32.mrb[0].mxu0
      %v2069 = vadd.f32 %v1908, %v2068
      %v2070 = vpop.f32.mrb[0].mxu0
      %2071 = vmatprep.mubr.bf16.mxu0 0
      %2072 = vmatmul.mubr.bf16.gmra.mrb[0].mxu0 %v564
      %v2073 = vpop.f32.mrb[0].mxu0
      %v2074 = vadd.f32 %v1913, %v2073
      %v2075 = vpop.f32.mrb[0].mxu0
      %v2076 = vpop.f32.mrb[0].mxu0
      %v2077 = vadd.f32 %v1916, %v2076
      %v2078 = vpop.f32.mrb[0].mxu0
      %2079 = vmatprep.mubr.bf16.mxu0 0
      %2080 = vmatmul.mubr.bf16.gmra.mrb[0].mxu0 %v565
      %v2081 = vpop.f32.mrb[0].mxu0
      %v2082 = vadd.f32 %v1921, %v2081
      %v2083 = vpop.f32.mrb[0].mxu0
      %v2084 = vpop.f32.mrb[0].mxu0
      %v2085 = vadd.f32 %v1924, %v2084
      %v2086 = vpop.f32.mrb[0].mxu0
      %2087 = vmatprep.mubr.bf16.mxu0 0
      %2088 = vmatmul.mubr.bf16.gmra.mrb[0].mxu0 %v566
      %v2089 = vpop.f32.mrb[0].mxu0
      %v2090 = vadd.f32 %v1929, %v2089
      %v2091 = vpop.f32.mrb[0].mxu0
      %v2092 = vpop.f32.mrb[0].mxu0
      %v2093 = vadd.f32 %v1932, %v2092
      %v2094 = vpop.f32.mrb[0].mxu0
      %2095 = vmatprep.mubr.bf16.mxu0 0
      %2096 = vmatmul.mubr.bf16.gmra.mrb[0].mxu0 %v567
      %v2097 = vpop.f32.mrb[0].mxu0
      %v2098 = vadd.f32 %v1937, %v2097
      %v2099 = vpop.f32.mrb[0].mxu0
      %v2100 = vpop.f32.mrb[0].mxu0
      %v2101 = vadd.f32 %v1940, %v2100
      %v2102 = vpop.f32.mrb[0].mxu0
      %2103 = vmatprep.mubr.bf16.mxu0 0
      %2104 = vmatmul.mubr.bf16.gmra.mrb[0].mxu0 %v566
      %v2105 = vpop.f32.mrb[0].mxu0
      %v2106 = vadd.f32 %v1945, %v2105
      %v2107 = vpop.f32.mrb[0].mxu0
      %v2108 = vpop.f32.mrb[0].mxu0
      %v2109 = vadd.f32 %v1948, %v2108
      %v2110 = vpop.f32.mrb[0].mxu0
      %2111 = vdwg.mxu0
      %v2112 = vadd.f32 %v1471, %v1986
      %v2113 = vadd.f32 %v1474, %v1989
      %v2114 = vadd.f32 %v1479, %v1994
      %v2115 = vadd.f32 %v1482, %v1997
      %v2116 = vadd.f32 %v1487, %v2002
      %v2117 = vadd.f32 %v1490, %v2005
      %v2118 = vadd.f32 %v1495, %v2010
      %v2119 = vadd.f32 %v1498, %v2013
      %v2120 = vadd.f32 %v1503, %v2018
      %v2121 = vadd.f32 %v1506, %v2021
      %v2122 = vadd.f32 %v1511, %v2026
      %v2123 = vadd.f32 %v1514, %v2029
      %v2124 = vadd.f32 %v1519, %v2034
      %v2125 = vadd.f32 %v1522, %v2037
      %v2126 = vadd.f32 %v1527, %v2042
      %v2127 = vadd.f32 %v1530, %v2045
      %v2128 = vadd.f32 %v1535, %v2050
      %v2129 = vadd.f32 %v1538, %v2053
      %v2130 = vadd.f32 %v1543, %v2058
      %v2131 = vadd.f32 %v1546, %v2061
      %v2132 = vadd.f32 %v1551, %v2066
      %v2133 = vadd.f32 %v1554, %v2069
      %v2134 = vadd.f32 %v1559, %v2074
      %v2135 = vadd.f32 %v1562, %v2077
      %v2136 = vadd.f32 %v1567, %v2082
      %v2137 = vadd.f32 %v1570, %v2085
      %v2138 = vadd.f32 %v1575, %v2090
      %v2139 = vadd.f32 %v1578, %v2093
      %v2140 = vadd.f32 %v1583, %v2098
      %v2141 = vadd.f32 %v1586, %v2101
      %v2142 = vadd.f32 %v1591, %v2106
      %v2143 = vadd.f32 %v1594, %v2109
      %v2144 = vld [vmem:[%s2] sm:$0x1]
      %v2146 = vlaneseq
      %v2147 = vshrl.u32 %v2146, 7
      %v2148 = vsub.s32 0, %v2147
      %v2149 = vrot.slane %v2144, %v2148
      %v2151 = vadd.f32 %v2112, %v2149
      %v2152 = vadd.f32 %v2113, %v2149
      %v2153 = vadd.f32 %v2114, %v2149
      %v2154 = vadd.f32 %v2115, %v2149
      %v2155 = vadd.f32 %v2116, %v2149
      %v2156 = vadd.f32 %v2117, %v2149
      %v2157 = vadd.f32 %v2118, %v2149
      %v2158 = vadd.f32 %v2119, %v2149
      %v2159 = vadd.f32 %v2120, %v2149
      %v2160 = vadd.f32 %v2121, %v2149
      %v2161 = vadd.f32 %v2122, %v2149
      %v2162 = vadd.f32 %v2123, %v2149
      %v2163 = vadd.f32 %v2124, %v2149
      %v2164 = vadd.f32 %v2125, %v2149
      %v2165 = vadd.f32 %v2126, %v2149
      %v2166 = vadd.f32 %v2127, %v2149
      %v2167 = vadd.f32 %v2128, %v2149
      %v2168 = vadd.f32 %v2129, %v2149
      %v2169 = vadd.f32 %v2130, %v2149
      %v2170 = vadd.f32 %v2131, %v2149
      %v2171 = vadd.f32 %v2132, %v2149
      %v2172 = vadd.f32 %v2133, %v2149
      %v2173 = vadd.f32 %v2134, %v2149
      %v2174 = vadd.f32 %v2135, %v2149
      %v2175 = vadd.f32 %v2136, %v2149
      %v2176 = vadd.f32 %v2137, %v2149
      %v2177 = vadd.f32 %v2138, %v2149
      %v2178 = vadd.f32 %v2139, %v2149
      %v2179 = vadd.f32 %v2140, %v2149
      %v2180 = vadd.f32 %v2141, %v2149
      %v2181 = vadd.f32 %v2142, %v2149
      %v2182 = vadd.f32 %v2143, %v2149
      %v2183 = vmul.f32 %v2151, 0.2
      %v2184 = vmul.f32 %v2152, 0.2
      %v2185 = vmul.f32 %v2153, 0.2
      %v2186 = vmul.f32 %v2154, 0.2
      %v2187 = vmul.f32 %v2155, 0.2
      %v2188 = vmul.f32 %v2156, 0.2
      %v2189 = vmul.f32 %v2157, 0.2
      %v2190 = vmul.f32 %v2158, 0.2
      %v2191 = vmul.f32 %v2159, 0.2
      %v2192 = vmul.f32 %v2160, 0.2
      %v2193 = vmul.f32 %v2161, 0.2
      %v2194 = vmul.f32 %v2162, 0.2
      %v2195 = vmul.f32 %v2163, 0.2
      %v2196 = vmul.f32 %v2164, 0.2
      %v2197 = vmul.f32 %v2165, 0.2
      %v2198 = vmul.f32 %v2166, 0.2
      %v2199 = vmul.f32 %v2167, 0.2
      %v2200 = vmul.f32 %v2168, 0.2
      %v2201 = vmul.f32 %v2169, 0.2
      %v2202 = vmul.f32 %v2170, 0.2
      %v2203 = vmul.f32 %v2171, 0.2
      %v2204 = vmul.f32 %v2172, 0.2
      %v2205 = vmul.f32 %v2173, 0.2
      %v2206 = vmul.f32 %v2174, 0.2
      %v2207 = vmul.f32 %v2175, 0.2
      %v2208 = vmul.f32 %v2176, 0.2
      %v2209 = vmul.f32 %v2177, 0.2
      %v2210 = vmul.f32 %v2178, 0.2
      %v2211 = vmul.f32 %v2179, 0.2
      %v2212 = vmul.f32 %v2180, 0.2
      %v2213 = vmul.f32 %v2181, 0.2
      %v2214 = vmul.f32 %v2182, 0.2
      %v2215 = vmax.f32 %v2151, %v2183
      %v2216 = vmax.f32 %v2152, %v2184
      %v2217 = vmax.f32 %v2153, %v2185
      %v2218 = vmax.f32 %v2154, %v2186
      %v2219 = vmax.f32 %v2155, %v2187
      %v2220 = vmax.f32 %v2156, %v2188
      %v2221 = vmax.f32 %v2157, %v2189
      %v2222 = vmax.f32 %v2158, %v2190
      %v2223 = vmax.f32 %v2159, %v2191
      %v2224 = vmax.f32 %v2160, %v2192
      %v2225 = vmax.f32 %v2161, %v2193
      %v2226 = vmax.f32 %v2162, %v2194
      %v2227 = vmax.f32 %v2163, %v2195
      %v2228 = vmax.f32 %v2164, %v2196
      %v2229 = vmax.f32 %v2165, %v2197
      %v2230 = vmax.f32 %v2166, %v2198
      %v2231 = vmax.f32 %v2167, %v2199
      %v2232 = vmax.f32 %v2168, %v2200
      %v2233 = vmax.f32 %v2169, %v2201
      %v2234 = vmax.f32 %v2170, %v2202
      %v2235 = vmax.f32 %v2171, %v2203
      %v2236 = vmax.f32 %v2172, %v2204
      %v2237 = vmax.f32 %v2173, %v2205
      %v2238 = vmax.f32 %v2174, %v2206
      %v2239 = vmax.f32 %v2175, %v2207
      %v2240 = vmax.f32 %v2176, %v2208
      %v2241 = vmax.f32 %v2177, %v2209
      %v2242 = vmax.f32 %v2178, %v2210
      %v2243 = vmax.f32 %v2179, %v2211
      %v2244 = vmax.f32 %v2180, %v2212
      %v2245 = vmax.f32 %v2181, %v2213
      %v2246 = vmax.f32 %v2182, %v2214
      %2247 = vst [vmem:[%s204] sm:$0xff] %v2215
      %2248 = vst [vmem:[%s204 + $0x8] sm:$0xff] %v2216
      %2249 = vst [vmem:[%s204 + $0x10] sm:$0xff] %v2217
      %2250 = vst [vmem:[%s204 + $0x18] sm:$0xff] %v2218
      %2251 = vst [vmem:[%s204 + $0x20] sm:$0xff] %v2219
      %2252 = vst [vmem:[%s204 + $0x28] sm:$0xff] %v2220
      %2253 = vst [vmem:[%s204 + $0x30] sm:$0xff] %v2221
      %2254 = vst [vmem:[%s204 + $0x38] sm:$0xff] %v2222
      %2255 = vst [vmem:[%s204 + $0x40] sm:$0xff] %v2223
      %2256 = vst [vmem:[%s204 + $0x48] sm:$0xff] %v2224
      %2257 = vst [vmem:[%s204 + $0x50] sm:$0xff] %v2225
      %2258 = vst [vmem:[%s204 + $0x58] sm:$0xff] %v2226
      %2259 = vst [vmem:[%s204 + $0x60] sm:$0xff] %v2227
      %2260 = vst [vmem:[%s204 + $0x68] sm:$0xff] %v2228
      %2261 = vst [vmem:[%s204 + $0x70] sm:$0xff] %v2229
      %2262 = vst [vmem:[%s204 + $0x78] sm:$0xff] %v2230
      %2263 = vst [vmem:[%s204 + $0x80] sm:$0xff] %v2231
      %2264 = vst [vmem:[%s204 + $0x88] sm:$0xff] %v2232
      %2265 = vst [vmem:[%s204 + $0x90] sm:$0xff] %v2233
      %2266 = vst [vmem:[%s204 + $0x98] sm:$0xff] %v2234
      %2267 = vst [vmem:[%s204 + $0xa0] sm:$0xff] %v2235
      %2268 = vst [vmem:[%s204 + $0xa8] sm:$0xff] %v2236
      %2269 = vst [vmem:[%s204 + $0xb0] sm:$0xff] %v2237
      %2270 = vst [vmem:[%s204 + $0xb8] sm:$0xff] %v2238
      %2271 = vst [vmem:[%s204 + $0xc0] sm:$0xff] %v2239
      %2272 = vst [vmem:[%s204 + $0xc8] sm:$0xff] %v2240
      %2273 = vst [vmem:[%s204 + $0xd0] sm:$0xff] %v2241
      %2274 = vst [vmem:[%s204 + $0xd8] sm:$0xff] %v2242
      %2275 = vst [vmem:[%s204 + $0xe0] sm:$0xff] %v2243
      %2276 = vst [vmem:[%s204 + $0xe8] sm:$0xff] %v2244
      %2277 = vst [vmem:[%s204 + $0xf0] sm:$0xff] %v2245
      %2278 = vst [vmem:[%s204 + $0xf8] sm:$0xff] %v2246
      %v2279 = vadd.f32 %v2215, %v2216
      %v2280 = vadd.f32 %v2279, %v2217
      %v2281 = vadd.f32 %v2280, %v2218
      %v2282 = vadd.f32 %v2281, %v2219
      %v2283 = vadd.f32 %v2282, %v2220
      %v2284 = vadd.f32 %v2283, %v2221
      %v2285 = vadd.f32 %v2284, %v2222
      %v2286 = vadd.f32 %v2285, %v2223
      %v2287 = vadd.f32 %v2286, %v2224
      %v2288 = vadd.f32 %v2287, %v2225
      %v2289 = vadd.f32 %v2288, %v2226
      %v2290 = vadd.f32 %v2289, %v2227
      %v2291 = vadd.f32 %v2290, %v2228
      %v2292 = vadd.f32 %v2291, %v2229
      %v2293 = vadd.f32 %v2292, %v2230
      %v2294 = vadd.f32 %v2293, %v2231
      %v2295 = vadd.f32 %v2294, %v2232
      %v2296 = vadd.f32 %v2295, %v2233
      %v2297 = vadd.f32 %v2296, %v2234
      %v2298 = vadd.f32 %v2297, %v2235
      %v2299 = vadd.f32 %v2298, %v2236
      %v2300 = vadd.f32 %v2299, %v2237
      %v2301 = vadd.f32 %v2300, %v2238
      %v2302 = vadd.f32 %v2301, %v2239
      %v2303 = vadd.f32 %v2302, %v2240
      %v2304 = vadd.f32 %v2303, %v2241
      %v2305 = vadd.f32 %v2304, %v2242
      %v2306 = vadd.f32 %v2305, %v2243
      %v2307 = vadd.f32 %v2306, %v2244
      %v2308 = vadd.f32 %v2307, %v2245
      %v2309 = vadd.f32 %v2308, %v2246
      %v2310 = vrot.slane %v2309, 4
      %v2311 = vadd.f32 %v2309, %v2310
      %v2312 = vrot.slane %v2311, 2
      %v2313 = vadd.f32 %v2311, %v2312
      %v2314 = vrot.slane %v2313, 1
      %v2315 = vadd.f32 %v2313, %v2314
      %2316 = vst [vmem:[%s208] sm:$0x1] %v2315
      %v2317 = vmul.f32 %v2215, %v2215
      %v2318 = vmul.f32 %v2216, %v2216
      %v2319 = vmul.f32 %v2217, %v2217
      %v2320 = vmul.f32 %v2218, %v2218
      %v2321 = vmul.f32 %v2219, %v2219
      %v2322 = vmul.f32 %v2220, %v2220
      %v2323 = vmul.f32 %v2221, %v2221
      %v2324 = vmul.f32 %v2222, %v2222
      %v2325 = vmul.f32 %v2223, %v2223
      %v2326 = vmul.f32 %v2224, %v2224
      %v2327 = vmul.f32 %v2225, %v2225
      %v2328 = vmul.f32 %v2226, %v2226
      %v2329 = vmul.f32 %v2227, %v2227
      %v2330 = vmul.f32 %v2228, %v2228
      %v2331 = vmul.f32 %v2229, %v2229
      %v2332 = vmul.f32 %v2230, %v2230
      %v2333 = vmul.f32 %v2231, %v2231
      %v2334 = vmul.f32 %v2232, %v2232
      %v2335 = vmul.f32 %v2233, %v2233
      %v2336 = vmul.f32 %v2234, %v2234
      %v2337 = vmul.f32 %v2235, %v2235
      %v2338 = vmul.f32 %v2236, %v2236
      %v2339 = vmul.f32 %v2237, %v2237
      %v2340 = vmul.f32 %v2238, %v2238
      %v2341 = vmul.f32 %v2239, %v2239
      %v2342 = vmul.f32 %v2240, %v2240
      %v2343 = vmul.f32 %v2241, %v2241
      %v2344 = vmul.f32 %v2242, %v2242
      %v2345 = vmul.f32 %v2243, %v2243
      %v2346 = vmul.f32 %v2244, %v2244
      %v2347 = vmul.f32 %v2245, %v2245
      %v2348 = vmul.f32 %v2246, %v2246
      %v2349 = vadd.f32 %v2317, %v2318
      %v2350 = vadd.f32 %v2349, %v2319
      %v2351 = vadd.f32 %v2350, %v2320
      %v2352 = vadd.f32 %v2351, %v2321
      %v2353 = vadd.f32 %v2352, %v2322
      %v2354 = vadd.f32 %v2353, %v2323
      %v2355 = vadd.f32 %v2354, %v2324
      %v2356 = vadd.f32 %v2355, %v2325
      %v2357 = vadd.f32 %v2356, %v2326
      %v2358 = vadd.f32 %v2357, %v2327
      %v2359 = vadd.f32 %v2358, %v2328
      %v2360 = vadd.f32 %v2359, %v2329
      %v2361 = vadd.f32 %v2360, %v2330
      %v2362 = vadd.f32 %v2361, %v2331
      %v2363 = vadd.f32 %v2362, %v2332
      %v2364 = vadd.f32 %v2363, %v2333
      %v2365 = vadd.f32 %v2364, %v2334
      %v2366 = vadd.f32 %v2365, %v2335
      %v2367 = vadd.f32 %v2366, %v2336
      %v2368 = vadd.f32 %v2367, %v2337
      %v2369 = vadd.f32 %v2368, %v2338
      %v2370 = vadd.f32 %v2369, %v2339
      %v2371 = vadd.f32 %v2370, %v2340
      %v2372 = vadd.f32 %v2371, %v2341
      %v2373 = vadd.f32 %v2372, %v2342
      %v2374 = vadd.f32 %v2373, %v2343
      %v2375 = vadd.f32 %v2374, %v2344
      %v2376 = vadd.f32 %v2375, %v2345
      %v2377 = vadd.f32 %v2376, %v2346
      %v2378 = vadd.f32 %v2377, %v2347
      %v2379 = vadd.f32 %v2378, %v2348
      %v2380 = vrot.slane %v2379, 4
      %v2381 = vadd.f32 %v2379, %v2380
      %v2382 = vrot.slane %v2381, 2
      %v2383 = vadd.f32 %v2381, %v2382
      %v2384 = vrot.slane %v2383, 1
      %v2385 = vadd.f32 %v2383, %v2384
      %2386 = vst [vmem:[%s208 + $0x1] sm:$0x1] %v2385
      %p2387 = scmp.lt.s32.totalorder %s16, 1
      %s2388 = scalar_select %p2387, %s16, 1
      %s2389 = smul.addr %s2388, 32
      %s2390 = smul.addr %s2389, 8
      %s2391 = scalar_lea.vmem %s3, %s2390
      %p2392 = scmp.lt.s32.totalorder %s16, 1
      %s2393 = scalar_select %p2392, %s16, 1
      %s2394 = smul.addr %s2393, 2
      %s2395 = scalar_lea.vmem %s4, %s2394
      // Predicated region
      $region33: #{residual_forward.3} parent=31 // pred_check
        %p2396 = pneg %p102
      $region34: #{residual_forward.3} parent=31 // pred_check_branch
        %2398 = sbr.rel (%p2396) target = $region36
      $region35: #{residual_forward.3} parent=31 // pred_region
        _
      $region36: #{residual_forward.3} parent=31 // pred_fallthru
        _
      // Predicated region
      $region37: #{residual_forward.3} parent=31 // pred_check
        %p2399 = pneg %p128
      $region38: #{residual_forward.3} parent=31 // pred_check_branch
        %2401 = sbr.rel (%p2399) target = $region40
      $region39: #{residual_forward.3} parent=31 // pred_region
        _
      $region40: #{residual_forward.3} parent=31 // pred_fallthru
        _
    $region32: #{residual_forward.3} parent=5 // pred_fallthru
      _
    %p2402 = scmp.le.s32.totalorder 2, %s11
    // Predicated region
    $region41: #{residual_forward.3} parent=5 // pred_check
      %p2403 = pneg %p2402
    $region42: #{residual_forward.3} parent=5 // pred_check_branch
      %2405 = sbr.rel (%p2403) target = $region44
    $region43: #{residual_forward.3} parent=5 // pred_region
      %s2406 = ssub.s32 %s11, 2
      // Predicated region
      $region45: #{residual_forward.3} parent=43 // pred_check
        %p2407 = pneg %p108
      $region46: #{residual_forward.3} parent=43 // pred_check_branch
        %2409 = sbr.rel (%p2407) target = $region48
      $region47: #{residual_forward.3} parent=43 // pred_region
        %p2410 = scmp.lt.s32.totalorder %s17, 1
        %s2411 = scalar_select %p2410, %s17, 1
        %s2412 = smul.addr %s2411, 32
        %s2413 = smul.addr %s2412, 8
        %s2414 = scalar_lea.vmem %s3, %s2413
      $region48: #{residual_forward.3} parent=43 // pred_fallthru
        _
      // Predicated region
      $region49: #{residual_forward.3} parent=43 // pred_check
        %p2415 = pneg %p134
      $region50: #{residual_forward.3} parent=43 // pred_check_branch
        %2417 = sbr.rel (%p2415) target = $region52
      $region51: #{residual_forward.3} parent=43 // pred_region
        %p2418 = scmp.lt.s32.totalorder %s17, 1
        %s2419 = scalar_select %p2418, %s17, 1
        %s2420 = smul.addr %s2419, 2
        %s2421 = scalar_lea.vmem %s4, %s2420
      $region52: #{residual_forward.3} parent=43 // pred_fallthru
        _
    $region44: #{residual_forward.3} parent=5 // pred_fallthru
      _
  $region6: #{residual_forward.3} parent=0 // loop_footer
    %s15 = sadd.s32 1, %s11
  $region7: #{residual_forward.3} parent=0 // loop_footer_branch
    %10 = sbr.rel target = $region3
  $region8: #{residual_forward.3} parent=0 // loop_exit
    _

// kernel: residual_forward.4
$region0: #{residual_forward.4}
  #allocation0 [shape = 'u32[]', space=smem, size = 0x4, offset = 0x4, fixed_abs, tag = 'smem constant byte address 0x4 - core index']
  #allocation1 [shape = 'u32[144,128]{1,0:T(1,128)}', space=vmem, size = 0x12000, scoped, tag = 'internal scratch']
  %s0 = inlined_call_operand.vmem [shape: f32[2,256,128], index: 0, kind: input, shape index: {}]
  %s1 = inlined_call_operand.vmem [shape: bf16[3,384,128], index: 1, kind: input, shape index: {}]
  %s2 = inlined_call_operand.vmem [shape: f32[1,128], index: 2, kind: input, shape index: {}]
  %s3 = inlined_call_operand.vmem [shape: f32[2,256,128], index: 3, kind: output, shape index: {0}]
  %s4 = inlined_call_operand.vmem [shape: f32[2,2,128], index: 4, kind: output, shape index: {1}]
  %5 = xla_tuple %s3, %s4
  %s6 = sld [smem:[#allocation0]]
  $region53: #{residual_forward.4} parent=0
    _
  %s8 = ssub.s32 1, %s6
  %s9 = scalar_select 0, %s8, %s6
  loop: start=0, step=1, limit=4
  $region2: #{residual_forward.4} parent=0 // loop_pre_header
    _
  $region3: #{residual_forward.4} parent=0 // loop_header
    %s11 = sphi 0, %s15
    %p12 = scmp.ge.s32.totalorder %s11, 4
    %s21 = sphi 0, %s23
    %s24 = sphi 0, %s21
    %s25 = sphi 0, %s24
    %s41 = sphi 0, %s25
    %s45 = sphi 0, %s45
    %s47 = sphi 0, %s45
    %s48 = sphi 0, %s47
    %s62 = sphi 0, %s48
    %s66 = sphi 0, %s66
    %s68 = sphi 0, %s66
    %s69 = sphi 0, %s68
    %s83 = sphi 0, %s69
    %s89 = sphi 0, %s91
    %s92 = sphi 0, %s89
    %s93 = sphi 0, %s92
    %s109 = sphi 0, %s93
    %s115 = sphi 0, %s117
    %s118 = sphi 0, %s115
    %s119 = sphi 0, %s118
    %s135 = sphi 0, %s119
  $region4: #{residual_forward.4} parent=0 // loop_header_branch
    %14 = sbr.rel (%p12) target = $region8
  $region5: #{residual_forward.4} parent=0 // loop_body
    %s16 = ssub.s32 %s11, 1
    %s17 = ssub.s32 %s11, 2
    %s18 = sadd.s32 %s11, 1
    %s19 = ssub.s32 %s11, %s18
    %p20 = scmp.eq.s32.totalorder %s19, 0
    %s22 = sadd.s32 %s21, 1
    %s23 = scalar_select %p20, %s21, %s22
    %p26 = pneg %p20
    %p27 = scmp.eq.s32.totalorder %s11, 1
    %p28 = por %p26, %p27
    %p29 = scmp.ne.s32.totalorder %s21, %s24
    %p30 = scmp.eq.s32.totalorder %s11, 0
    %p31 = por %p29, %p30
    %p32 = scmp.ne.s32.totalorder %s21, %s24
    %p33 = scmp.eq.s32.totalorder %s16, 1
    %p34 = por %p32, %p33
    %p35 = scmp.ne.s32.totalorder %s24, %s25
    %p36 = scmp.eq.s32.totalorder %s16, 0
    %p37 = por %p35, %p36
    %p38 = scmp.ne.s32.totalorder %s24, %s25
    %p39 = scmp.eq.s32.totalorder %s17, 1
    %p40 = por %p38, %p39
    %p42 = scmp.ne.s32.totalorder %s25, %s41
    %p43 = scmp.eq.s32.totalorder %s17, 0
    %p44 = por %p42, %p43
    %s46 = sadd.s32 %s45, 1
    %p49 = scmp.eq.s32.totalorder %s11, 1
    %p50 = scmp.ne.s32.totalorder %s45, %s47
    %p51 = scmp.eq.s32.totalorder %s11, 0
    %p52 = por %p50, %p51
    %p53 = scmp.ne.s32.totalorder %s45, %s47
    %p54 = scmp.eq.s32.totalorder %s16, 1
    %p55 = por %p53, %p54
    %p56 = scmp.ne.s32.totalorder %s47, %s48
    %p57 = scmp.eq.s32.totalorder %s16, 0
    %p58 = por %p56, %p57
    %p59 = scmp.ne.s32.totalorder %s47, %s48
    %p60 = scmp.eq.s32.totalorder %s17, 1
    %p61 = por %p59, %p60
    %p63 = scmp.ne.s32.totalorder %s48, %s62
    %p64 = scmp.eq.s32.totalorder %s17, 0
    %p65 = por %p63, %p64
    %s67 = sadd.s32 %s66, 1
    %p70 = scmp.eq.s32.totalorder %s11, 1
    %p71 = scmp.ne.s32.totalorder %s66, %s68
    %p72 = scmp.eq.s32.totalorder %s11, 0
    %p73 = por %p71, %p72
    %p74 = scmp.ne.s32.totalorder %s66, %s68
    %p75 = scmp.eq.s32.totalorder %s16, 1
    %p76 = por %p74, %p75
    %p77 = scmp.ne.s32.totalorder %s68, %s69
    %p78 = scmp.eq.s32.totalorder %s16, 0
    %p79 = por %p77, %p78
    %p80 = scmp.ne.s32.totalorder %s68, %s69
    %p81 = scmp.eq.s32.totalorder %s17, 1
    %p82 = por %p80, %p81
    %p84 = scmp.ne.s32.totalorder %s69, %s83
    %p85 = scmp.eq.s32.totalorder %s17, 0
    %p86 = por %p84, %p85
    %s87 = ssub.s32 %s11, %s18
    %p88 = scmp.eq.s32.totalorder %s87, 0
    %s90 = sadd.s32 %s89, 1
    %s91 = scalar_select %p88, %s89, %s90
    %p94 = pneg %p88
    %p95 = scmp.eq.s32.totalorder %s11, 1
    %p96 = por %p94, %p95
    %p97 = scmp.ne.s32.totalorder %s89, %s92
    %p98 = scmp.eq.s32.totalorder %s11, 0
    %p99 = por %p97, %p98
    %p100 = scmp.ne.s32.totalorder %s89, %s92
    %p101 = scmp.eq.s32.totalorder %s16, 1
    %p102 = por %p100, %p101
    %p103 = scmp.ne.s32.totalorder %s92, %s93
    %p104 = scmp.eq.s32.totalorder %s16, 0
    %p105 = por %p103, %p104
    %p106 = scmp.ne.s32.totalorder %s92, %s93
    %p107 = scmp.eq.s32.totalorder %s17, 1
    %p108 = por %p106, %p107
    %p110 = scmp.ne.s32.totalorder %s93, %s109
    %p111 = scmp.eq.s32.totalorder %s17, 0
    %p112 = por %p110, %p111
    %s113 = ssub.s32 %s11, %s18
    %p114 = scmp.eq.s32.totalorder %s113, 0
    %s116 = sadd.s32 %s115, 1
    %s117 = scalar_select %p114, %s115, %s116
    %p120 = pneg %p114
    %p121 = scmp.eq.s32.totalorder %s11, 1
    %p122 = por %p120, %p121
    %p123 = scmp.ne.s32.totalorder %s115, %s118
    %p124 = scmp.eq.s32.totalorder %s11, 0
    %p125 = por %p123, %p124
    %p126 = scmp.ne.s32.totalorder %s115, %s118
    %p127 = scmp.eq.s32.totalorder %s16, 1
    %p128 = por %p126, %p127
    %p129 = scmp.ne.s32.totalorder %s118, %s119
    %p130 = scmp.eq.s32.totalorder %s16, 0
    %p131 = por %p129, %p130
    %p132 = scmp.ne.s32.totalorder %s118, %s119
    %p133 = scmp.eq.s32.totalorder %s17, 1
    %p134 = por %p132, %p133
    %p136 = scmp.ne.s32.totalorder %s119, %s135
    %p137 = scmp.eq.s32.totalorder %s17, 0
    %p138 = por %p136, %p137
    %p139 = scmp.le.s32.totalorder 1, %s11
    %p140 = scmp.lt.s32.totalorder %s11, 3
    %p141 = pnand %p139, %p140
    %p142 = pneg %p141
    // Predicated region
    $region9: #{residual_forward.4} parent=5 // pred_check
      _
    $region10: #{residual_forward.4} parent=5 // pred_check_branch
      %144 = sbr.rel (%p141) target = $region12
    $region11: #{residual_forward.4} parent=5 // pred_region
      %s145 = ssub.s32 %s11, 1
      // Predicated region
      $region13: #{residual_forward.4} parent=11 // pred_check
        %p146 = pneg %p58
      $region14: #{residual_forward.4} parent=11 // pred_check_branch
        %148 = sbr.rel (%p146) target = $region16
      $region15: #{residual_forward.4} parent=11 // pred_region
        _
      $region16: #{residual_forward.4} parent=11 // pred_fallthru
        _
      // Predicated region
      $region17: #{residual_forward.4} parent=11 // pred_check
        %p149 = pneg %p79
      $region18: #{residual_forward.4} parent=11 // pred_check_branch
        %151 = sbr.rel (%p149) target = $region20
      $region19: #{residual_forward.4} parent=11 // pred_region
        _
      $region20: #{residual_forward.4} parent=11 // pred_fallthru
        _
    $region12: #{residual_forward.4} parent=5 // pred_fallthru
      _
    %p152 = scmp.lt.s32.totalorder %s11, 2
    // Predicated region
    $region21: #{residual_forward.4} parent=5 // pred_check
      %p153 = pneg %p152
    $region22: #{residual_forward.4} parent=5 // pred_check_branch
      %155 = sbr.rel (%p153) target = $region24
    $region23: #{residual_forward.4} parent=5 // pred_region
      // Predicated region
      $region25: #{residual_forward.4} parent=23 // pred_check
        %p156 = pneg %p31
      $region26: #{residual_forward.4} parent=23 // pred_check_branch
        %158 = sbr.rel (%p156) target = $region28
      $region27: #{residual_forward.4} parent=23 // pred_region
        %p159 = scmp.lt.s32.totalorder %s11, 1
        %s160 = scalar_select %p159, %s11, 1
        %s161 = smul.addr %s160, 32
        %s162 = smul.addr %s161, 8
        %s163 = scalar_lea.vmem %s0, %s162
      $region28: #{residual_forward.4} parent=23 // pred_fallthru
        _
    $region24: #{residual_forward.4} parent=5 // pred_fallthru
      _
    %p164 = scmp.le.s32.totalorder 1, %s11
    %p165 = scmp.lt.s32.totalorder %s11, 3
    %p166 = pnand %p164, %p165
    %p167 = pneg %p166
    // Predicated region
    $region29: #{residual_forward.4} parent=5 // pred_check
      _
    $region30: #{residual_forward.4} parent=5 // pred_check_branch
      %169 = sbr.rel (%p166) target = $region32
    $region31: #{residual_forward.4} parent=5 // pred_region
      %s170 = ssub.s32 %s11, 1
      %p171 = scmp.lt.s32.totalorder %s16, 1
      %s172 = scalar_select %p171, %s16, 1
      %s173 = smul.addr %s172, 32
      %s174 = smul.addr %s173, 8
      %s175 = scalar_lea.vmem %s0, %s174
      %p176 = pneg %p37
      %p177 = pneg %p34
      %p178 = pneg %p58
      %p179 = pneg %p55
      %p180 = pneg %p79
      %p181 = pneg %p76
      %p182 = pneg %p105
      %p183 = pneg %p102
      %p184 = scmp.lt.s32.totalorder %s16, 1
      %s185 = scalar_select %p184, %s16, 1
      %s186 = smul.addr %s185, 32
      %s187 = smul.addr %s186, 8
      %s188 = scalar_lea.vmem %s3, %s187
      %p189 = pneg %p131
      %p190 = pneg %p128
      %p191 = scmp.lt.s32.totalorder %s16, 1
      %s192 = scalar_select %p191, %s16, 1
      %s193 = smul.addr %s192, 2
      %s194 = scalar_lea.vmem %s4, %s193
      %p195 = scmp.lt.s32.totalorder %s16, 1
      %s196 = scalar_select %p195, %s16, 1
      %s197 = smul.addr %s196, 32
      %s198 = smul.addr %s197, 8
      %s199 = scalar_lea.vmem %s0, %s198
      %p200 = scmp.lt.s32.totalorder %s16, 1
      %s201 = scalar_select %p200, %s16, 1
      %s202 = smul.addr %s201, 32
      %s203 = smul.addr %s202, 8
      %s204 = scalar_lea.vmem %s3, %s203
      %p205 = scmp.lt.s32.totalorder %s16, 1
      %s206 = scalar_select %p205, %s16, 1
      %s207 = smul.addr %s206, 2
      %s208 = scalar_lea.vmem %s4, %s207
      %v210 = vld [vmem:[%s199] sm:$0xff]
      %v211 = vld [vmem:[%s199 + $0x8] sm:$0xff]
      %v212 = vld [vmem:[%s199 + $0x10] sm:$0xff]
      %v213 = vld [vmem:[%s199 + $0x18] sm:$0xff]
      %v214 = vld [vmem:[%s199 + $0x20] sm:$0xff]
      %v215 = vld [vmem:[%s199 + $0x28] sm:$0xff]
      %v216 = vld [vmem:[%s199 + $0x30] sm:$0xff]
      %v217 = vld [vmem:[%s199 + $0x38] sm:$0xff]
      %v218 = vld [vmem:[%s199 + $0x40] sm:$0xff]
      %v219 = vld [vmem:[%s199 + $0x48] sm:$0xff]
      %v220 = vld [vmem:[%s199 + $0x50] sm:$0xff]
      %v221 = vld [vmem:[%s199 + $0x58] sm:$0xff]
      %v222 = vld [vmem:[%s199 + $0x60] sm:$0xff]
      %v223 = vld [vmem:[%s199 + $0x68] sm:$0xff]
      %v224 = vld [vmem:[%s199 + $0x70] sm:$0xff]
      %v225 = vld [vmem:[%s199 + $0x78] sm:$0xff]
      %v226 = vld [vmem:[%s199 + $0x80] sm:$0xff]
      %v227 = vld [vmem:[%s199 + $0x88] sm:$0xff]
      %v228 = vld [vmem:[%s199 + $0x90] sm:$0xff]
      %v229 = vld [vmem:[%s199 + $0x98] sm:$0xff]
      %v230 = vld [vmem:[%s199 + $0xa0] sm:$0xff]
      %v231 = vld [vmem:[%s199 + $0xa8] sm:$0xff]
      %v232 = vld [vmem:[%s199 + $0xb0] sm:$0xff]
      %v233 = vld [vmem:[%s199 + $0xb8] sm:$0xff]
      %v234 = vld [vmem:[%s199 + $0xc0] sm:$0xff]
      %v235 = vld [vmem:[%s199 + $0xc8] sm:$0xff]
      %v236 = vld [vmem:[%s199 + $0xd0] sm:$0xff]
      %v237 = vld [vmem:[%s199 + $0xd8] sm:$0xff]
      %v238 = vld [vmem:[%s199 + $0xe0] sm:$0xff]
      %v239 = vld [vmem:[%s199 + $0xe8] sm:$0xff]
      %v240 = vld [vmem:[%s199 + $0xf0] sm:$0xff]
      %v241 = vld [vmem:[%s199 + $0xf8] sm:$0xff]
      %v242 = vpack.c.bf16 %v211, %v210
      %v243 = vpack.c.bf16 %v213, %v212
      %v244 = vpack.c.bf16 %v215, %v214
      %v245 = vpack.c.bf16 %v217, %v216
      %v246 = vpack.c.bf16 %v219, %v218
      %v247 = vpack.c.bf16 %v221, %v220
      %v248 = vpack.c.bf16 %v223, %v222
      %v249 = vpack.c.bf16 %v225, %v224
      %v250 = vpack.c.bf16 %v227, %v226
      %v251 = vpack.c.bf16 %v229, %v228
      %v252 = vpack.c.bf16 %v231, %v230
      %v253 = vpack.c.bf16 %v233, %v232
      %v254 = vpack.c.bf16 %v235, %v234
      %v255 = vpack.c.bf16 %v237, %v236
      %v256 = vpack.c.bf16 %v239, %v238
      %v257 = vpack.c.bf16 %v241, %v240
      %v259 = vshrl.u32 %v243, 16
      %v262 = vshrl.u32 %v242, 16
      %v265 = vshrl.u32 %v244, 16
      %v268 = vshrl.u32 %v245, 16
      %v271 = vshrl.u32 %v246, 16
      %v274 = vshrl.u32 %v247, 16
      %v277 = vshrl.u32 %v248, 16
      %v280 = vshrl.u32 %v249, 16
      %v283 = vshrl.u32 %v250, 16
      %v286 = vshrl.u32 %v251, 16
      %v289 = vshrl.u32 %v252, 16
      %v292 = vshrl.u32 %v253, 16
      %v295 = vshrl.u32 %v254, 16
      %v298 = vshrl.u32 %v255, 16
      %v301 = vshrl.u32 %v256, 16
      %v304 = vshrl.u32 %v257, 16
      %v322 = vrot.slane %v259, 7
      %v323 = vshll.u32 %v243, 16
      %v325 = vor.u32 %v322, %v323
      %v326 = vrot.slane %v262, 7
      %v327 = vshll.u32 %v242, 16
      %v329 = vor.u32 %v326, %v327
      %v330 = vrot.slane %v265, 7
      %v331 = vshll.u32 %v244, 16
      %v333 = vor.u32 %v330, %v331
      %v334 = vrot.slane %v268, 7
      %v335 = vshll.u32 %v245, 16
      %v337 = vor.u32 %v334, %v335
      %v338 = vrot.slane %v271, 7
      %v339 = vshll.u32 %v246, 16
      %v341 = vor.u32 %v338, %v339
      %v342 = vrot.slane %v274, 7
      %v343 = vshll.u32 %v247, 16
      %v345 = vor.u32 %v342, %v343
      %v346 = vrot.slane %v277, 7
      %v347 = vshll.u32 %v248, 16
      %v349 = vor.u32 %v346, %v347
      %v350 = vrot.slane %v280, 7
      %v351 = vshll.u32 %v249, 16
      %v353 = vor.u32 %v350, %v351
      %v354 = vrot.slane %v283, 7
      %v355 = vshll.u32 %v250, 16
      %v357 = vor.u32 %v354, %v355
      %v358 = vrot.slane %v286, 7
      %v359 = vshll.u32 %v251, 16
      %v361 = vor.u32 %v358, %v359
      %v362 = vrot.slane %v289, 7
      %v363 = vshll.u32 %v252, 16
      %v365 = vor.u32 %v362, %v363
      %v366 = vrot.slane %v292, 7
      %v367 = vshll.u32 %v253, 16
      %v369 = vor.u32 %v366, %v367
      %v370 = vrot.slane %v295, 7
      %v371 = vshll.u32 %v254, 16
      %v373 = vor.u32 %v370, %v371
      %v374 = vrot.slane %v298, 7
      %v375 = vshll.u32 %v255, 16
      %v377 = vor.u32 %v374, %v375
      %v378 = vrot.slane %v301, 7
      %v379 = vshll.u32 %v256, 16
      %v381 = vor.u32 %v378, %v379
      %v382 = vrot.slane %v304, 7
      %v383 = vshll.u32 %v257, 16
      %v385 = vor.u32 %v382, %v383
      %vm402 = vcmask 1040384
      %vm403 = vsmask.f32 256
      %vm404 = vmand %vm402, %vm403
      %v405 = vsel %vm404, %v259, %v325
      %v406 = vsel %vm404, %v262, %v329
      %v407 = vsel %vm404, %v265, %v333
      %v408 = vsel %vm404, %v268, %v337
      %v409 = vsel %vm404, %v271, %v341
      %v410 = vsel %vm404, %v274, %v345
      %v411 = vsel %vm404, %v277, %v349
      %v412 = vsel %vm404, %v280, %v353
      %v413 = vsel %vm404, %v283, %v357
      %v414 = vsel %vm404, %v286, %v361
      %v415 = vsel %vm404, %v289, %v365
      %v416 = vsel %vm404, %v292, %v369
      %v417 = vsel %vm404, %v295, %v373
      %v418 = vsel %vm404, %v298, %v377
      %v419 = vsel %vm404, %v301, %v381
      %v420 = vsel %vm404, %v304, %v385
      %v421 = vrot.slane %v323, 1
      %v422 = vor.u32 %v259, %v421
      %v423 = vrot.slane %v327, 1
      %v424 = vor.u32 %v262, %v423
      %v425 = vrot.slane %v331, 1
      %v426 = vor.u32 %v265, %v425
      %v427 = vrot.slane %v335, 1
      %v428 = vor.u32 %v268, %v427
      %v429 = vrot.slane %v339, 1
      %v430 = vor.u32 %v271, %v429
      %v431 = vrot.slane %v343, 1
      %v432 = vor.u32 %v274, %v431
      %v433 = vrot.slane %v347, 1
      %v434 = vor.u32 %v277, %v433
      %v435 = vrot.slane %v351, 1
      %v436 = vor.u32 %v280, %v435
      %v437 = vrot.slane %v355, 1
      %v438 = vor.u32 %v283, %v437
      %v439 = vrot.slane %v359, 1
      %v440 = vor.u32 %v286, %v439
      %v441 = vrot.slane %v363, 1
      %v442 = vor.u32 %v289, %v441
      %v443 = vrot.slane %v367, 1
      %v444 = vor.u32 %v292, %v443
      %v445 = vrot.slane %v371, 1
      %v446 = vor.u32 %v295, %v445
      %v447 = vrot.slane %v375, 1
      %v448 = vor.u32 %v298, %v447
      %v449 = vrot.slane %v379, 1
      %v450 = vor.u32 %v301, %v449
      %v451 = vrot.slane %v383, 1
      %v452 = vor.u32 %v304, %v451
      %vm485 = vcmask 1047552
      %vm486 = vsmask.f32 7424
      %vm487 = vmand %vm485, %vm486
      %v488 = vsel %vm487, %v422, %v323
      %v489 = vsel %vm487, %v424, %v327
      %v490 = vsel %vm487, %v426, %v331
      %v491 = vsel %vm487, %v428, %v335
      %v492 = vsel %vm487, %v430, %v339
      %v493 = vsel %vm487, %v432, %v343
      %v494 = vsel %vm487, %v434, %v347
      %v495 = vsel %vm487, %v436, %v351
      %v496 = vsel %vm487, %v438, %v355
      %v497 = vsel %vm487, %v440, %v359
      %v498 = vsel %vm487, %v442, %v363
      %v499 = vsel %vm487, %v444, %v367
      %v500 = vsel %vm487, %v446, %v371
      %v501 = vsel %vm487, %v448, %v375
      %v502 = vsel %vm487, %v450, %v379
      %v503 = vsel %vm487, %v452, %v383
      %v504 = vld [vmem:[%s1] sm:$0xf]
      %v505 = vld [vmem:[%s1 + $0x4] sm:$0xf]
      %v506 = vld [vmem:[%s1 + $0x8] sm:$0xf]
      %v507 = vld [vmem:[%s1 + $0xc] sm:$0xf]
      %v508 = vld [vmem:[%s1 + $0x10] sm:$0xf]
      %v509 = vld [vmem:[%s1 + $0x14] sm:$0xf]
      %v510 = vld [vmem:[%s1 + $0x18] sm:$0xf]
      %v511 = vld [vmem:[%s1 + $0x1c] sm:$0xf]
      %v512 = vld [vmem:[%s1 + $0x20] sm:$0xf]
      %v513 = vld [vmem:[%s1 + $0x24] sm:$0xf]
      %v514 = vld [vmem:[%s1 + $0x28] sm:$0xf]
      %v515 = vld [vmem:[%s1 + $0x2c] sm:$0xf]
      %v516 = vld [vmem:[%s1 + $0x30] sm:$0xf]
      %v517 = vld [vmem:[%s1 + $0x34] sm:$0xf]
      %v518 = vld [vmem:[%s1 + $0x38] sm:$0xf]
      %v519 = vld [vmem:[%s1 + $0x3c] sm:$0xf]
      %v520 = vld [vmem:[%s1 + $0x40] sm:$0xf]
      %v521 = vld [vmem:[%s1 + $0x44] sm:$0xf]
      %v522 = vld [vmem:[%s1 + $0x48] sm:$0xf]
      %v523 = vld [vmem:[%s1 + $0x4c] sm:$0xf]
      %v524 = vld [vmem:[%s1 + $0x50] sm:$0xf]
      %v525 = vld [vmem:[%s1 + $0x54] sm:$0xf]
      %v526 = vld [vmem:[%s1 + $0x58] sm:$0xf]
      %v527 = vld [vmem:[%s1 + $0x5c] sm:$0xf]
      %v528 = vld [vmem:[%s1 + $0x60] sm:$0xf]
      %v529 = vld [vmem:[%s1 + $0x64] sm:$0xf]
      %v530 = vld [vmem:[%s1 + $0x68] sm:$0xf]
      %v531 = vld [vmem:[%s1 + $0x6c] sm:$0xf]
      %v532 = vld [vmem:[%s1 + $0x70] sm:$0xf]
      %v533 = vld [vmem:[%s1 + $0x74] sm:$0xf]
      %v534 = vld [vmem:[%s1 + $0x78] sm:$0xf]
      %v535 = vld [vmem:[%s1 + $0x7c] sm:$0xf]
      %v536 = vld [vmem:[%s1 + $0x80] sm:$0xf]
      %v537 = vld [vmem:[%s1 + $0x84] sm:$0xf]
      %v538 = vld [vmem:[%s1 + $0x88] sm:$0xf]
      %v539 = vld [vmem:[%s1 + $0x8c] sm:$0xf]
      %v540 = vld [vmem:[%s1 + $0x90] sm:$0xf]
      %v541 = vld [vmem:[%s1 + $0x94] sm:$0xf]
      %v542 = vld [vmem:[%s1 + $0x98] sm:$0xf]
      %v543 = vld [vmem:[%s1 + $0x9c] sm:$0xf]
      %v544 = vld [vmem:[%s1 + $0xa0] sm:$0xf]
      %v545 = vld [vmem:[%s1 + $0xa4] sm:$0xf]
      %v546 = vld [vmem:[%s1 + $0xa8] sm:$0xf]
      %v547 = vld [vmem:[%s1 + $0xac] sm:$0xf]
      %v548 = vld [vmem:[%s1 + $0xb0] sm:$0xf]
      %v549 = vld [vmem:[%s1 + $0xb4] sm:$0xf]
      %v550 = vld [vmem:[%s1 + $0xb8] sm:$0xf]
      %v551 = vld [vmem:[%s1 + $0xbc] sm:$0xf]
      %s552 = scalar_lea.vmem %s1, 192
      %v553 = vld [vmem:[%s552] sm:$0xf]
      %v554 = vld [vmem:[%s552 + $0x4] sm:$0xf]
      %v555 = vld [vmem:[%s552 + $0x8] sm:$0xf]
      %v556 = vld [vmem:[%s552 + $0xc] sm:$0xf]
      %v557 = vld [vmem:[%s552 + $0x10] sm:$0xf]
      %v558 = vld [vmem:[%s552 + $0x14] sm:$0xf]
      %v559 = vld [vmem:[%s552 + $0x18] sm:$0xf]
      %v560 = vld [vmem:[%s552 + $0x1c] sm:$0xf]
      %v561 = vld [vmem:[%s552 + $0x20] sm:$0xf]
      %v562 = vld [vmem:[%s552 + $0x24] sm:$0xf]
      %v563 = vld [vmem:[%s552 + $0x28] sm:$0xf]
      %v564 = vld [vmem:[%s552 + $0x2c] sm:$0xf]
      %v565 = vld [vmem:[%s552 + $0x30] sm:$0xf]
      %v566 = vld [vmem:[%s552 + $0x34] sm:$0xf]
      %v567 = vld [vmem:[%s552 + $0x38] sm:$0xf]
      %v568 = vld [vmem:[%s552 + $0x3c] sm:$0xf]
      %v569 = vld [vmem:[%s552 + $0x40] sm:$0xf]
      %v570 = vld [vmem:[%s552 + $0x44] sm:$0xf]
      %v571 = vld [vmem:[%s552 + $0x48] sm:$0xf]
      %v572 = vld [vmem:[%s552 + $0x4c] sm:$0xf]
      %v573 = vld [vmem:[%s552 + $0x50] sm:$0xf]
      %v574 = vld [vmem:[%s552 + $0x54] sm:$0xf]
      %v575 = vld [vmem:[%s552 + $0x58] sm:$0xf]
      %v576 = vld [vmem:[%s552 + $0x5c] sm:$0xf]
      %v577 = vld [vmem:[%s552 + $0x60] sm:$0xf]
      %v578 = vld [vmem:[%s552 + $0x64] sm:$0xf]
      %v579 = vld [vmem:[%s552 + $0x68] sm:$0xf]
      %v580 = vld [vmem:[%s552 + $0x6c] sm:$0xf]
      %v581 = vld [vmem:[%s552 + $0x70] sm:$0xf]
      %v582 = vld [vmem:[%s552 + $0x74] sm:$0xf]
      %v583 = vld [vmem:[%s552 + $0x78] sm:$0xf]
      %v584 = vld [vmem:[%s552 + $0x7c] sm:$0xf]
      %v585 = vld [vmem:[%s552 + $0x80] sm:$0xf]
      %v586 = vld [vmem:[%s552 + $0x84] sm:$0xf]
      %v587 = vld [vmem:[%s552 + $0x88] sm:$0xf]
      %v588 = vld [vmem:[%s552 + $0x8c] sm:$0xf]
      %v589 = vld [vmem:[%s552 + $0x90] sm:$0xf]
      %v590 = vld [vmem:[%s552 + $0x94] sm:$0xf]
      %v591 = vld [vmem:[%s552 + $0x98] sm:$0xf]
      %v592 = vld [vmem:[%s552 + $0x9c] sm:$0xf]
      %v593 = vld [vmem:[%s552 + $0xa0] sm:$0xf]
      %v594 = vld [vmem:[%s552 + $0xa4] sm:$0xf]
      %v595 = vld [vmem:[%s552 + $0xa8] sm:$0xf]
      %v596 = vld [vmem:[%s552 + $0xac] sm:$0xf]
      %v597 = vld [vmem:[%s552 + $0xb0] sm:$0xf]
      %v598 = vld [vmem:[%s552 + $0xb4] sm:$0xf]
      %v599 = vld [vmem:[%s552 + $0xb8] sm:$0xf]
      %v600 = vld [vmem:[%s552 + $0xbc] sm:$0xf]
      %v649 = vunpack.c.l.b16 %v553
      %v650 = vunpack.c.l.b16 %v554
      %v651 = vunpack.c.l.b16 %v555
      %v652 = vunpack.c.l.b16 %v556
      %v653 = vunpack.c.l.b16 %v557
      %v654 = vunpack.c.l.b16 %v558
      %v655 = vunpack.c.l.b16 %v559
      %v656 = vunpack.c.l.b16 %v560
      %v657 = vunpack.c.l.b16 %v561
      %v658 = vunpack.c.l.b16 %v562
      %v659 = vunpack.c.l.b16 %v563
      %v660 = vunpack.c.l.b16 %v564
      %v661 = vunpack.c.l.b16 %v565
      %v662 = vunpack.c.l.b16 %v566
      %v663 = vunpack.c.l.b16 %v567
      %v664 = vunpack.c.l.b16 %v568
      %v665 = vunpack.c.l.b16 %v569
      %v666 = vunpack.c.l.b16 %v570
      %v667 = vunpack.c.l.b16 %v571
      %v668 = vunpack.c.l.b16 %v572
      %v669 = vunpack.c.l.b16 %v573
      %v670 = vunpack.c.l.b16 %v574
      %v671 = vunpack.c.l.b16 %v575
      %v672 = vunpack.c.l.b16 %v576
      %v673 = vunpack.c.l.b16 %v577
      %v674 = vunpack.c.l.b16 %v578
      %v675 = vunpack.c.l.b16 %v579
      %v676 = vunpack.c.l.b16 %v580
      %v677 = vunpack.c.l.b16 %v581
      %v678 = vunpack.c.l.b16 %v582
      %v679 = vunpack.c.l.b16 %v583
      %v680 = vunpack.c.l.b16 %v584
      %v681 = vunpack.c.l.b16 %v585
      %v682 = vunpack.c.l.b16 %v586
      %v683 = vunpack.c.l.b16 %v587
      %v684 = vunpack.c.l.b16 %v588
      %v685 = vunpack.c.l.b16 %v589
      %v686 = vunpack.c.l.b16 %v590
      %v687 = vunpack.c.l.b16 %v591
      %v688 = vunpack.c.l.b16 %v592
      %v689 = vunpack.c.l.b16 %v593
      %v690 = vunpack.c.l.b16 %v594
      %v691 = vunpack.c.l.b16 %v595
      %v692 = vunpack.c.l.b16 %v596
      %v693 = vunpack.c.l.b16 %v597
      %v694 = vunpack.c.l.b16 %v598
      %v695 = vunpack.c.l.b16 %v599
      %v696 = vunpack.c.l.b16 %v600
      %v697 = vpack.c.b16 %v650, %v649
      %v698 = vpack.c.b16 %v652, %v651
      %v699 = vpack.c.b16 %v654, %v653
      %v700 = vpack.c.b16 %v656, %v655
      %v701 = vpack.c.b16 %v658, %v657
      %v702 = vpack.c.b16 %v660, %v659
      %v703 = vpack.c.b16 %v662, %v661
      %v704 = vpack.c.b16 %v664, %v663
      %v705 = vpack.c.b16 %v666, %v665
      %v706 = vpack.c.b16 %v668, %v667
      %v707 = vpack.c.b16 %v670, %v669
      %v708 = vpack.c.b16 %v672, %v671
      %v709 = vpack.c.b16 %v674, %v673
      %v710 = vpack.c.b16 %v676, %v675
      %v711 = vpack.c.b16 %v678, %v677
      %v712 = vpack.c.b16 %v680, %v679
      %v713 = vpack.c.b16 %v682, %v681
      %v714 = vpack.c.b16 %v684, %v683
      %v715 = vpack.c.b16 %v686, %v685
      %v716 = vpack.c.b16 %v688, %v687
      %v717 = vpack.c.b16 %v690, %v689
      %v718 = vpack.c.b16 %v692, %v691
      %v719 = vpack.c.b16 %v694, %v693
      %v720 = vpack.c.b16 %v696, %v695
      %745 = vmatprep.subr.bf16.mxu0 0
      %746 = vmatpush1.bf16.msra.mxu0 %v697
      %747 = vmatprep.subr.bf16.mxu0 0
      %748 = vmatpush1.bf16.msra.mxu0 %v698
      %749 = vmatprep.subr.bf16.mxu0 0
      %750 = vmatpush1.bf16.msra.mxu0 %v699
      %751 = vmatprep.subr.bf16.mxu0 0
      %752 = vmatpush1.bf16.msra.mxu0 %v700
      %753 = vmatprep.subr.bf16.mxu0 0
      %754 = vmatpush1.bf16.msra.mxu0 %v701
      %755 = vmatprep.subr.bf16.mxu0 0
      %756 = vmatpush1.bf16.msra.mxu0 %v702
      %757 = vmatprep.subr.bf16.mxu0 0
      %758 = vmatpush1.bf16.msra.mxu0 %v703
      %759 = vmatprep.subr.bf16.mxu0 0
      %760 = vmatpush1.bf16.msra.mxu0 %v704
      %761 = vmatprep.subr.bf16.mxu0 0
      %762 = vmatpush1.bf16.msra.mxu0 %v705
      %763 = vmatprep.subr.bf16.mxu0 0
      %764 = vmatpush1.bf16.msra.mxu0 %v706
      %765 = vmatprep.subr.bf16.mxu0 0
      %766 = vmatpush1.bf16.msra.mxu0 %v707
      %767 = vmatprep.subr.bf16.mxu0 0
      %768 = vmatpush1.bf16.msra.mxu0 %v708
      %769 = vmatprep.subr.bf16.mxu0 0
      %770 = vmatpush1.bf16.msra.mxu0 %v709
      %771 = vmatprep.subr.bf16.mxu0 0
      %772 = vmatpush1.bf16.msra.mxu0 %v710
      %773 = vmatprep.subr.bf16.mxu0 0
      %774 = vmatpush1.bf16.msra.mxu0 %v711
      %775 = vmatprep.subr.bf16.mxu0 0
      %776 = vmatpush1.bf16.msra.mxu0 %v712
      %777 = vmatprep.mubr.bf16.mxu0 %v242
      %778 = vmatmul.mubr.bf16.gmra.mrb[0].mxu0 %v406
      %v779 = vpop.f32.mrb[0].mxu0
      %v780 = vadd.f32 0.0, %v779
      %v781 = vpop.f32.mrb[0].mxu0
      %v782 = vpop.f32.mrb[0].mxu0
      %v783 = vadd.f32 0.0, %v782
      %v784 = vpop.f32.mrb[0].mxu0
      %785 = vmatprep.mubr.bf16.mxu0 %v243
      %786 = vmatmul.mubr.bf16.gmra.mrb[0].mxu0 %v405
      %v787 = vpop.f32.mrb[0].mxu0
      %v788 = vadd.f32 0.0, %v787
      %v789 = vpop.f32.mrb[0].mxu0
      %v790 = vpop.f32.mrb[0].mxu0
      %v791 = vadd.f32 0.0, %v790
      %v792 = vpop.f32.mrb[0].mxu0
      %793 = vmatprep.mubr.bf16.mxu0 %v244
      %794 = vmatmul.mubr.bf16.gmra.mrb[0].mxu0 %v407
      %v795 = vpop.f32.mrb[0].mxu0
      %v796 = vadd.f32 0.0, %v795
      %v797 = vpop.f32.mrb[0].mxu0
      %v798 = vpop.f32.mrb[0].mxu0
      %v799 = vadd.f32 0.0, %v798
      %v800 = vpop.f32.mrb[0].mxu0
      %801 = vmatprep.mubr.bf16.mxu0 %v245
      %802 = vmatmul.mubr.bf16.gmra.mrb[0].mxu0 %v408
      %v803 = vpop.f32.mrb[0].mxu0
      %v804 = vadd.f32 0.0, %v803
      %v805 = vpop.f32.mrb[0].mxu0
      %v806 = vpop.f32.mrb[0].mxu0
      %v807 = vadd.f32 0.0, %v806
      %v808 = vpop.f32.mrb[0].mxu0
      %809 = vmatprep.mubr.bf16.mxu0 %v246
      %810 = vmatmul.mubr.bf16.gmra.mrb[0].mxu0 %v409
      %v811 = vpop.f32.mrb[0].mxu0
      %v812 = vadd.f32 0.0, %v811
      %v813 = vpop.f32.mrb[0].mxu0
      %v814 = vpop.f32.mrb[0].mxu0
      %v815 = vadd.f32 0.0, %v814
      %v816 = vpop.f32.mrb[0].mxu0
      %817 = vmatprep.mubr.bf16.mxu0 %v247
      %818 = vmatmul.mubr.bf16.gmra.mrb[0].mxu0 %v410
      %v819 = vpop.f32.mrb[0].mxu0
      %v820 = vadd.f32 0.0, %v819
      %v821 = vpop.f32.mrb[0].mxu0
      %v822 = vpop.f32.mrb[0].mxu0
      %v823 = vadd.f32 0.0, %v822
      %v824 = vpop.f32.mrb[0].mxu0
      %825 = vmatprep.mubr.bf16.mxu0 %v248
      %826 = vmatmul.mubr.bf16.gmra.mrb[0].mxu0 %v411
      %v827 = vpop.f32.mrb[0].mxu0
      %v828 = vadd.f32 0.0, %v827
      %v829 = vpop.f32.mrb[0].mxu0
      %v830 = vpop.f32.mrb[0].mxu0
      %v831 = vadd.f32 0.0, %v830
      %v832 = vpop.f32.mrb[0].mxu0
      %833 = vmatprep.mubr.bf16.mxu0 %v249
      %834 = vmatmul.mubr.bf16.gmra.mrb[0].mxu0 %v412
      %v835 = vpop.f32.mrb[0].mxu0
      %v836 = vadd.f32 0.0, %v835
      %v837 = vpop.f32.mrb[0].mxu0
      %v838 = vpop.f32.mrb[0].mxu0
      %v839 = vadd.f32 0.0, %v838
      %v840 = vpop.f32.mrb[0].mxu0
      %841 = vmatprep.mubr.bf16.mxu0 %v250
      %842 = vmatmul.mubr.bf16.gmra.mrb[0].mxu0 %v413
      %v843 = vpop.f32.mrb[0].mxu0
      %v844 = vadd.f32 0.0, %v843
      %v845 = vpop.f32.mrb[0].mxu0
      %v846 = vpop.f32.mrb[0].mxu0
      %v847 = vadd.f32 0.0, %v846
      %v848 = vpop.f32.mrb[0].mxu0
      %849 = vmatprep.mubr.bf16.mxu0 %v251
      %850 = vmatmul.mubr.bf16.gmra.mrb[0].mxu0 %v414
      %v851 = vpop.f32.mrb[0].mxu0
      %v852 = vadd.f32 0.0, %v851
      %v853 = vpop.f32.mrb[0].mxu0
      %v854 = vpop.f32.mrb[0].mxu0
      %v855 = vadd.f32 0.0, %v854
      %v856 = vpop.f32.mrb[0].mxu0
      %857 = vmatprep.mubr.bf16.mxu0 %v252
      %858 = vmatmul.mubr.bf16.gmra.mrb[0].mxu0 %v415
      %v859 = vpop.f32.mrb[0].mxu0
      %v860 = vadd.f32 0.0, %v859
      %v861 = vpop.f32.mrb[0].mxu0
      %v862 = vpop.f32.mrb[0].mxu0
      %v863 = vadd.f32 0.0, %v862
      %v864 = vpop.f32.mrb[0].mxu0
      %865 = vmatprep.mubr.bf16.mxu0 %v253
      %866 = vmatmul.mubr.bf16.gmra.mrb[0].mxu0 %v416
      %v867 = vpop.f32.mrb[0].mxu0
      %v868 = vadd.f32 0.0, %v867
      %v869 = vpop.f32.mrb[0].mxu0
      %v870 = vpop.f32.mrb[0].mxu0
      %v871 = vadd.f32 0.0, %v870
      %v872 = vpop.f32.mrb[0].mxu0
      %873 = vmatprep.mubr.bf16.mxu0 %v254
      %874 = vmatmul.mubr.bf16.gmra.mrb[0].mxu0 %v417
      %v875 = vpop.f32.mrb[0].mxu0
      %v876 = vadd.f32 0.0, %v875
      %v877 = vpop.f32.mrb[0].mxu0
      %v878 = vpop.f32.mrb[0].mxu0
      %v879 = vadd.f32 0.0, %v878
      %v880 = vpop.f32.mrb[0].mxu0
      %881 = vmatprep.mubr.bf16.mxu0 %v255
      %882 = vmatmul.mubr.bf16.gmra.mrb[0].mxu0 %v418
      %v883 = vpop.f32.mrb[0].mxu0
      %v884 = vadd.f32 0.0, %v883
      %v885 = vpop.f32.mrb[0].mxu0
      %v886 = vpop.f32.mrb[0].mxu0
      %v887 = vadd.f32 0.0, %v886
      %v888 = vpop.f32.mrb[0].mxu0
      %889 = vmatprep.mubr.bf16.mxu0 %v256
      %890 = vmatmul.mubr.bf16.gmra.mrb[0].mxu0 %v419
      %v891 = vpop.f32.mrb[0].mxu0
      %v892 = vadd.f32 0.0, %v891
      %v893 = vpop.f32.mrb[0].mxu0
      %v894 = vpop.f32.mrb[0].mxu0
      %v895 = vadd.f32 0.0, %v894
      %v896 = vpop.f32.mrb[0].mxu0
      %897 = vmatprep.mubr.bf16.mxu0 %v257
      %898 = vmatmul.mubr.bf16.gmra.mrb[0].mxu0 %v420
      %v899 = vpop.f32.mrb[0].mxu0
      %v900 = vadd.f32 0.0, %v899
      %v901 = vpop.f32.mrb[0].mxu0
      %v902 = vpop.f32.mrb[0].mxu0
      %v903 = vadd.f32 0.0, %v902
      %v904 = vpop.f32.mrb[0].mxu0
      %905 = vdwg.mxu0
      %906 = vmatprep.subr.bf16.mxu0 0
      %907 = vmatpush1.bf16.msra.mxu0 %v713
      %908 = vmatprep.subr.bf16.mxu0 0
      %909 = vmatpush1.bf16.msra.mxu0 %v714
      %910 = vmatprep.subr.bf16.mxu0 0
      %911 = vmatpush1.bf16.msra.mxu0 %v715
      %912 = vmatprep.subr.bf16.mxu0 0
      %913 = vmatpush1.bf16.msra.mxu0 %v716
      %914 = vmatprep.subr.bf16.mxu0 0
      %915 = vmatpush1.bf16.msra.mxu0 %v717
      %916 = vmatprep.subr.bf16.mxu0 0
      %917 = vmatpush1.bf16.msra.mxu0 %v718
      %918 = vmatprep.subr.bf16.mxu0 0
      %919 = vmatpush1.bf16.msra.mxu0 %v719
      %920 = vmatprep.subr.bf16.mxu0 0
      %921 = vmatpush1.bf16.msra.mxu0 %v720
      %922 = vmatprep.subr.bf16.mxu0 0
      %923 = vmatpush1.bf16.msra.mxu0 0
      %924 = vmatprep.subr.bf16.mxu0 0
      %925 = vmatpush1.bf16.msra.mxu0 0
      %926 = vmatprep.subr.bf16.mxu0 0
      %927 = vmatpush1.bf16.msra.mxu0 0
      %928 = vmatprep.subr.bf16.mxu0 0
      %929 = vmatpush1.bf16.msra.mxu0 0
      %930 = vmatprep.subr.bf16.mxu0 0
      %931 = vmatpush1.bf16.msra.mxu0 0
      %932 = vmatprep.subr.bf16.mxu0 0
      %933 = vmatpush1.bf16.msra.mxu0 0
      %934 = vmatprep.subr.bf16.mxu0 0
      %935 = vmatpush1.bf16.msra.mxu0 0
      %936 = vmatprep.subr.bf16.mxu0 0
      %937 = vmatpush1.bf16.msra.mxu0 0
      %938 = vmatprep.mubr.bf16.mxu0 0
      %939 = vmatmul.mubr.bf16.gmra.mrb[0].mxu0 %v489
      %v940 = vpop.f32.mrb[0].mxu0
      %v941 = vadd.f32 %v780, %v940
      %v942 = vpop.f32.mrb[0].mxu0
      %v943 = vpop.f32.mrb[0].mxu0
      %v944 = vadd.f32 %v783, %v943
      %v945 = vpop.f32.mrb[0].mxu0
      %946 = vmatprep.mubr.bf16.mxu0 0
      %947 = vmatmul.mubr.bf16.gmra.mrb[0].mxu0 %v488
      %v948 = vpop.f32.mrb[0].mxu0
      %v949 = vadd.f32 %v788, %v948
      %v950 = vpop.f32.mrb[0].mxu0
      %v951 = vpop.f32.mrb[0].mxu0
      %v952 = vadd.f32 %v791, %v951
      %v953 = vpop.f32.mrb[0].mxu0
      %954 = vmatprep.mubr.bf16.mxu0 0
      %955 = vmatmul.mubr.bf16.gmra.mrb[0].mxu0 %v490
      %v956 = vpop.f32.mrb[0].mxu0
      %v957 = vadd.f32 %v796, %v956
      %v958 = vpop.f32.mrb[0].mxu0
      %v959 = vpop.f32.mrb[0].mxu0
      %v960 = vadd.f32 %v799, %v959
      %v961 = vpop.f32.mrb[0].mxu0
      %962 = vmatprep.mubr.bf16.mxu0 0
      %963 = vmatmul.mubr.bf16.gmra.mrb[0].mxu0 %v491
      %v964 = vpop.f32.mrb[0].mxu0
      %v965 = vadd.f32 %v804, %v964
      %v966 = vpop.f32.mrb[0].mxu0
      %v967 = vpop.f32.mrb[0].mxu0
      %v968 = vadd.f32 %v807, %v967
      %v969 = vpop.f32.mrb[0].mxu0
      %970 = vmatprep.mubr.bf16.mxu0 0
      %971 = vmatmul.mubr.bf16.gmra.mrb[0].mxu0 %v492
      %v972 = vpop.f32.mrb[0].mxu0
      %v973 = vadd.f32 %v812, %v972
      %v974 = vpop.f32.mrb[0].mxu0
      %v975 = vpop.f32.mrb[0].mxu0
      %v976 = vadd.f32 %v815, %v975
      %v977 = vpop.f32.mrb[0].mxu0
      %978 = vmatprep.mubr.bf16.mxu0 0
      %979 = vmatmul.mubr.bf16.gmra.mrb[0].mxu0 %v493
      %v980 = vpop.f32.mrb[0].mxu0
      %v981 = vadd.f32 %v820, %v980
      %v982 = vpop.f32.mrb[0].mxu0
      %v983 = vpop.f32.mrb[0].mxu0
      %v984 = vadd.f32 %v823, %v983
      %v985 = vpop.f32.mrb[0].mxu0
      %986 = vmatprep.mubr.bf16.mxu0 0
      %987 = vmatmul.mubr.bf16.gmra.mrb[0].mxu0 %v494
      %v988 = vpop.f32.mrb[0].mxu0
      %v989 = vadd.f32 %v828, %v988
      %v990 = vpop.f32.mrb[0].mxu0
      %v991 = vpop.f32.mrb[0].mxu0
      %v992 = vadd.f32 %v831, %v991
      %v993 = vpop.f32.mrb[0].mxu0
      %994 = vmatprep.mubr.bf16.mxu0 0
      %995 = vmatmul.mubr.bf16.gmra.mrb[0].mxu0 %v495
      %v996 = vpop.f32.mrb[0].mxu0
      %v997 = vadd.f32 %v836, %v996
      %v998 = vpop.f32.mrb[0].mxu0
      %v999 = vpop.f32.mrb[0].mxu0
      %v1000 = vadd.f32 %v839, %v999
      %v1001 = vpop.f32.mrb[0].mxu0
      %1002 = vmatprep.mubr.bf16.mxu0 0
      %1003 = vmatmul.mubr.bf16.gmra.mrb[0].mxu0 %v496
      %v1004 = vpop.f32.mrb[0].mxu0
      %v1005 = vadd.f32 %v844, %v1004
      %v1006 = vpop.f32.mrb[0].mxu0
      %v1007 = vpop.f32.mrb[0].mxu0
      %v1008 = vadd.f32 %v847, %v1007
      %v1009 = vpop.f32.mrb[0].mxu0
      %1010 = vmatprep.mubr.bf16.mxu0 0
      %1011 = vmatmul.mubr.bf16.gmra.mrb[0].mxu0 %v497
      %v1012 = vpop.f32.mrb[0].mxu0
      %v1013 = vadd.f32 %v852, %v1012
      %v1014 = vpop.f32.mrb[0].mxu0
      %v1015 = vpop.f32.mrb[0].mxu0
      %v1016 = vadd.f32 %v855, %v1015
      %v1017 = vpop.f32.mrb[0].mxu0
      %1018 = vmatprep.mubr.bf16.mxu0 0
      %1019 = vmatmul.mubr.bf16.gmra.mrb[0].mxu0 %v498
      %v1020 = vpop.f32.mrb[0].mxu0
      %v1021 = vadd.f32 %v860, %v1020
      %v1022 = vpop.f32.mrb[0].mxu0
      %v1023 = vpop.f32.mrb[0].mxu0
      %v1024 = vadd.f32 %v863, %v1023
      %v1025 = vpop.f32.mrb[0].mxu0
      %1026 = vmatprep.mubr.bf16.mxu0 0
      %1027 = vmatmul.mubr.bf16.gmra.mrb[0].mxu0 %v499
      %v1028 = vpop.f32.mrb[0].mxu0
      %v1029 = vadd.f32 %v868, %v1028
      %v1030 = vpop.f32.mrb[0].mxu0
      %v1031 = vpop.f32.mrb[0].mxu0
      %v1032 = vadd.f32 %v871, %v1031
      %v1033 = vpop.f32.mrb[0].mxu0
      %1034 = vmatprep.mubr.bf16.mxu0 0
      %1035 = vmatmul.mubr.bf16.gmra.mrb[0].mxu0 %v500
      %v1036 = vpop.f32.mrb[0].mxu0
      %v1037 = vadd.f32 %v876, %v1036
      %v1038 = vpop.f32.mrb[0].mxu0
      %v1039 = vpop.f32.mrb[0].mxu0
      %v1040 = vadd.f32 %v879, %v1039
      %v1041 = vpop.f32.mrb[0].mxu0
      %1042 = vmatprep.mubr.bf16.mxu0 0
      %1043 = vmatmul.mubr.bf16.gmra.mrb[0].mxu0 %v501
      %v1044 = vpop.f32.mrb[0].mxu0
      %v1045 = vadd.f32 %v884, %v1044
      %v1046 = vpop.f32.mrb[0].mxu0
      %v1047 = vpop.f32.mrb[0].mxu0
      %v1048 = vadd.f32 %v887, %v1047
      %v1049 = vpop.f32.mrb[0].mxu0
      %1050 = vmatprep.mubr.bf16.mxu0 0
      %1051 = vmatmul.mubr.bf16.gmra.mrb[0].mxu0 %v502
      %v1052 = vpop.f32.mrb[0].mxu0
      %v1053 = vadd.f32 %v892, %v1052
      %v1054 = vpop.f32.mrb[0].mxu0
      %v1055 = vpop.f32.mrb[0].mxu0
      %v1056 = vadd.f32 %v895, %v1055
      %v1057 = vpop.f32.mrb[0].mxu0
      %1058 = vmatprep.mubr.bf16.mxu0 0
      %1059 = vmatmul.mubr.bf16.gmra.mrb[0].mxu0 %v503
      %v1060 = vpop.f32.mrb[0].mxu0
      %v1061 = vadd.f32 %v900, %v1060
      %v1062 = vpop.f32.mrb[0].mxu0
      %v1063 = vpop.f32.mrb[0].mxu0
      %v1064 = vadd.f32 %v903, %v1063
      %v1065 = vpop.f32.mrb[0].mxu0
      %1066 = vdwg.mxu0
      %v1115 = vunpack.c.l.b16 %v504
      %v1116 = vunpack.c.l.b16 %v505
      %v1117 = vunpack.c.l.b16 %v506
      %v1118 = vunpack.c.l.b16 %v507
      %v1119 = vunpack.c.l.b16 %v508
      %v1120 = vunpack.c.l.b16 %v509
      %v1121 = vunpack.c.l.b16 %v510
      %v1122 = vunpack.c.l.b16 %v511
      %v1123 = vunpack.c.l.b16 %v512
      %v1124 = vunpack.c.l.b16 %v513
      %v1125 = vunpack.c.l.b16 %v514
      %v1126 = vunpack.c.l.b16 %v515
      %v1127 = vunpack.c.l.b16 %v516
      %v1128 = vunpack.c.l.b16 %v517
      %v1129 = vunpack.c.l.b16 %v518
      %v1130 = vunpack.c.l.b16 %v519
      %v1131 = vunpack.c.l.b16 %v520
      %v1132 = vunpack.c.l.b16 %v521
      %v1133 = vunpack.c.l.b16 %v522
      %v1134 = vunpack.c.l.b16 %v523
      %v1135 = vunpack.c.l.b16 %v524
      %v1136 = vunpack.c.l.b16 %v525
      %v1137 = vunpack.c.l.b16 %v526
      %v1138 = vunpack.c.l.b16 %v527
      %v1139 = vunpack.c.l.b16 %v528
      %v1140 = vunpack.c.l.b16 %v529
      %v1141 = vunpack.c.l.b16 %v530
      %v1142 = vunpack.c.l.b16 %v531
      %v1143 = vunpack.c.l.b16 %v532
      %v1144 = vunpack.c.l.b16 %v533
      %v1145 = vunpack.c.l.b16 %v534
      %v1146 = vunpack.c.l.b16 %v535
      %v1147 = vunpack.c.l.b16 %v536
      %v1148 = vunpack.c.l.b16 %v537
      %v1149 = vunpack.c.l.b16 %v538
      %v1150 = vunpack.c.l.b16 %v539
      %v1151 = vunpack.c.l.b16 %v540
      %v1152 = vunpack.c.l.b16 %v541
      %v1153 = vunpack.c.l.b16 %v542
      %v1154 = vunpack.c.l.b16 %v543
      %v1155 = vunpack.c.l.b16 %v544
      %v1156 = vunpack.c.l.b16 %v545
      %v1157 = vunpack.c.l.b16 %v546
      %v1158 = vunpack.c.l.b16 %v547
      %v1159 = vunpack.c.l.b16 %v548
      %v1160 = vunpack.c.l.b16 %v549
      %v1161 = vunpack.c.l.b16 %v550
      %v1162 = vunpack.c.l.b16 %v551
      %v1163 = vpack.c.b16 %v1116, %v1115
      %v1164 = vpack.c.b16 %v1118, %v1117
      %v1165 = vpack.c.b16 %v1120, %v1119
      %v1166 = vpack.c.b16 %v1122, %v1121
      %v1167 = vpack.c.b16 %v1124, %v1123
      %v1168 = vpack.c.b16 %v1126, %v1125
      %v1169 = vpack.c.b16 %v1128, %v1127
      %v1170 = vpack.c.b16 %v1130, %v1129
      %v1171 = vpack.c.b16 %v1132, %v1131
      %v1172 = vpack.c.b16 %v1134, %v1133
      %v1173 = vpack.c.b16 %v1136, %v1135
      %v1174 = vpack.c.b16 %v1138, %v1137
      %v1175 = vpack.c.b16 %v1140, %v1139
      %v1176 = vpack.c.b16 %v1142, %v1141
      %v1177 = vpack.c.b16 %v1144, %v1143
      %v1178 = vpack.c.b16 %v1146, %v1145
      %v1179 = vpack.c.b16 %v1148, %v1147
      %v1180 = vpack.c.b16 %v1150, %v1149
      %v1181 = vpack.c.b16 %v1152, %v1151
      %v1182 = vpack.c.b16 %v1154, %v1153
      %v1183 = vpack.c.b16 %v1156, %v1155
      %v1184 = vpack.c.b16 %v1158, %v1157
      %v1185 = vpack.c.b16 %v1160, %v1159
      %v1186 = vpack.c.b16 %v1162, %v1161
      %1211 = vmatprep.subr.bf16.mxu0 0
      %1212 = vmatpush1.bf16.msra.mxu0 %v1163
      %1213 = vmatprep.subr.bf16.mxu0 0
      %1214 = vmatpush1.bf16.msra.mxu0 %v1164
      %1215 = vmatprep.subr.bf16.mxu0 0
      %1216 = vmatpush1.bf16.msra.mxu0 %v1165
      %1217 = vmatprep.subr.bf16.mxu0 0
      %1218 = vmatpush1.bf16.msra.mxu0 %v1166
      %1219 = vmatprep.subr.bf16.mxu0 0
      %1220 = vmatpush1.bf16.msra.mxu0 %v1167
      %1221 = vmatprep.subr.bf16.mxu0 0
      %1222 = vmatpush1.bf16.msra.mxu0 %v1168
      %1223 = vmatprep.subr.bf16.mxu0 0
      %1224 = vmatpush1.bf16.msra.mxu0 %v1169
      %1225 = vmatprep.subr.bf16.mxu0 0
      %1226 = vmatpush1.bf16.msra.mxu0 %v1170
      %1227 = vmatprep.subr.bf16.mxu0 0
      %1228 = vmatpush1.bf16.msra.mxu0 %v1171
      %1229 = vmatprep.subr.bf16.mxu0 0
      %1230 = vmatpush1.bf16.msra.mxu0 %v1172
      %1231 = vmatprep.subr.bf16.mxu0 0
      %1232 = vmatpush1.bf16.msra.mxu0 %v1173
      %1233 = vmatprep.subr.bf16.mxu0 0
      %1234 = vmatpush1.bf16.msra.mxu0 %v1174
      %1235 = vmatprep.subr.bf16.mxu0 0
      %1236 = vmatpush1.bf16.msra.mxu0 %v1175
      %1237 = vmatprep.subr.bf16.mxu0 0
      %1238 = vmatpush1.bf16.msra.mxu0 %v1176
      %1239 = vmatprep.subr.bf16.mxu0 0
      %1240 = vmatpush1.bf16.msra.mxu0 %v1177
      %1241 = vmatprep.subr.bf16.mxu0 0
      %1242 = vmatpush1.bf16.msra.mxu0 %v1178
      %1243 = vmatprep.mubr.bf16.mxu0 %v243
      %1244 = vmatmul.mubr.bf16.gmra.mrb[0].mxu0 %v405
      %v1245 = vpop.f32.mrb[0].mxu0
      %v1246 = vadd.f32 %v941, %v1245
      %v1247 = vpop.f32.mrb[0].mxu0
      %v1248 = vpop.f32.mrb[0].mxu0
      %v1249 = vadd.f32 %v944, %v1248
      %v1250 = vpop.f32.mrb[0].mxu0
      %1251 = vmatprep.mubr.bf16.mxu0 %v242
      %1252 = vmatmul.mubr.bf16.gmra.mrb[0].mxu0 %v406
      %v1253 = vpop.f32.mrb[0].mxu0
      %v1254 = vadd.f32 %v949, %v1253
      %v1255 = vpop.f32.mrb[0].mxu0
      %v1256 = vpop.f32.mrb[0].mxu0
      %v1257 = vadd.f32 %v952, %v1256
      %v1258 = vpop.f32.mrb[0].mxu0
      %1259 = vmatprep.mubr.bf16.mxu0 %v243
      %1260 = vmatmul.mubr.bf16.gmra.mrb[0].mxu0 %v405
      %v1261 = vpop.f32.mrb[0].mxu0
      %v1262 = vadd.f32 %v957, %v1261
      %v1263 = vpop.f32.mrb[0].mxu0
      %v1264 = vpop.f32.mrb[0].mxu0
      %v1265 = vadd.f32 %v960, %v1264
      %v1266 = vpop.f32.mrb[0].mxu0
      %1267 = vmatprep.mubr.bf16.mxu0 %v244
      %1268 = vmatmul.mubr.bf16.gmra.mrb[0].mxu0 %v407
      %v1269 = vpop.f32.mrb[0].mxu0
      %v1270 = vadd.f32 %v965, %v1269
      %v1271 = vpop.f32.mrb[0].mxu0
      %v1272 = vpop.f32.mrb[0].mxu0
      %v1273 = vadd.f32 %v968, %v1272
      %v1274 = vpop.f32.mrb[0].mxu0
      %1275 = vmatprep.mubr.bf16.mxu0 %v245
      %1276 = vmatmul.mubr.bf16.gmra.mrb[0].mxu0 %v408
      %v1277 = vpop.f32.mrb[0].mxu0
      %v1278 = vadd.f32 %v973, %v1277
      %v1279 = vpop.f32.mrb[0].mxu0
      %v1280 = vpop.f32.mrb[0].mxu0
      %v1281 = vadd.f32 %v976, %v1280
      %v1282 = vpop.f32.mrb[0].mxu0
      %1283 = vmatprep.mubr.bf16.mxu0 %v246
      %1284 = vmatmul.mubr.bf16.gmra.mrb[0].mxu0 %v409
      %v1285 = vpop.f32.mrb[0].mxu0
      %v1286 = vadd.f32 %v981, %v1285
      %v1287 = vpop.f32.mrb[0].mxu0
      %v1288 = vpop.f32.mrb[0].mxu0
      %v1289 = vadd.f32 %v984, %v1288
      %v1290 = vpop.f32.mrb[0].mxu0
      %1291 = vmatprep.mubr.bf16.mxu0 %v247
      %1292 = vmatmul.mubr.bf16.gmra.mrb[0].mxu0 %v410
      %v1293 = vpop.f32.mrb[0].mxu0
      %v1294 = vadd.f32 %v989, %v1293
      %v1295 = vpop.f32.mrb[0].mxu0
      %v1296 = vpop.f32.mrb[0].mxu0
      %v1297 = vadd.f32 %v992, %v1296
      %v1298 = vpop.f32.mrb[0].mxu0
      %1299 = vmatprep.mubr.bf16.mxu0 %v248
      %1300 = vmatmul.mubr.bf16.gmra.mrb[0].mxu0 %v411
      %v1301 = vpop.f32.mrb[0].mxu0
      %v1302 = vadd.f32 %v997, %v1301
      %v1303 = vpop.f32.mrb[0].mxu0
      %v1304 = vpop.f32.mrb[0].mxu0
      %v1305 = vadd.f32 %v1000, %v1304
      %v1306 = vpop.f32.mrb[0].mxu0
      %1307 = vmatprep.mubr.bf16.mxu0 %v249
      %1308 = vmatmul.mubr.bf16.gmra.mrb[0].mxu0 %v412
      %v1309 = vpop.f32.mrb[0].mxu0
      %v1310 = vadd.f32 %v1005, %v1309
      %v1311 = vpop.f32.mrb[0].mxu0
      %v1312 = vpop.f32.mrb[0].mxu0
      %v1313 = vadd.f32 %v1008, %v1312
      %v1314 = vpop.f32.mrb[0].mxu0
      %1315 = vmatprep.mubr.bf16.mxu0 %v250
      %1316 = vmatmul.mubr.bf16.gmra.mrb[0].mxu0 %v413
      %v1317 = vpop.f32.mrb[0].mxu0
      %v1318 = vadd.f32 %v1013, %v1317
      %v1319 = vpop.f32.mrb[0].mxu0
      %v1320 = vpop.f32.mrb[0].mxu0
      %v1321 = vadd.f32 %v1016, %v1320
      %v1322 = vpop.f32.mrb[0].mxu0
      %1323 = vmatprep.mubr.bf16.mxu0 %v251
      %1324 = vmatmul.mubr.bf16.gmra.mrb[0].mxu0 %v414
      %v1325 = vpop.f32.mrb[0].mxu0
      %v1326 = vadd.f32 %v1021, %v1325
      %v1327 = vpop.f32.mrb[0].mxu0
      %v1328 = vpop.f32.mrb[0].mxu0
      %v1329 = vadd.f32 %v1024, %v1328
      %v1330 = vpop.f32.mrb[0].mxu0
      %1331 = vmatprep.mubr.bf16.mxu0 %v252
      %1332 = vmatmul.mubr.bf16.gmra.mrb[0].mxu0 %v415
      %v1333 = vpop.f32.mrb[0].mxu0
      %v1334 = vadd.f32 %v1029, %v1333
      %v1335 = vpop.f32.mrb[0].mxu0
      %v1336 = vpop.f32.mrb[0].mxu0
      %v1337 = vadd.f32 %v1032, %v1336
      %v1338 = vpop.f32.mrb[0].mxu0
      %1339 = vmatprep.mubr.bf16.mxu0 %v253
      %1340 = vmatmul.mubr.bf16.gmra.mrb[0].mxu0 %v416
      %v1341 = vpop.f32.mrb[0].mxu0
      %v1342 = vadd.f32 %v1037, %v1341
      %v1343 = vpop.f32.mrb[0].mxu0
      %v1344 = vpop.f32.mrb[0].mxu0
      %v1345 = vadd.f32 %v1040, %v1344
      %v1346 = vpop.f32.mrb[0].mxu0
      %1347 = vmatprep.mubr.bf16.mxu0 %v254
      %1348 = vmatmul.mubr.bf16.gmra.mrb[0].mxu0 %v417
      %v1349 = vpop.f32.mrb[0].mxu0
      %v1350 = vadd.f32 %v1045, %v1349
      %v1351 = vpop.f32.mrb[0].mxu0
      %v1352 = vpop.f32.mrb[0].mxu0
      %v1353 = vadd.f32 %v1048, %v1352
      %v1354 = vpop.f32.mrb[0].mxu0
      %1355 = vmatprep.mubr.bf16.mxu0 %v255
      %1356 = vmatmul.mubr.bf16.gmra.mrb[0].mxu0 %v418
      %v1357 = vpop.f32.mrb[0].mxu0
      %v1358 = vadd.f32 %v1053, %v1357
      %v1359 = vpop.f32.mrb[0].mxu0
      %v1360 = vpop.f32.mrb[0].mxu0
      %v1361 = vadd.f32 %v1056, %v1360
      %v1362 = vpop.f32.mrb[0].mxu0
      %1363 = vmatprep.mubr.bf16.mxu0 %v256
      %1364 = vmatmul.mubr.bf16.gmra.mrb[0].mxu0 %v419
      %v1365 = vpop.f32.mrb[0].mxu0
      %v1366 = vadd.f32 %v1061, %v1365
      %v1367 = vpop.f32.mrb[0].mxu0
      %v1368 = vpop.f32.mrb[0].mxu0
      %v1369 = vadd.f32 %v1064, %v1368
      %v1370 = vpop.f32.mrb[0].mxu0
      %1371 = vdwg.mxu0
      %1372 = vmatprep.subr.bf16.mxu0 0
      %1373 = vmatpush1.bf16.msra.mxu0 %v1179
      %1374 = vmatprep.subr.bf16.mxu0 0
      %1375 = vmatpush1.bf16.msra.mxu0 %v1180
      %1376 = vmatprep.subr.bf16.mxu0 0
      %1377 = vmatpush1.bf16.msra.mxu0 %v1181
      %1378 = vmatprep.subr.bf16.mxu0 0
      %1379 = vmatpush1.bf16.msra.mxu0 %v1182
      %1380 = vmatprep.subr.bf16.mxu0 0
      %1381 = vmatpush1.bf16.msra.mxu0 %v1183
      %1382 = vmatprep.subr.bf16.mxu0 0
      %1383 = vmatpush1.bf16.msra.mxu0 %v1184
      %1384 = vmatprep.subr.bf16.mxu0 0
      %1385 = vmatpush1.bf16.msra.mxu0 %v1185
      %1386 = vmatprep.subr.bf16.mxu0 0
      %1387 = vmatpush1.bf16.msra.mxu0 %v1186
      %1388 = vmatprep.subr.bf16.mxu0 0
      %1389 = vmatpush1.bf16.msra.mxu0 0
      %1390 = vmatprep.subr.bf16.mxu0 0
      %1391 = vmatpush1.bf16.msra.mxu0 0
      %1392 = vmatprep.subr.bf16.mxu0 0
      %1393 = vmatpush1.bf16.msra.mxu0 0
      %1394 = vmatprep.subr.bf16.mxu0 0
      %1395 = vmatpush1.bf16.msra.mxu0 0
      %1396 = vmatprep.subr.bf16.mxu0 0
      %1397 = vmatpush1.bf16.msra.mxu0 0
      %1398 = vmatprep.subr.bf16.mxu0 0
      %1399 = vmatpush1.bf16.msra.mxu0 0
      %1400 = vmatprep.subr.bf16.mxu0 0
      %1401 = vmatpush1.bf16.msra.mxu0 0
      %1402 = vmatprep.subr.bf16.mxu0 0
      %1403 = vmatpush1.bf16.msra.mxu0 0
      %1404 = vmatprep.mubr.bf16.mxu0 0
      %1405 = vmatmul.mubr.bf16.gmra.mrb[0].mxu0 %v488
      %v1406 = vpop.f32.mrb[0].mxu0
      %v1407 = vadd.f32 %v1246, %v1406
      %v1408 = vpop.f32.mrb[0].mxu0
      %v1409 = vpop.f32.mrb[0].mxu0
      %v1410 = vadd.f32 %v1249, %v1409
      %v1411 = vpop.f32.mrb[0].mxu0
      %1412 = vmatprep.mubr.bf16.mxu0 0
      %1413 = vmatmul.mubr.bf16.gmra.mrb[0].mxu0 %v489
      %v1414 = vpop.f32.mrb[0].mxu0
      %v1415 = vadd.f32 %v1254, %v1414
      %v1416 = vpop.f32.mrb[0].mxu0
      %v1417 = vpop.f32.mrb[0].mxu0
      %v1418 = vadd.f32 %v1257, %v1417
      %v1419 = vpop.f32.mrb[0].mxu0
      %1420 = vmatprep.mubr.bf16.mxu0 0
      %1421 = vmatmul.mubr.bf16.gmra.mrb[0].mxu0 %v488
      %v1422 = vpop.f32.mrb[0].mxu0
      %v1423 = vadd.f32 %v1262, %v1422
      %v1424 = vpop.f32.mrb[0].mxu0
      %v1425 = vpop.f32.mrb[0].mxu0
      %v1426 = vadd.f32 %v1265, %v1425
      %v1427 = vpop.f32.mrb[0].mxu0
      %1428 = vmatprep.mubr.bf16.mxu0 0
      %1429 = vmatmul.mubr.bf16.gmra.mrb[0].mxu0 %v490
      %v1430 = vpop.f32.mrb[0].mxu0
      %v1431 = vadd.f32 %v1270, %v1430
      %v1432 = vpop.f32.mrb[0].mxu0
      %v1433 = vpop.f32.mrb[0].mxu0
      %v1434 = vadd.f32 %v1273, %v1433
      %v1435 = vpop.f32.mrb[0].mxu0
      %1436 = vmatprep.mubr.bf16.mxu0 0
      %1437 = vmatmul.mubr.bf16.gmra.mrb[0].mxu0 %v491
      %v1438 = vpop.f32.mrb[0].mxu0
      %v1439 = vadd.f32 %v1278, %v1438
      %v1440 = vpop.f32.mrb[0].mxu0
      %v1441 = vpop.f32.mrb[0].mxu0
      %v1442 = vadd.f32 %v1281, %v1441
      %v1443 = vpop.f32.mrb[0].mxu0
      %1444 = vmatprep.mubr.bf16.mxu0 0
      %1445 = vmatmul.mubr.bf16.gmra.mrb[0].mxu0 %v492
      %v1446 = vpop.f32.mrb[0].mxu0
      %v1447 = vadd.f32 %v1286, %v1446
      %v1448 = vpop.f32.mrb[0].mxu0
      %v1449 = vpop.f32.mrb[0].mxu0
      %v1450 = vadd.f32 %v1289, %v1449
      %v1451 = vpop.f32.mrb[0].mxu0
      %1452 = vmatprep.mubr.bf16.mxu0 0
      %1453 = vmatmul.mubr.bf16.gmra.mrb[0].mxu0 %v493
      %v1454 = vpop.f32.mrb[0].mxu0
      %v1455 = vadd.f32 %v1294, %v1454
      %v1456 = vpop.f32.mrb[0].mxu0
      %v1457 = vpop.f32.mrb[0].mxu0
      %v1458 = vadd.f32 %v1297, %v1457
      %v1459 = vpop.f32.mrb[0].mxu0
      %1460 = vmatprep.mubr.bf16.mxu0 0
      %1461 = vmatmul.mubr.bf16.gmra.mrb[0].mxu0 %v494
      %v1462 = vpop.f32.mrb[0].mxu0
      %v1463 = vadd.f32 %v1302, %v1462
      %v1464 = vpop.f32.mrb[0].mxu0
      %v1465 = vpop.f32.mrb[0].mxu0
      %v1466 = vadd.f32 %v1305, %v1465
      %v1467 = vpop.f32.mrb[0].mxu0
      %1468 = vmatprep.mubr.bf16.mxu0 0
      %1469 = vmatmul.mubr.bf16.gmra.mrb[0].mxu0 %v495
      %v1470 = vpop.f32.mrb[0].mxu0
      %v1471 = vadd.f32 %v1310, %v1470
      %v1472 = vpop.f32.mrb[0].mxu0
      %v1473 = vpop.f32.mrb[0].mxu0
      %v1474 = vadd.f32 %v1313, %v1473
      %v1475 = vpop.f32.mrb[0].mxu0
      %1476 = vmatprep.mubr.bf16.mxu0 0
      %1477 = vmatmul.mubr.bf16.gmra.mrb[0].mxu0 %v496
      %v1478 = vpop.f32.mrb[0].mxu0
      %v1479 = vadd.f32 %v1318, %v1478
      %v1480 = vpop.f32.mrb[0].mxu0
      %v1481 = vpop.f32.mrb[0].mxu0
      %v1482 = vadd.f32 %v1321, %v1481
      %v1483 = vpop.f32.mrb[0].mxu0
      %1484 = vmatprep.mubr.bf16.mxu0 0
      %1485 = vmatmul.mubr.bf16.gmra.mrb[0].mxu0 %v497
      %v1486 = vpop.f32.mrb[0].mxu0
      %v1487 = vadd.f32 %v1326, %v1486
      %v1488 = vpop.f32.mrb[0].mxu0
      %v1489 = vpop.f32.mrb[0].mxu0
      %v1490 = vadd.f32 %v1329, %v1489
      %v1491 = vpop.f32.mrb[0].mxu0
      %1492 = vmatprep.mubr.bf16.mxu0 0
      %1493 = vmatmul.mubr.bf16.gmra.mrb[0].mxu0 %v498
      %v1494 = vpop.f32.mrb[0].mxu0
      %v1495 = vadd.f32 %v1334, %v1494
      %v1496 = vpop.f32.mrb[0].mxu0
      %v1497 = vpop.f32.mrb[0].mxu0
      %v1498 = vadd.f32 %v1337, %v1497
      %v1499 = vpop.f32.mrb[0].mxu0
      %1500 = vmatprep.mubr.bf16.mxu0 0
      %1501 = vmatmul.mubr.bf16.gmra.mrb[0].mxu0 %v499
      %v1502 = vpop.f32.mrb[0].mxu0
      %v1503 = vadd.f32 %v1342, %v1502
      %v1504 = vpop.f32.mrb[0].mxu0
      %v1505 = vpop.f32.mrb[0].mxu0
      %v1506 = vadd.f32 %v1345, %v1505
      %v1507 = vpop.f32.mrb[0].mxu0
      %1508 = vmatprep.mubr.bf16.mxu0 0
      %1509 = vmatmul.mubr.bf16.gmra.mrb[0].mxu0 %v500
      %v1510 = vpop.f32.mrb[0].mxu0
      %v1511 = vadd.f32 %v1350, %v1510
      %v1512 = vpop.f32.mrb[0].mxu0
      %v1513 = vpop.f32.mrb[0].mxu0
      %v1514 = vadd.f32 %v1353, %v1513
      %v1515 = vpop.f32.mrb[0].mxu0
      %1516 = vmatprep.mubr.bf16.mxu0 0
      %1517 = vmatmul.mubr.bf16.gmra.mrb[0].mxu0 %v501
      %v1518 = vpop.f32.mrb[0].mxu0
      %v1519 = vadd.f32 %v1358, %v1518
      %v1520 = vpop.f32.mrb[0].mxu0
      %v1521 = vpop.f32.mrb[0].mxu0
      %v1522 = vadd.f32 %v1361, %v1521
      %v1523 = vpop.f32.mrb[0].mxu0
      %1524 = vmatprep.mubr.bf16.mxu0 0
      %1525 = vmatmul.mubr.bf16.gmra.mrb[0].mxu0 %v502
      %v1526 = vpop.f32.mrb[0].mxu0
      %v1527 = vadd.f32 %v1366, %v1526
      %v1528 = vpop.f32.mrb[0].mxu0
      %v1529 = vpop.f32.mrb[0].mxu0
      %v1530 = vadd.f32 %v1369, %v1529
      %v1531 = vpop.f32.mrb[0].mxu0
      %1532 = vdwg.mxu0
      %s1533 = scalar_lea.vmem %s1, 384
      %v1534 = vld [vmem:[%s1533] sm:$0xf]
      %v1535 = vld [vmem:[%s1533 + $0x4] sm:$0xf]
      %v1536 = vld [vmem:[%s1533 + $0x8] sm:$0xf]
      %v1537 = vld [vmem:[%s1533 + $0xc] sm:$0xf]
      %v1538 = vld [vmem:[%s1533 + $0x10] sm:$0xf]
      %v1539 = vld [vmem:[%s1533 + $0x14] sm:$0xf]
      %v1540 = vld [vmem:[%s1533 + $0x18] sm:$0xf]
      %v1541 = vld [vmem:[%s1533 + $0x1c] sm:$0xf]
      %v1542 = vld [vmem:[%s1533 + $0x20] sm:$0xf]
      %v1543 = vld [vmem:[%s1533 + $0x24] sm:$0xf]
      %v1544 = vld [vmem:[%s1533 + $0x28] sm:$0xf]
      %v1545 = vld [vmem:[%s1533 + $0x2c] sm:$0xf]
      %v1546 = vld [vmem:[%s1533 + $0x30] sm:$0xf]
      %v1547 = vld [vmem:[%s1533 + $0x34] sm:$0xf]
      %v1548 = vld [vmem:[%s1533 + $0x38] sm:$0xf]
      %v1549 = vld [vmem:[%s1533 + $0x3c] sm:$0xf]
      %v1550 = vld [vmem:[%s1533 + $0x40] sm:$0xf]
      %v1551 = vld [vmem:[%s1533 + $0x44] sm:$0xf]
      %v1552 = vld [vmem:[%s1533 + $0x48] sm:$0xf]
      %v1553 = vld [vmem:[%s1533 + $0x4c] sm:$0xf]
      %v1554 = vld [vmem:[%s1533 + $0x50] sm:$0xf]
      %v1555 = vld [vmem:[%s1533 + $0x54] sm:$0xf]
      %v1556 = vld [vmem:[%s1533 + $0x58] sm:$0xf]
      %v1557 = vld [vmem:[%s1533 + $0x5c] sm:$0xf]
      %v1558 = vld [vmem:[%s1533 + $0x60] sm:$0xf]
      %v1559 = vld [vmem:[%s1533 + $0x64] sm:$0xf]
      %v1560 = vld [vmem:[%s1533 + $0x68] sm:$0xf]
      %v1561 = vld [vmem:[%s1533 + $0x6c] sm:$0xf]
      %v1562 = vld [vmem:[%s1533 + $0x70] sm:$0xf]
      %v1563 = vld [vmem:[%s1533 + $0x74] sm:$0xf]
      %v1564 = vld [vmem:[%s1533 + $0x78] sm:$0xf]
      %v1565 = vld [vmem:[%s1533 + $0x7c] sm:$0xf]
      %v1566 = vld [vmem:[%s1533 + $0x80] sm:$0xf]
      %v1567 = vld [vmem:[%s1533 + $0x84] sm:$0xf]
      %v1568 = vld [vmem:[%s1533 + $0x88] sm:$0xf]
      %v1569 = vld [vmem:[%s1533 + $0x8c] sm:$0xf]
      %v1570 = vld [vmem:[%s1533 + $0x90] sm:$0xf]
      %v1571 = vld [vmem:[%s1533 + $0x94] sm:$0xf]
      %v1572 = vld [vmem:[%s1533 + $0x98] sm:$0xf]
      %v1573 = vld [vmem:[%s1533 + $0x9c] sm:$0xf]
      %v1574 = vld [vmem:[%s1533 + $0xa0] sm:$0xf]
      %v1575 = vld [vmem:[%s1533 + $0xa4] sm:$0xf]
      %v1576 = vld [vmem:[%s1533 + $0xa8] sm:$0xf]
      %v1577 = vld [vmem:[%s1533 + $0xac] sm:$0xf]
      %v1578 = vld [vmem:[%s1533 + $0xb0] sm:$0xf]
      %v1579 = vld [vmem:[%s1533 + $0xb4] sm:$0xf]
      %v1580 = vld [vmem:[%s1533 + $0xb8] sm:$0xf]
      %v1581 = vld [vmem:[%s1533 + $0xbc] sm:$0xf]
      %v1630 = vunpack.c.l.b16 %v1534
      %v1631 = vunpack.c.l.b16 %v1535
      %v1632 = vunpack.c.l.b16 %v1536
      %v1633 = vunpack.c.l.b16 %v1537
      %v1634 = vunpack.c.l.b16 %v1538
      %v1635 = vunpack.c.l.b16 %v1539
      %v1636 = vunpack.c.l.b16 %v1540
      %v1637 = vunpack.c.l.b16 %v1541
      %v1638 = vunpack.c.l.b16 %v1542
      %v1639 = vunpack.c.l.b16 %v1543
      %v1640 = vunpack.c.l.b16 %v1544
      %v1641 = vunpack.c.l.b16 %v1545
      %v1642 = vunpack.c.l.b16 %v1546
      %v1643 = vunpack.c.l.b16 %v1547
      %v1644 = vunpack.c.l.b16 %v1548
      %v1645 = vunpack.c.l.b16 %v1549
      %v1646 = vunpack.c.l.b16 %v1550
      %v1647 = vunpack.c.l.b16 %v1551
      %v1648 = vunpack.c.l.b16 %v1552
      %v1649 = vunpack.c.l.b16 %v1553
      %v1650 = vunpack.c.l.b16 %v1554
      %v1651 = vunpack.c.l.b16 %v1555
      %v1652 = vunpack.c.l.b16 %v1556
      %v1653 = vunpack.c.l.b16 %v1557
      %v1654 = vunpack.c.l.b16 %v1558
      %v1655 = vunpack.c.l.b16 %v1559
      %v1656 = vunpack.c.l.b16 %v1560
      %v1657 = vunpack.c.l.b16 %v1561
      %v1658 = vunpack.c.l.b16 %v1562
      %v1659 = vunpack.c.l.b16 %v1563
      %v1660 = vunpack.c.l.b16 %v1564
      %v1661 = vunpack.c.l.b16 %v1565
      %v1662 = vunpack.c.l.b16 %v1566
      %v1663 = vunpack.c.l.b16 %v1567
      %v1664 = vunpack.c.l.b16 %v1568
      %v1665 = vunpack.c.l.b16 %v1569
      %v1666 = vunpack.c.l.b16 %v1570
      %v1667 = vunpack.c.l.b16 %v1571
      %v1668 = vunpack.c.l.b16 %v1572
      %v1669 = vunpack.c.l.b16 %v1573
      %v1670 = vunpack.c.l.b16 %v1574
      %v1671 = vunpack.c.l.b16 %v1575
      %v1672 = vunpack.c.l.b16 %v1576
      %v1673 = vunpack.c.l.b16 %v1577
      %v1674 = vunpack.c.l.b16 %v1578
      %v1675 = vunpack.c.l.b16 %v1579
      %v1676 = vunpack.c.l.b16 %v1580
      %v1677 = vunpack.c.l.b16 %v1581
      %v1678 = vpack.c.b16 %v1631, %v1630
      %v1679 = vpack.c.b16 %v1633, %v1632
      %v1680 = vpack.c.b16 %v1635, %v1634
      %v1681 = vpack.c.b16 %v1637, %v1636
      %v1682 = vpack.c.b16 %v1639, %v1638
      %v1683 = vpack.c.b16 %v1641, %v1640
      %v1684 = vpack.c.b16 %v1643, %v1642
      %v1685 = vpack.c.b16 %v1645, %v1644
      %v1686 = vpack.c.b16 %v1647, %v1646
      %v1687 = vpack.c.b16 %v1649, %v1648
      %v1688 = vpack.c.b16 %v1651, %v1650
      %v1689 = vpack.c.b16 %v1653, %v1652
      %v1690 = vpack.c.b16 %v1655, %v1654
      %v1691 = vpack.c.b16 %v1657, %v1656
      %v1692 = vpack.c.b16 %v1659, %v1658
      %v1693 = vpack.c.b16 %v1661, %v1660
      %v1694 = vpack.c.b16 %v1663, %v1662
      %v1695 = vpack.c.b16 %v1665, %v1664
      %v1696 = vpack.c.b16 %v1667, %v1666
      %v1697 = vpack.c.b16 %v1669, %v1668
      %v1698 = vpack.c.b16 %v1671, %v1670
      %v1699 = vpack.c.b16 %v1673, %v1672
      %v1700 = vpack.c.b16 %v1675, %v1674
      %v1701 = vpack.c.b16 %v1677, %v1676
      %1726 = vmatprep.subr.bf16.mxu0 0
      %1727 = vmatpush1.bf16.msra.mxu0 %v1678
      %1728 = vmatprep.subr.bf16.mxu0 0
      %1729 = vmatpush1.bf16.msra.mxu0 %v1679
      %1730 = vmatprep.subr.bf16.mxu0 0
      %1731 = vmatpush1.bf16.msra.mxu0 %v1680
      %1732 = vmatprep.subr.bf16.mxu0 0
      %1733 = vmatpush1.bf16.msra.mxu0 %v1681
      %1734 = vmatprep.subr.bf16.mxu0 0
      %1735 = vmatpush1.bf16.msra.mxu0 %v1682
      %1736 = vmatprep.subr.bf16.mxu0 0
      %1737 = vmatpush1.bf16.msra.mxu0 %v1683
      %1738 = vmatprep.subr.bf16.mxu0 0
      %1739 = vmatpush1.bf16.msra.mxu0 %v1684
      %1740 = vmatprep.subr.bf16.mxu0 0
      %1741 = vmatpush1.bf16.msra.mxu0 %v1685
      %1742 = vmatprep.subr.bf16.mxu0 0
      %1743 = vmatpush1.bf16.msra.mxu0 %v1686
      %1744 = vmatprep.subr.bf16.mxu0 0
      %1745 = vmatpush1.bf16.msra.mxu0 %v1687
      %1746 = vmatprep.subr.bf16.mxu0 0
      %1747 = vmatpush1.bf16.msra.mxu0 %v1688
      %1748 = vmatprep.subr.bf16.mxu0 0
      %1749 = vmatpush1.bf16.msra.mxu0 %v1689
      %1750 = vmatprep.subr.bf16.mxu0 0
      %1751 = vmatpush1.bf16.msra.mxu0 %v1690
      %1752 = vmatprep.subr.bf16.mxu0 0
      %1753 = vmatpush1.bf16.msra.mxu0 %v1691
      %1754 = vmatprep.subr.bf16.mxu0 0
      %1755 = vmatpush1.bf16.msra.mxu0 %v1692
      %1756 = vmatprep.subr.bf16.mxu0 0
      %1757 = vmatpush1.bf16.msra.mxu0 %v1693
      %1758 = vmatprep.mubr.bf16.mxu0 %v243
      %1759 = vmatmul.mubr.bf16.gmra.mrb[0].mxu0 %v405
      %v1760 = vpop.f32.mrb[0].mxu0
      %v1761 = vadd.f32 0.0, %v1760
      %v1762 = vpop.f32.mrb[0].mxu0
      %v1763 = vpop.f32.mrb[0].mxu0
      %v1764 = vadd.f32 0.0, %v1763
      %v1765 = vpop.f32.mrb[0].mxu0
      %1766 = vmatprep.mubr.bf16.mxu0 %v244
      %1767 = vmatmul.mubr.bf16.gmra.mrb[0].mxu0 %v407
      %v1768 = vpop.f32.mrb[0].mxu0
      %v1769 = vadd.f32 0.0, %v1768
      %v1770 = vpop.f32.mrb[0].mxu0
      %v1771 = vpop.f32.mrb[0].mxu0
      %v1772 = vadd.f32 0.0, %v1771
      %v1773 = vpop.f32.mrb[0].mxu0
      %1774 = vmatprep.mubr.bf16.mxu0 %v245
      %1775 = vmatmul.mubr.bf16.gmra.mrb[0].mxu0 %v408
      %v1776 = vpop.f32.mrb[0].mxu0
      %v1777 = vadd.f32 0.0, %v1776
      %v1778 = vpop.f32.mrb[0].mxu0
      %v1779 = vpop.f32.mrb[0].mxu0
      %v1780 = vadd.f32 0.0, %v1779
      %v1781 = vpop.f32.mrb[0].mxu0
      %1782 = vmatprep.mubr.bf16.mxu0 %v246
      %1783 = vmatmul.mubr.bf16.gmra.mrb[0].mxu0 %v409
      %v1784 = vpop.f32.mrb[0].mxu0
      %v1785 = vadd.f32 0.0, %v1784
      %v1786 = vpop.f32.mrb[0].mxu0
      %v1787 = vpop.f32.mrb[0].mxu0
      %v1788 = vadd.f32 0.0, %v1787
      %v1789 = vpop.f32.mrb[0].mxu0
      %1790 = vmatprep.mubr.bf16.mxu0 %v247
      %1791 = vmatmul.mubr.bf16.gmra.mrb[0].mxu0 %v410
      %v1792 = vpop.f32.mrb[0].mxu0
      %v1793 = vadd.f32 0.0, %v1792
      %v1794 = vpop.f32.mrb[0].mxu0
      %v1795 = vpop.f32.mrb[0].mxu0
      %v1796 = vadd.f32 0.0, %v1795
      %v1797 = vpop.f32.mrb[0].mxu0
      %1798 = vmatprep.mubr.bf16.mxu0 %v248
      %1799 = vmatmul.mubr.bf16.gmra.mrb[0].mxu0 %v411
      %v1800 = vpop.f32.mrb[0].mxu0
      %v1801 = vadd.f32 0.0, %v1800
      %v1802 = vpop.f32.mrb[0].mxu0
      %v1803 = vpop.f32.mrb[0].mxu0
      %v1804 = vadd.f32 0.0, %v1803
      %v1805 = vpop.f32.mrb[0].mxu0
      %1806 = vmatprep.mubr.bf16.mxu0 %v249
      %1807 = vmatmul.mubr.bf16.gmra.mrb[0].mxu0 %v412
      %v1808 = vpop.f32.mrb[0].mxu0
      %v1809 = vadd.f32 0.0, %v1808
      %v1810 = vpop.f32.mrb[0].mxu0
      %v1811 = vpop.f32.mrb[0].mxu0
      %v1812 = vadd.f32 0.0, %v1811
      %v1813 = vpop.f32.mrb[0].mxu0
      %1814 = vmatprep.mubr.bf16.mxu0 %v250
      %1815 = vmatmul.mubr.bf16.gmra.mrb[0].mxu0 %v413
      %v1816 = vpop.f32.mrb[0].mxu0
      %v1817 = vadd.f32 0.0, %v1816
      %v1818 = vpop.f32.mrb[0].mxu0
      %v1819 = vpop.f32.mrb[0].mxu0
      %v1820 = vadd.f32 0.0, %v1819
      %v1821 = vpop.f32.mrb[0].mxu0
      %1822 = vmatprep.mubr.bf16.mxu0 %v251
      %1823 = vmatmul.mubr.bf16.gmra.mrb[0].mxu0 %v414
      %v1824 = vpop.f32.mrb[0].mxu0
      %v1825 = vadd.f32 0.0, %v1824
      %v1826 = vpop.f32.mrb[0].mxu0
      %v1827 = vpop.f32.mrb[0].mxu0
      %v1828 = vadd.f32 0.0, %v1827
      %v1829 = vpop.f32.mrb[0].mxu0
      %1830 = vmatprep.mubr.bf16.mxu0 %v252
      %1831 = vmatmul.mubr.bf16.gmra.mrb[0].mxu0 %v415
      %v1832 = vpop.f32.mrb[0].mxu0
      %v1833 = vadd.f32 0.0, %v1832
      %v1834 = vpop.f32.mrb[0].mxu0
      %v1835 = vpop.f32.mrb[0].mxu0
      %v1836 = vadd.f32 0.0, %v1835
      %v1837 = vpop.f32.mrb[0].mxu0
      %1838 = vmatprep.mubr.bf16.mxu0 %v253
      %1839 = vmatmul.mubr.bf16.gmra.mrb[0].mxu0 %v416
      %v1840 = vpop.f32.mrb[0].mxu0
      %v1841 = vadd.f32 0.0, %v1840
      %v1842 = vpop.f32.mrb[0].mxu0
      %v1843 = vpop.f32.mrb[0].mxu0
      %v1844 = vadd.f32 0.0, %v1843
      %v1845 = vpop.f32.mrb[0].mxu0
      %1846 = vmatprep.mubr.bf16.mxu0 %v254
      %1847 = vmatmul.mubr.bf16.gmra.mrb[0].mxu0 %v417
      %v1848 = vpop.f32.mrb[0].mxu0
      %v1849 = vadd.f32 0.0, %v1848
      %v1850 = vpop.f32.mrb[0].mxu0
      %v1851 = vpop.f32.mrb[0].mxu0
      %v1852 = vadd.f32 0.0, %v1851
      %v1853 = vpop.f32.mrb[0].mxu0
      %1854 = vmatprep.mubr.bf16.mxu0 %v255
      %1855 = vmatmul.mubr.bf16.gmra.mrb[0].mxu0 %v418
      %v1856 = vpop.f32.mrb[0].mxu0
      %v1857 = vadd.f32 0.0, %v1856
      %v1858 = vpop.f32.mrb[0].mxu0
      %v1859 = vpop.f32.mrb[0].mxu0
      %v1860 = vadd.f32 0.0, %v1859
      %v1861 = vpop.f32.mrb[0].mxu0
      %1862 = vmatprep.mubr.bf16.mxu0 %v256
      %1863 = vmatmul.mubr.bf16.gmra.mrb[0].mxu0 %v419
      %v1864 = vpop.f32.mrb[0].mxu0
      %v1865 = vadd.f32 0.0, %v1864
      %v1866 = vpop.f32.mrb[0].mxu0
      %v1867 = vpop.f32.mrb[0].mxu0
      %v1868 = vadd.f32 0.0, %v1867
      %v1869 = vpop.f32.mrb[0].mxu0
      %1870 = vmatprep.mubr.bf16.mxu0 %v257
      %1871 = vmatmul.mubr.bf16.gmra.mrb[0].mxu0 %v420
      %v1872 = vpop.f32.mrb[0].mxu0
      %v1873 = vadd.f32 0.0, %v1872
      %v1874 = vpop.f32.mrb[0].mxu0
      %v1875 = vpop.f32.mrb[0].mxu0
      %v1876 = vadd.f32 0.0, %v1875
      %v1877 = vpop.f32.mrb[0].mxu0
      %1878 = vmatprep.mubr.bf16.mxu0 %v256
      %1879 = vmatmul.mubr.bf16.gmra.mrb[0].mxu0 %v419
      %v1880 = vpop.f32.mrb[0].mxu0
      %v1881 = vadd.f32 0.0, %v1880
      %v1882 = vpop.f32.mrb[0].mxu0
      %v1883 = vpop.f32.mrb[0].mxu0
      %v1884 = vadd.f32 0.0, %v1883
      %v1885 = vpop.f32.mrb[0].mxu0
      %1886 = vdwg.mxu0
      %1887 = vmatprep.subr.bf16.mxu0 0
      %1888 = vmatpush1.bf16.msra.mxu0 %v1694
      %1889 = vmatprep.subr.bf16.mxu0 0
      %1890 = vmatpush1.bf16.msra.mxu0 %v1695
      %1891 = vmatprep.subr.bf16.mxu0 0
      %1892 = vmatpush1.bf16.msra.mxu0 %v1696
      %1893 = vmatprep.subr.bf16.mxu0 0
      %1894 = vmatpush1.bf16.msra.mxu0 %v1697
      %1895 = vmatprep.subr.bf16.mxu0 0
      %1896 = vmatpush1.bf16.msra.mxu0 %v1698
      %1897 = vmatprep.subr.bf16.mxu0 0
      %1898 = vmatpush1.bf16.msra.mxu0 %v1699
      %1899 = vmatprep.subr.bf16.mxu0 0
      %1900 = vmatpush1.bf16.msra.mxu0 %v1700
      %1901 = vmatprep.subr.bf16.mxu0 0
      %1902 = vmatpush1.bf16.msra.mxu0 %v1701
      %1903 = vmatprep.subr.bf16.mxu0 0
      %1904 = vmatpush1.bf16.msra.mxu0 0
      %1905 = vmatprep.subr.bf16.mxu0 0
      %1906 = vmatpush1.bf16.msra.mxu0 0
      %1907 = vmatprep.subr.bf16.mxu0 0
      %1908 = vmatpush1.bf16.msra.mxu0 0
      %1909 = vmatprep.subr.bf16.mxu0 0
      %1910 = vmatpush1.bf16.msra.mxu0 0
      %1911 = vmatprep.subr.bf16.mxu0 0
      %1912 = vmatpush1.bf16.msra.mxu0 0
      %1913 = vmatprep.subr.bf16.mxu0 0
      %1914 = vmatpush1.bf16.msra.mxu0 0
      %1915 = vmatprep.subr.bf16.mxu0 0
      %1916 = vmatpush1.bf16.msra.mxu0 0
      %1917 = vmatprep.subr.bf16.mxu0 0
      %1918 = vmatpush1.bf16.msra.mxu0 0
      %1919 = vmatprep.mubr.bf16.mxu0 0
      %1920 = vmatmul.mubr.bf16.gmra.mrb[0].mxu0 %v488
      %v1921 = vpop.f32.mrb[0].mxu0
      %v1922 = vadd.f32 %v1761, %v1921
      %v1923 = vpop.f32.mrb[0].mxu0
      %v1924 = vpop.f32.mrb[0].mxu0
      %v1925 = vadd.f32 %v1764, %v1924
      %v1926 = vpop.f32.mrb[0].mxu0
      %1927 = vmatprep.mubr.bf16.mxu0 0
      %1928 = vmatmul.mubr.bf16.gmra.mrb[0].mxu0 %v490
      %v1929 = vpop.f32.mrb[0].mxu0
      %v1930 = vadd.f32 %v1769, %v1929
      %v1931 = vpop.f32.mrb[0].mxu0
      %v1932 = vpop.f32.mrb[0].mxu0
      %v1933 = vadd.f32 %v1772, %v1932
      %v1934 = vpop.f32.mrb[0].mxu0
      %1935 = vmatprep.mubr.bf16.mxu0 0
      %1936 = vmatmul.mubr.bf16.gmra.mrb[0].mxu0 %v491
      %v1937 = vpop.f32.mrb[0].mxu0
      %v1938 = vadd.f32 %v1777, %v1937
      %v1939 = vpop.f32.mrb[0].mxu0
      %v1940 = vpop.f32.mrb[0].mxu0
      %v1941 = vadd.f32 %v1780, %v1940
      %v1942 = vpop.f32.mrb[0].mxu0
      %1943 = vmatprep.mubr.bf16.mxu0 0
      %1944 = vmatmul.mubr.bf16.gmra.mrb[0].mxu0 %v492
      %v1945 = vpop.f32.mrb[0].mxu0
      %v1946 = vadd.f32 %v1785, %v1945
      %v1947 = vpop.f32.mrb[0].mxu0
      %v1948 = vpop.f32.mrb[0].mxu0
      %v1949 = vadd.f32 %v1788, %v1948
      %v1950 = vpop.f32.mrb[0].mxu0
      %1951 = vmatprep.mubr.bf16.mxu0 0
      %1952 = vmatmul.mubr.bf16.gmra.mrb[0].mxu0 %v493
      %v1953 = vpop.f32.mrb[0].mxu0
      %v1954 = vadd.f32 %v1793, %v1953
      %v1955 = vpop.f32.mrb[0].mxu0
      %v1956 = vpop.f32.mrb[0].mxu0
      %v1957 = vadd.f32 %v1796, %v1956
      %v1958 = vpop.f32.mrb[0].mxu0
      %1959 = vmatprep.mubr.bf16.mxu0 0
      %1960 = vmatmul.mubr.bf16.gmra.mrb[0].mxu0 %v494
      %v1961 = vpop.f32.mrb[0].mxu0
      %v1962 = vadd.f32 %v1801, %v1961
      %v1963 = vpop.f32.mrb[0].mxu0
      %v1964 = vpop.f32.mrb[0].mxu0
      %v1965 = vadd.f32 %v1804, %v1964
      %v1966 = vpop.f32.mrb[0].mxu0
      %1967 = vmatprep.mubr.bf16.mxu0 0
      %1968 = vmatmul.mubr.bf16.gmra.mrb[0].mxu0 %v495
      %v1969 = vpop.f32.mrb[0].mxu0
      %v1970 = vadd.f32 %v1809, %v1969
      %v1971 = vpop.f32.mrb[0].mxu0
      %v1972 = vpop.f32.mrb[0].mxu0
      %v1973 = vadd.f32 %v1812, %v1972
      %v1974 = vpop.f32.mrb[0].mxu0
      %1975 = vmatprep.mubr.bf16.mxu0 0
      %1976 = vmatmul.mubr.bf16.gmra.mrb[0].mxu0 %v496
      %v1977 = vpop.f32.mrb[0].mxu0
      %v1978 = vadd.f32 %v1817, %v1977
      %v1979 = vpop.f32.mrb[0].mxu0
      %v1980 = vpop.f32.mrb[0].mxu0
      %v1981 = vadd.f32 %v1820, %v1980
      %v1982 = vpop.f32.mrb[0].mxu0
      %1983 = vmatprep.mubr.bf16.mxu0 0
      %1984 = vmatmul.mubr.bf16.gmra.mrb[0].mxu0 %v497
      %v1985 = vpop.f32.mrb[0].mxu0
      %v1986 = vadd.f32 %v1825, %v1985
      %v1987 = vpop.f32.mrb[0].mxu0
      %v1988 = vpop.f32.mrb[0].mxu0
      %v1989 = vadd.f32 %v1828, %v1988
      %v1990 = vpop.f32.mrb[0].mxu0
      %1991 = vmatprep.mubr.bf16.mxu0 0
      %1992 = vmatmul.mubr.bf16.gmra.mrb[0].mxu0 %v498
      %v1993 = vpop.f32.mrb[0].mxu0
      %v1994 = vadd.f32 %v1833, %v1993
      %v1995 = vpop.f32.mrb[0].mxu0
      %v1996 = vpop.f32.mrb[0].mxu0
      %v1997 = vadd.f32 %v1836, %v1996
      %v1998 = vpop.f32.mrb[0].mxu0
      %1999 = vmatprep.mubr.bf16.mxu0 0
      %2000 = vmatmul.mubr.bf16.gmra.mrb[0].mxu0 %v499
      %v2001 = vpop.f32.mrb[0].mxu0
      %v2002 = vadd.f32 %v1841, %v2001
      %v2003 = vpop.f32.mrb[0].mxu0
      %v2004 = vpop.f32.mrb[0].mxu0
      %v2005 = vadd.f32 %v1844, %v2004
      %v2006 = vpop.f32.mrb[0].mxu0
      %2007 = vmatprep.mubr.bf16.mxu0 0
      %2008 = vmatmul.mubr.bf16.gmra.mrb[0].mxu0 %v500
      %v2009 = vpop.f32.mrb[0].mxu0
      %v2010 = vadd.f32 %v1849, %v2009
      %v2011 = vpop.f32.mrb[0].mxu0
      %v2012 = vpop.f32.mrb[0].mxu0
      %v2013 = vadd.f32 %v1852, %v2012
      %v2014 = vpop.f32.mrb[0].mxu0
      %2015 = vmatprep.mubr.bf16.mxu0 0
      %2016 = vmatmul.mubr.bf16.gmra.mrb[0].mxu0 %v501
      %v2017 = vpop.f32.mrb[0].mxu0
      %v2018 = vadd.f32 %v1857, %v2017
      %v2019 = vpop.f32.mrb[0].mxu0
      %v2020 = vpop.f32.mrb[0].mxu0
      %v2021 = vadd.f32 %v1860, %v2020
      %v2022 = vpop.f32.mrb[0].mxu0
      %2023 = vmatprep.mubr.bf16.mxu0 0
      %2024 = vmatmul.mubr.bf16.gmra.mrb[0].mxu0 %v502
      %v2025 = vpop.f32.mrb[0].mxu0
      %v2026 = vadd.f32 %v1865, %v2025
      %v2027 = vpop.f32.mrb[0].mxu0
      %v2028 = vpop.f32.mrb[0].mxu0
      %v2029 = vadd.f32 %v1868, %v2028
      %v2030 = vpop.f32.mrb[0].mxu0
      %2031 = vmatprep.mubr.bf16.mxu0 0
      %2032 = vmatmul.mubr.bf16.gmra.mrb[0].mxu0 %v503
      %v2033 = vpop.f32.mrb[0].mxu0
      %v2034 = vadd.f32 %v1873, %v2033
      %v2035 = vpop.f32.mrb[0].mxu0
      %v2036 = vpop.f32.mrb[0].mxu0
      %v2037 = vadd.f32 %v1876, %v2036
      %v2038 = vpop.f32.mrb[0].mxu0
      %2039 = vmatprep.mubr.bf16.mxu0 0
      %2040 = vmatmul.mubr.bf16.gmra.mrb[0].mxu0 %v502
      %v2041 = vpop.f32.mrb[0].mxu0
      %v2042 = vadd.f32 %v1881, %v2041
      %v2043 = vpop.f32.mrb[0].mxu0
      %v2044 = vpop.f32.mrb[0].mxu0
      %v2045 = vadd.f32 %v1884, %v2044
      %v2046 = vpop.f32.mrb[0].mxu0
      %2047 = vdwg.mxu0
      %v2048 = vadd.f32 %v1407, %v1922
      %v2049 = vadd.f32 %v1410, %v1925
      %v2050 = vadd.f32 %v1415, %v1930
      %v2051 = vadd.f32 %v1418, %v1933
      %v2052 = vadd.f32 %v1423, %v1938
      %v2053 = vadd.f32 %v1426, %v1941
      %v2054 = vadd.f32 %v1431, %v1946
      %v2055 = vadd.f32 %v1434, %v1949
      %v2056 = vadd.f32 %v1439, %v1954
      %v2057 = vadd.f32 %v1442, %v1957
      %v2058 = vadd.f32 %v1447, %v1962
      %v2059 = vadd.f32 %v1450, %v1965
      %v2060 = vadd.f32 %v1455, %v1970
      %v2061 = vadd.f32 %v1458, %v1973
      %v2062 = vadd.f32 %v1463, %v1978
      %v2063 = vadd.f32 %v1466, %v1981
      %v2064 = vadd.f32 %v1471, %v1986
      %v2065 = vadd.f32 %v1474, %v1989
      %v2066 = vadd.f32 %v1479, %v1994
      %v2067 = vadd.f32 %v1482, %v1997
      %v2068 = vadd.f32 %v1487, %v2002
      %v2069 = vadd.f32 %v1490, %v2005
      %v2070 = vadd.f32 %v1495, %v2010
      %v2071 = vadd.f32 %v1498, %v2013
      %v2072 = vadd.f32 %v1503, %v2018
      %v2073 = vadd.f32 %v1506, %v2021
      %v2074 = vadd.f32 %v1511, %v2026
      %v2075 = vadd.f32 %v1514, %v2029
      %v2076 = vadd.f32 %v1519, %v2034
      %v2077 = vadd.f32 %v1522, %v2037
      %v2078 = vadd.f32 %v1527, %v2042
      %v2079 = vadd.f32 %v1530, %v2045
      %v2080 = vld [vmem:[%s2] sm:$0x1]
      %v2082 = vlaneseq
      %v2083 = vshrl.u32 %v2082, 7
      %v2084 = vsub.s32 0, %v2083
      %v2085 = vrot.slane %v2080, %v2084
      %v2087 = vadd.f32 %v2048, %v2085
      %v2088 = vadd.f32 %v2049, %v2085
      %v2089 = vadd.f32 %v2050, %v2085
      %v2090 = vadd.f32 %v2051, %v2085
      %v2091 = vadd.f32 %v2052, %v2085
      %v2092 = vadd.f32 %v2053, %v2085
      %v2093 = vadd.f32 %v2054, %v2085
      %v2094 = vadd.f32 %v2055, %v2085
      %v2095 = vadd.f32 %v2056, %v2085
      %v2096 = vadd.f32 %v2057, %v2085
      %v2097 = vadd.f32 %v2058, %v2085
      %v2098 = vadd.f32 %v2059, %v2085
      %v2099 = vadd.f32 %v2060, %v2085
      %v2100 = vadd.f32 %v2061, %v2085
      %v2101 = vadd.f32 %v2062, %v2085
      %v2102 = vadd.f32 %v2063, %v2085
      %v2103 = vadd.f32 %v2064, %v2085
      %v2104 = vadd.f32 %v2065, %v2085
      %v2105 = vadd.f32 %v2066, %v2085
      %v2106 = vadd.f32 %v2067, %v2085
      %v2107 = vadd.f32 %v2068, %v2085
      %v2108 = vadd.f32 %v2069, %v2085
      %v2109 = vadd.f32 %v2070, %v2085
      %v2110 = vadd.f32 %v2071, %v2085
      %v2111 = vadd.f32 %v2072, %v2085
      %v2112 = vadd.f32 %v2073, %v2085
      %v2113 = vadd.f32 %v2074, %v2085
      %v2114 = vadd.f32 %v2075, %v2085
      %v2115 = vadd.f32 %v2076, %v2085
      %v2116 = vadd.f32 %v2077, %v2085
      %v2117 = vadd.f32 %v2078, %v2085
      %v2118 = vadd.f32 %v2079, %v2085
      %v2119 = vmul.f32 %v2087, 0.2
      %v2120 = vmul.f32 %v2088, 0.2
      %v2121 = vmul.f32 %v2089, 0.2
      %v2122 = vmul.f32 %v2090, 0.2
      %v2123 = vmul.f32 %v2091, 0.2
      %v2124 = vmul.f32 %v2092, 0.2
      %v2125 = vmul.f32 %v2093, 0.2
      %v2126 = vmul.f32 %v2094, 0.2
      %v2127 = vmul.f32 %v2095, 0.2
      %v2128 = vmul.f32 %v2096, 0.2
      %v2129 = vmul.f32 %v2097, 0.2
      %v2130 = vmul.f32 %v2098, 0.2
      %v2131 = vmul.f32 %v2099, 0.2
      %v2132 = vmul.f32 %v2100, 0.2
      %v2133 = vmul.f32 %v2101, 0.2
      %v2134 = vmul.f32 %v2102, 0.2
      %v2135 = vmul.f32 %v2103, 0.2
      %v2136 = vmul.f32 %v2104, 0.2
      %v2137 = vmul.f32 %v2105, 0.2
      %v2138 = vmul.f32 %v2106, 0.2
      %v2139 = vmul.f32 %v2107, 0.2
      %v2140 = vmul.f32 %v2108, 0.2
      %v2141 = vmul.f32 %v2109, 0.2
      %v2142 = vmul.f32 %v2110, 0.2
      %v2143 = vmul.f32 %v2111, 0.2
      %v2144 = vmul.f32 %v2112, 0.2
      %v2145 = vmul.f32 %v2113, 0.2
      %v2146 = vmul.f32 %v2114, 0.2
      %v2147 = vmul.f32 %v2115, 0.2
      %v2148 = vmul.f32 %v2116, 0.2
      %v2149 = vmul.f32 %v2117, 0.2
      %v2150 = vmul.f32 %v2118, 0.2
      %v2151 = vmax.f32 %v2087, %v2119
      %v2152 = vmax.f32 %v2088, %v2120
      %v2153 = vmax.f32 %v2089, %v2121
      %v2154 = vmax.f32 %v2090, %v2122
      %v2155 = vmax.f32 %v2091, %v2123
      %v2156 = vmax.f32 %v2092, %v2124
      %v2157 = vmax.f32 %v2093, %v2125
      %v2158 = vmax.f32 %v2094, %v2126
      %v2159 = vmax.f32 %v2095, %v2127
      %v2160 = vmax.f32 %v2096, %v2128
      %v2161 = vmax.f32 %v2097, %v2129
      %v2162 = vmax.f32 %v2098, %v2130
      %v2163 = vmax.f32 %v2099, %v2131
      %v2164 = vmax.f32 %v2100, %v2132
      %v2165 = vmax.f32 %v2101, %v2133
      %v2166 = vmax.f32 %v2102, %v2134
      %v2167 = vmax.f32 %v2103, %v2135
      %v2168 = vmax.f32 %v2104, %v2136
      %v2169 = vmax.f32 %v2105, %v2137
      %v2170 = vmax.f32 %v2106, %v2138
      %v2171 = vmax.f32 %v2107, %v2139
      %v2172 = vmax.f32 %v2108, %v2140
      %v2173 = vmax.f32 %v2109, %v2141
      %v2174 = vmax.f32 %v2110, %v2142
      %v2175 = vmax.f32 %v2111, %v2143
      %v2176 = vmax.f32 %v2112, %v2144
      %v2177 = vmax.f32 %v2113, %v2145
      %v2178 = vmax.f32 %v2114, %v2146
      %v2179 = vmax.f32 %v2115, %v2147
      %v2180 = vmax.f32 %v2116, %v2148
      %v2181 = vmax.f32 %v2117, %v2149
      %v2182 = vmax.f32 %v2118, %v2150
      %2183 = vst [vmem:[%s204] sm:$0xff] %v2151
      %2184 = vst [vmem:[%s204 + $0x8] sm:$0xff] %v2152
      %2185 = vst [vmem:[%s204 + $0x10] sm:$0xff] %v2153
      %2186 = vst [vmem:[%s204 + $0x18] sm:$0xff] %v2154
      %2187 = vst [vmem:[%s204 + $0x20] sm:$0xff] %v2155
      %2188 = vst [vmem:[%s204 + $0x28] sm:$0xff] %v2156
      %2189 = vst [vmem:[%s204 + $0x30] sm:$0xff] %v2157
      %2190 = vst [vmem:[%s204 + $0x38] sm:$0xff] %v2158
      %2191 = vst [vmem:[%s204 + $0x40] sm:$0xff] %v2159
      %2192 = vst [vmem:[%s204 + $0x48] sm:$0xff] %v2160
      %2193 = vst [vmem:[%s204 + $0x50] sm:$0xff] %v2161
      %2194 = vst [vmem:[%s204 + $0x58] sm:$0xff] %v2162
      %2195 = vst [vmem:[%s204 + $0x60] sm:$0xff] %v2163
      %2196 = vst [vmem:[%s204 + $0x68] sm:$0xff] %v2164
      %2197 = vst [vmem:[%s204 + $0x70] sm:$0xff] %v2165
      %2198 = vst [vmem:[%s204 + $0x78] sm:$0xff] %v2166
      %2199 = vst [vmem:[%s204 + $0x80] sm:$0xff] %v2167
      %2200 = vst [vmem:[%s204 + $0x88] sm:$0xff] %v2168
      %2201 = vst [vmem:[%s204 + $0x90] sm:$0xff] %v2169
      %2202 = vst [vmem:[%s204 + $0x98] sm:$0xff] %v2170
      %2203 = vst [vmem:[%s204 + $0xa0] sm:$0xff] %v2171
      %2204 = vst [vmem:[%s204 + $0xa8] sm:$0xff] %v2172
      %2205 = vst [vmem:[%s204 + $0xb0] sm:$0xff] %v2173
      %2206 = vst [vmem:[%s204 + $0xb8] sm:$0xff] %v2174
      %2207 = vst [vmem:[%s204 + $0xc0] sm:$0xff] %v2175
      %2208 = vst [vmem:[%s204 + $0xc8] sm:$0xff] %v2176
      %2209 = vst [vmem:[%s204 + $0xd0] sm:$0xff] %v2177
      %2210 = vst [vmem:[%s204 + $0xd8] sm:$0xff] %v2178
      %2211 = vst [vmem:[%s204 + $0xe0] sm:$0xff] %v2179
      %2212 = vst [vmem:[%s204 + $0xe8] sm:$0xff] %v2180
      %2213 = vst [vmem:[%s204 + $0xf0] sm:$0xff] %v2181
      %2214 = vst [vmem:[%s204 + $0xf8] sm:$0xff] %v2182
      %v2215 = vadd.f32 %v2151, %v2152
      %v2216 = vadd.f32 %v2215, %v2153
      %v2217 = vadd.f32 %v2216, %v2154
      %v2218 = vadd.f32 %v2217, %v2155
      %v2219 = vadd.f32 %v2218, %v2156
      %v2220 = vadd.f32 %v2219, %v2157
      %v2221 = vadd.f32 %v2220, %v2158
      %v2222 = vadd.f32 %v2221, %v2159
      %v2223 = vadd.f32 %v2222, %v2160
      %v2224 = vadd.f32 %v2223, %v2161
      %v2225 = vadd.f32 %v2224, %v2162
      %v2226 = vadd.f32 %v2225, %v2163
      %v2227 = vadd.f32 %v2226, %v2164
      %v2228 = vadd.f32 %v2227, %v2165
      %v2229 = vadd.f32 %v2228, %v2166
      %v2230 = vadd.f32 %v2229, %v2167
      %v2231 = vadd.f32 %v2230, %v2168
      %v2232 = vadd.f32 %v2231, %v2169
      %v2233 = vadd.f32 %v2232, %v2170
      %v2234 = vadd.f32 %v2233, %v2171
      %v2235 = vadd.f32 %v2234, %v2172
      %v2236 = vadd.f32 %v2235, %v2173
      %v2237 = vadd.f32 %v2236, %v2174
      %v2238 = vadd.f32 %v2237, %v2175
      %v2239 = vadd.f32 %v2238, %v2176
      %v2240 = vadd.f32 %v2239, %v2177
      %v2241 = vadd.f32 %v2240, %v2178
      %v2242 = vadd.f32 %v2241, %v2179
      %v2243 = vadd.f32 %v2242, %v2180
      %v2244 = vadd.f32 %v2243, %v2181
      %v2245 = vadd.f32 %v2244, %v2182
      %v2246 = vrot.slane %v2245, 4
      %v2247 = vadd.f32 %v2245, %v2246
      %v2248 = vrot.slane %v2247, 2
      %v2249 = vadd.f32 %v2247, %v2248
      %v2250 = vrot.slane %v2249, 1
      %v2251 = vadd.f32 %v2249, %v2250
      %2252 = vst [vmem:[%s208] sm:$0x1] %v2251
      %v2253 = vmul.f32 %v2151, %v2151
      %v2254 = vmul.f32 %v2152, %v2152
      %v2255 = vmul.f32 %v2153, %v2153
      %v2256 = vmul.f32 %v2154, %v2154
      %v2257 = vmul.f32 %v2155, %v2155
      %v2258 = vmul.f32 %v2156, %v2156
      %v2259 = vmul.f32 %v2157, %v2157
      %v2260 = vmul.f32 %v2158, %v2158
      %v2261 = vmul.f32 %v2159, %v2159
      %v2262 = vmul.f32 %v2160, %v2160
      %v2263 = vmul.f32 %v2161, %v2161
      %v2264 = vmul.f32 %v2162, %v2162
      %v2265 = vmul.f32 %v2163, %v2163
      %v2266 = vmul.f32 %v2164, %v2164
      %v2267 = vmul.f32 %v2165, %v2165
      %v2268 = vmul.f32 %v2166, %v2166
      %v2269 = vmul.f32 %v2167, %v2167
      %v2270 = vmul.f32 %v2168, %v2168
      %v2271 = vmul.f32 %v2169, %v2169
      %v2272 = vmul.f32 %v2170, %v2170
      %v2273 = vmul.f32 %v2171, %v2171
      %v2274 = vmul.f32 %v2172, %v2172
      %v2275 = vmul.f32 %v2173, %v2173
      %v2276 = vmul.f32 %v2174, %v2174
      %v2277 = vmul.f32 %v2175, %v2175
      %v2278 = vmul.f32 %v2176, %v2176
      %v2279 = vmul.f32 %v2177, %v2177
      %v2280 = vmul.f32 %v2178, %v2178
      %v2281 = vmul.f32 %v2179, %v2179
      %v2282 = vmul.f32 %v2180, %v2180
      %v2283 = vmul.f32 %v2181, %v2181
      %v2284 = vmul.f32 %v2182, %v2182
      %v2285 = vadd.f32 %v2253, %v2254
      %v2286 = vadd.f32 %v2285, %v2255
      %v2287 = vadd.f32 %v2286, %v2256
      %v2288 = vadd.f32 %v2287, %v2257
      %v2289 = vadd.f32 %v2288, %v2258
      %v2290 = vadd.f32 %v2289, %v2259
      %v2291 = vadd.f32 %v2290, %v2260
      %v2292 = vadd.f32 %v2291, %v2261
      %v2293 = vadd.f32 %v2292, %v2262
      %v2294 = vadd.f32 %v2293, %v2263
      %v2295 = vadd.f32 %v2294, %v2264
      %v2296 = vadd.f32 %v2295, %v2265
      %v2297 = vadd.f32 %v2296, %v2266
      %v2298 = vadd.f32 %v2297, %v2267
      %v2299 = vadd.f32 %v2298, %v2268
      %v2300 = vadd.f32 %v2299, %v2269
      %v2301 = vadd.f32 %v2300, %v2270
      %v2302 = vadd.f32 %v2301, %v2271
      %v2303 = vadd.f32 %v2302, %v2272
      %v2304 = vadd.f32 %v2303, %v2273
      %v2305 = vadd.f32 %v2304, %v2274
      %v2306 = vadd.f32 %v2305, %v2275
      %v2307 = vadd.f32 %v2306, %v2276
      %v2308 = vadd.f32 %v2307, %v2277
      %v2309 = vadd.f32 %v2308, %v2278
      %v2310 = vadd.f32 %v2309, %v2279
      %v2311 = vadd.f32 %v2310, %v2280
      %v2312 = vadd.f32 %v2311, %v2281
      %v2313 = vadd.f32 %v2312, %v2282
      %v2314 = vadd.f32 %v2313, %v2283
      %v2315 = vadd.f32 %v2314, %v2284
      %v2316 = vrot.slane %v2315, 4
      %v2317 = vadd.f32 %v2315, %v2316
      %v2318 = vrot.slane %v2317, 2
      %v2319 = vadd.f32 %v2317, %v2318
      %v2320 = vrot.slane %v2319, 1
      %v2321 = vadd.f32 %v2319, %v2320
      %2322 = vst [vmem:[%s208 + $0x1] sm:$0x1] %v2321
      %p2323 = scmp.lt.s32.totalorder %s16, 1
      %s2324 = scalar_select %p2323, %s16, 1
      %s2325 = smul.addr %s2324, 32
      %s2326 = smul.addr %s2325, 8
      %s2327 = scalar_lea.vmem %s3, %s2326
      %p2328 = scmp.lt.s32.totalorder %s16, 1
      %s2329 = scalar_select %p2328, %s16, 1
      %s2330 = smul.addr %s2329, 2
      %s2331 = scalar_lea.vmem %s4, %s2330
      // Predicated region
      $region33: #{residual_forward.4} parent=31 // pred_check
        %p2332 = pneg %p102
      $region34: #{residual_forward.4} parent=31 // pred_check_branch
        %2334 = sbr.rel (%p2332) target = $region36
      $region35: #{residual_forward.4} parent=31 // pred_region
        _
      $region36: #{residual_forward.4} parent=31 // pred_fallthru
        _
      // Predicated region
      $region37: #{residual_forward.4} parent=31 // pred_check
        %p2335 = pneg %p128
      $region38: #{residual_forward.4} parent=31 // pred_check_branch
        %2337 = sbr.rel (%p2335) target = $region40
      $region39: #{residual_forward.4} parent=31 // pred_region
        _
      $region40: #{residual_forward.4} parent=31 // pred_fallthru
        _
    $region32: #{residual_forward.4} parent=5 // pred_fallthru
      _
    %p2338 = scmp.le.s32.totalorder 2, %s11
    // Predicated region
    $region41: #{residual_forward.4} parent=5 // pred_check
      %p2339 = pneg %p2338
    $region42: #{residual_forward.4} parent=5 // pred_check_branch
      %2341 = sbr.rel (%p2339) target = $region44
    $region43: #{residual_forward.4} parent=5 // pred_region
      %s2342 = ssub.s32 %s11, 2
      // Predicated region
      $region45: #{residual_forward.4} parent=43 // pred_check
        %p2343 = pneg %p108
      $region46: #{residual_forward.4} parent=43 // pred_check_branch
        %2345 = sbr.rel (%p2343) target = $region48
      $region47: #{residual_forward.4} parent=43 // pred_region
        %p2346 = scmp.lt.s32.totalorder %s17, 1
        %s2347 = scalar_select %p2346, %s17, 1
        %s2348 = smul.addr %s2347, 32
        %s2349 = smul.addr %s2348, 8
        %s2350 = scalar_lea.vmem %s3, %s2349
      $region48: #{residual_forward.4} parent=43 // pred_fallthru
        _
      // Predicated region
      $region49: #{residual_forward.4} parent=43 // pred_check
        %p2351 = pneg %p134
      $region50: #{residual_forward.4} parent=43 // pred_check_branch
        %2353 = sbr.rel (%p2351) target = $region52
      $region51: #{residual_forward.4} parent=43 // pred_region
        %p2354 = scmp.lt.s32.totalorder %s17, 1
        %s2355 = scalar_select %p2354, %s17, 1
        %s2356 = smul.addr %s2355, 2
        %s2357 = scalar_lea.vmem %s4, %s2356
      $region52: #{residual_forward.4} parent=43 // pred_fallthru
        _
    $region44: #{residual_forward.4} parent=5 // pred_fallthru
      _
  $region6: #{residual_forward.4} parent=0 // loop_footer
    %s15 = sadd.s32 1, %s11
  $region7: #{residual_forward.4} parent=0 // loop_footer_branch
    %10 = sbr.rel target = $region3
  $region8: #{residual_forward.4} parent=0 // loop_exit
    _

</llo_original>
